<compile_context>
chip_gen: v7x
topology: tpu7x:2x2x1
jax: 0.10.0
libtpu: 0.0.40
codegen_flags: <defaults>
</compile_context>

<pallas_src>
import functools
import math

import jax
import jax.numpy as jnp
import numpy as np
from jax import lax
from jax.experimental import pallas as pl
from jax.experimental.pallas import tpu as pltpu

_BIG_H = 5.0e11   # half-distance sentinel: -2 * (-_BIG_H) = 1e12, sqrt -> 1e6


def _triplet_tile_kernel(margin, batch, tm,
                         e_row_ref, e_colT_ref, half_sq_r_ref, c_off_ref,
                         lab_r_ref, lab_c_ref, loss_ref, hp_acc, hn_acc):
    i = pl.program_id(0)
    j = pl.program_id(1)

    @pl.when(j == 0)
    def _():
        hp_acc[...] = jnp.full_like(hp_acc, _BIG_H)    # min-accum over positives
        hn_acc[...] = jnp.full_like(hn_acc, -_BIG_H)   # max-accum over negatives

    # Gram tile on the MXU with a natural (M,K)x(K,N) layout (column operand is
    # pre-transposed outside the kernel -> no per-tile transpose).
    gram = jnp.dot(e_row_ref[...], e_colT_ref[...],
                   preferred_element_type=jnp.float32)        # (TM, TN)

    # Half-distance domain: h' = e_i.e_j - 0.5*||e_j||^2.  Padded columns carry
    # +_BIG_H inside c_off, so they drop out of the negative max for free.
    hprime = gram - c_off_ref[...]                             # (TM, TN)

    mask_pos = lab_r_ref[...] == lab_c_ref[...]                # (TM, TN)

    hp_cand = jnp.where(mask_pos, hprime, _BIG_H)              # excluded from min
    hn_cand = jnp.where(mask_pos, -_BIG_H, hprime)             # excluded from max

    hp_acc[...] = jnp.minimum(hp_acc[...],
                              jnp.min(hp_cand, axis=1, keepdims=True))
    hn_acc[...] = jnp.maximum(hn_acc[...],
                              jnp.max(hn_cand, axis=1, keepdims=True))

    @pl.when(j == pl.num_programs(1) - 1)
    def _():
        # Epilogue: (TM, 1) vectors only — finish d2, clamp, sqrt, relu.
        half_r = half_sq_r_ref[...]                            # (TM, 1)
        hp_d2 = jnp.maximum(-2.0 * (hp_acc[...] - half_r), 0.0)
        hn_d2 = jnp.maximum(-2.0 * (hn_acc[...] - half_r), 0.0)
        losses = jnp.maximum(jnp.sqrt(hp_d2) - jnp.sqrt(hn_d2) + margin, 0.0)
        row_idx = i * tm + lax.broadcasted_iota(jnp.int32, (tm, 1), 0)
        losses = jnp.where(row_idx < batch, losses, 0.0)       # zero padded rows
        loss_ref[...] = jnp.transpose(losses).reshape(1, 1, tm)  # lane-dense


def _round_up(x, m):
    return ((x + m - 1) // m) * m


def _vmem_capacity_bytes():
    try:
        return int(pltpu.get_tpu_info().vmem_capacity_bytes)
    except Exception:
        return 64 * 1024 * 1024   # conservative fallback (v7x per-TensorCore VMEM)


def online_triplet_loss(embeddings, labels, margin=0.5, tm=512, tn=256):
    """Pallas implementation of OnlineTripletLoss.forward (batch-hard mining)."""
    B, D = embeddings.shape
    Dp = max(128, _round_up(D, 128))

    # Generation-aware tile sizing: shrink until double-buffered embedding
    # blocks (+ headroom) fit the available VMEM (v7x has only 64 MiB).
    cap = _vmem_capacity_bytes()
    budget = int(0.8 * cap)
    while 2 * 4 * Dp * (tm + tn) + (4 << 20) > budget and tm > 256:
        tm //= 2
    while 2 * 4 * Dp * (tm + tn) + (4 << 20) > budget and tn > 128:
        tn //= 2
    assert tm % 8 == 0 and tn % 128 == 0

    g = math.lcm(tm, tn)
    Bp = max(g, _round_up(B, g))
    nI = Bp // tm
    nJ = Bp // tn

    e = jnp.pad(embeddings.astype(jnp.float32), ((0, Bp - B), (0, Dp - D)))
    e_t = jnp.transpose(e)                                    # (Dp, Bp), written once
    half_sq = 0.5 * jnp.sum(e * e, axis=1)                    # (Bp,), computed once
    col_pad = (jnp.arange(Bp) >= B).astype(jnp.float32)
    c_off = (half_sq + _BIG_H * col_pad).reshape(1, Bp)       # +_BIG_H on padded cols
    half_sq_r = half_sq.reshape(Bp, 1)
    lab = jnp.pad(labels.astype(jnp.int32), (0, Bp - B), constant_values=-1)
    lab_r = lab.reshape(Bp, 1)
    lab_c = lab.reshape(1, Bp)

    kernel = functools.partial(_triplet_tile_kernel, float(margin), B, tm)

    block_bytes = 4 * Dp * (tm + tn)
    vmem_limit = int(min(0.9 * cap,
                         max(32 * 1024 * 1024, 2 * block_bytes + (4 << 20))))

    # NOTE: in_specs[0] is revisited across j (same block index), so it is not
    # re-fetched; single-buffering it (pipeline_mode=pl.Buffered(1)) and/or a
    # fully VMEM-resident column operand for moderate B are further v7x-side
    # VMEM/HBM optimizations left out here for lowering portability.
    per_row = pl.pallas_call(
        kernel,
        out_shape=jax.ShapeDtypeStruct((nI, 1, tm), jnp.float32),
        grid_spec=pltpu.PrefetchScalarGridSpec(
            num_scalar_prefetch=0,
            grid=(nI, nJ),
            in_specs=[
                pl.BlockSpec((tm, Dp), lambda i, j: (i, 0)),   # row embeddings
                pl.BlockSpec((Dp, tn), lambda i, j: (0, j)),   # col embeddings (pre-T)
                pl.BlockSpec((tm, 1), lambda i, j: (i, 0)),    # 0.5*||e_i||^2
                pl.BlockSpec((1, tn), lambda i, j: (0, j)),    # 0.5*||e_j||^2 (+pad)
                pl.BlockSpec((tm, 1), lambda i, j: (i, 0)),    # row labels
                pl.BlockSpec((1, tn), lambda i, j: (0, j)),    # col labels
            ],
            out_specs=pl.BlockSpec((1, 1, tm), lambda i, j: (i, 0, 0)),
            scratch_shapes=[
                pltpu.VMEM((tm, 1), jnp.float32),              # hardest-pos (h')
                pltpu.VMEM((tm, 1), jnp.float32),              # hardest-neg (h')
            ],
        ),
        compiler_params=pltpu.CompilerParams(
            dimension_semantics=("parallel", "arbitrary"),
            vmem_limit_bytes=vmem_limit,
        ),
        cost_estimate=pl.CostEstimate(
            flops=2 * Bp * Bp * Dp,
            transcendentals=2 * Bp,
            bytes_accessed=4 * ((nI + 1) * Bp * Dp + 4 * Bp + nI * tm),
        ),
    )(e, e_t, half_sq_r, c_off, lab_r, lab_c)

    # Final mean over the real batch (tiny O(B) reduction; padded rows are 0).
    return jnp.sum(per_row) / B


def _reference_loss(embeddings, labels, margin=0.5):
    # pure-JAX reference mirroring the PyTorch module exactly
    d2 = jnp.sum((embeddings[:, None, :] - embeddings[None, :, :]) ** 2, axis=-1)
    dist = jnp.sqrt(jnp.maximum(d2, 0.0))
    mask_pos = (labels[None, :] == labels[:, None]).astype(jnp.float32)
    hp = jnp.max(dist * mask_pos, axis=1)
    hn = jnp.min(dist + 1.0e6 * mask_pos, axis=1)
    return jnp.mean(jnp.maximum(hp - hn + margin, 0.0))


if __name__ == "__main__":
    key = jax.random.PRNGKey(0)
    k_emb, k_lab = jax.random.split(key)

    B, D = 8, 32
    embeddings = jax.random.normal(k_emb, (B, D), dtype=jnp.float32)
    labels = jax.random.randint(k_lab, (B,), 0, 3, dtype=jnp.int32)

    loss = online_triplet_loss(embeddings, labels, margin=0.5)
    loss = jax.block_until_ready(loss)

    ref = jax.block_until_ready(_reference_loss(embeddings, labels, margin=0.5))
    assert np.allclose(np.asarray(loss), np.asarray(ref), rtol=1e-4, atol=1e-4), (
        f"mismatch: pallas={float(loss)} ref={float(ref)}"
    )

    print("KERNEL_OK")
</pallas_src>

<mosaic_0001>
module attributes {stable_mosaic.version = 11 : i64} {
  func.func @_triplet_tile_kernel(%arg0: i32, %arg1: i32, %arg2: memref<512x128xf32, #tpu.memory_space<vmem>>, %arg3: memref<128x256xf32, #tpu.memory_space<vmem>>, %arg4: memref<512x1xf32, #tpu.memory_space<vmem>>, %arg5: memref<1x256xf32, #tpu.memory_space<vmem>>, %arg6: memref<512x1xi32, #tpu.memory_space<vmem>>, %arg7: memref<1x256xi32, #tpu.memory_space<vmem>>, %arg8: memref<1x1x512xf32, #tpu.memory_space<vmem>>, %arg9: memref<512x1xf32, #tpu.memory_space<vmem>>, %arg10: memref<512x1xf32, #tpu.memory_space<vmem>>) attributes {dimension_semantics = [#tpu.dimension_semantics<parallel>, #tpu.dimension_semantics<arbitrary>], iteration_bounds = array<i64: 1, 2>, scalar_prefetch = 0 : i64, scratch_operands = 2 : i64, tpu.core_type = #tpu.core_type<tc>, window_params = [{transform_indices = @transform_0, window_bounds = array<i64: 512, 128>}, {transform_indices = @transform_1, window_bounds = array<i64: 128, 256>}, {transform_indices = @transform_2, window_bounds = array<i64: 512, 1>}, {transform_indices = @transform_3, window_bounds = array<i64: 1, 256>}, {transform_indices = @transform_4, window_bounds = array<i64: 512, 1>}, {transform_indices = @transform_5, window_bounds = array<i64: 1, 256>}, {transform_indices = @transform_6, window_bounds = array<i64: 1, 1, 512>}]} {
    %c0_i32 = arith.constant 0 : i32
    %0 = arith.cmpi eq, %arg1, %c0_i32 : i32
    %1 = arith.extui %0 : i1 to i32
    %c0_i32_0 = arith.constant 0 : i32
    %2 = arith.cmpi ne, %1, %c0_i32_0 : i32
    scf.if %2 {
      %cst_23 = arith.constant 5.000000e+11 : f32
      %31 = vector.broadcast %cst_23 : f32 to vector<512x1xf32>
      %c0_24 = arith.constant 0 : index
      %c0_25 = arith.constant 0 : index
      %32 = vector.load %arg9[%c0_24, %c0_25] : memref<512x1xf32, #tpu.memory_space<vmem>>, vector<512x1xf32>
      tpu.vector_store %arg9[%c0_24, %c0_25], %31 {strides = array<i32>} : memref<512x1xf32, #tpu.memory_space<vmem>>, vector<512x1xf32>,
      %cst_26 = arith.constant -5.000000e+11 : f32
      %33 = vector.broadcast %cst_26 : f32 to vector<512x1xf32>
      %c0_27 = arith.constant 0 : index
      %c0_28 = arith.constant 0 : index
      %34 = vector.load %arg10[%c0_27, %c0_28] : memref<512x1xf32, #tpu.memory_space<vmem>>, vector<512x1xf32>
      tpu.vector_store %arg10[%c0_27, %c0_28], %33 {strides = array<i32>} : memref<512x1xf32, #tpu.memory_space<vmem>>, vector<512x1xf32>,
    } else {
    }
    %c0 = arith.constant 0 : index
    %c0_1 = arith.constant 0 : index
    %3 = vector.load %arg2[%c0, %c0_1] : memref<512x128xf32, #tpu.memory_space<vmem>>, vector<512x128xf32>
    %c0_2 = arith.constant 0 : index
    %c0_3 = arith.constant 0 : index
    %4 = vector.load %arg3[%c0_2, %c0_3] : memref<128x256xf32, #tpu.memory_space<vmem>>, vector<128x256xf32>
    %cst = arith.constant dense<0.000000e+00> : vector<512x256xf32>
    %5 = tpu.matmul %3, %4, %cst {dimension_numbers = #tpu.dot_dimension_numbers<[1], [0], [0], [1], [0, 0, 1, 1], [], []>} : vector<512x128xf32>, vector<128x256xf32>, vector<512x256xf32> -> vector<512x256xf32>
    %c0_4 = arith.constant 0 : index
    %c0_5 = arith.constant 0 : index
    %6 = vector.load %arg5[%c0_4, %c0_5] : memref<1x256xf32, #tpu.memory_space<vmem>>, vector<1x256xf32>
    %7 = vector.broadcast %6 : vector<1x256xf32> to vector<512x256xf32>
    %8 = arith.subf %5, %7 : vector<512x256xf32>
    %c0_6 = arith.constant 0 : index
    %c0_7 = arith.constant 0 : index
    %9 = vector.load %arg6[%c0_6, %c0_7] : memref<512x1xi32, #tpu.memory_space<vmem>>, vector<512x1xi32>
    %c0_8 = arith.constant 0 : index
    %c0_9 = arith.constant 0 : index
    %10 = vector.load %arg7[%c0_8, %c0_9] : memref<1x256xi32, #tpu.memory_space<vmem>>, vector<1x256xi32>
    %11 = vector.broadcast %9 : vector<512x1xi32> to vector<512x256xi32>
    %12 = vector.broadcast %10 : vector<1x256xi32> to vector<512x256xi32>
    %13 = arith.cmpi eq, %11, %12 : vector<512x256xi32>
    %cst_10 = arith.constant 5.000000e+11 : f32
    %14 = vector.broadcast %cst_10 : f32 to vector<512x256xf32>
    %15 = arith.select %13, %8, %14 : vector<512x256xi1>, vector<512x256xf32>
    %cst_11 = arith.constant -5.000000e+11 : f32
    %16 = vector.broadcast %cst_11 : f32 to vector<512x256xf32>
    %17 = arith.select %13, %16, %8 : vector<512x256xi1>, vector<512x256xf32>
    %c0_12 = arith.constant 0 : index
    %c0_13 = arith.constant 0 : index
    %18 = vector.load %arg9[%c0_12, %c0_13] : memref<512x1xf32, #tpu.memory_space<vmem>>, vector<512x1xf32>
    %cst_14 = arith.constant dense<0x7F800000> : vector<512xf32>
    %19 = vector.multi_reduction <minimumf>, %15, %cst_14 [1] : vector<512x256xf32> to vector<512xf32>
    %20 = vector.shape_cast %19 : vector<512xf32> to vector<512x1xf32>
    %21 = arith.minimumf %18, %20 : vector<512x1xf32>
    %c0_15 = arith.constant 0 : index
    %c0_16 = arith.constant 0 : index
    %22 = vector.load %arg9[%c0_15, %c0_16] : memref<512x1xf32, #tpu.memory_space<vmem>>, vector<512x1xf32>
    tpu.vector_store %arg9[%c0_15, %c0_16], %21 {strides = array<i32>} : memref<512x1xf32, #tpu.memory_space<vmem>>, vector<512x1xf32>,
    %c0_17 = arith.constant 0 : index
    %c0_18 = arith.constant 0 : index
    %23 = vector.load %arg10[%c0_17, %c0_18] : memref<512x1xf32, #tpu.memory_space<vmem>>, vector<512x1xf32>
    %cst_19 = arith.constant dense<0xFF800000> : vector<512xf32>
    %24 = vector.multi_reduction <maximumf>, %17, %cst_19 [1] : vector<512x256xf32> to vector<512xf32>
    %25 = vector.shape_cast %24 : vector<512xf32> to vector<512x1xf32>
    %26 = arith.maximumf %23, %25 : vector<512x1xf32>
    %c0_20 = arith.constant 0 : index
    %c0_21 = arith.constant 0 : index
    %27 = vector.load %arg10[%c0_20, %c0_21] : memref<512x1xf32, #tpu.memory_space<vmem>>, vector<512x1xf32>
    tpu.vector_store %arg10[%c0_20, %c0_21], %26 {strides = array<i32>} : memref<512x1xf32, #tpu.memory_space<vmem>>, vector<512x1xf32>,
    %c1_i32 = arith.constant 1 : i32
    %28 = arith.cmpi eq, %arg1, %c1_i32 : i32
    %29 = arith.extui %28 : i1 to i32
    %c0_i32_22 = arith.constant 0 : i32
    %30 = arith.cmpi ne, %29, %c0_i32_22 : i32
    scf.if %30 {
      %c0_23 = arith.constant 0 : index
      %c0_24 = arith.constant 0 : index
      %31 = vector.load %arg4[%c0_23, %c0_24] : memref<512x1xf32, #tpu.memory_space<vmem>>, vector<512x1xf32>
      %c0_25 = arith.constant 0 : index
      %c0_26 = arith.constant 0 : index
      %32 = vector.load %arg9[%c0_25, %c0_26] : memref<512x1xf32, #tpu.memory_space<vmem>>, vector<512x1xf32>
      %33 = arith.subf %32, %31 : vector<512x1xf32>
      %cst_27 = arith.constant -2.000000e+00 : f32
      %34 = vector.broadcast %cst_27 : f32 to vector<512x1xf32>
      %35 = arith.mulf %34, %33 : vector<512x1xf32>
      %cst_28 = arith.constant 0.000000e+00 : f32
      %36 = vector.broadcast %cst_28 : f32 to vector<512x1xf32>
      %37 = arith.maximumf %35, %36 : vector<512x1xf32>
      %c0_29 = arith.constant 0 : index
      %c0_30 = arith.constant 0 : index
      %38 = vector.load %arg10[%c0_29, %c0_30] : memref<512x1xf32, #tpu.memory_space<vmem>>, vector<512x1xf32>
      %39 = arith.subf %38, %31 : vector<512x1xf32>
      %cst_31 = arith.constant -2.000000e+00 : f32
      %40 = vector.broadcast %cst_31 : f32 to vector<512x1xf32>
      %41 = arith.mulf %40, %39 : vector<512x1xf32>
      %cst_32 = arith.constant 0.000000e+00 : f32
      %42 = vector.broadcast %cst_32 : f32 to vector<512x1xf32>
      %43 = arith.maximumf %41, %42 : vector<512x1xf32>
      %44 = math.sqrt %37 : vector<512x1xf32>
      %45 = math.sqrt %43 : vector<512x1xf32>
      %46 = arith.subf %44, %45 : vector<512x1xf32>
      %cst_33 = arith.constant 5.000000e-01 : f32
      %47 = vector.broadcast %cst_33 : f32 to vector<512x1xf32>
      %48 = arith.addf %46, %47 : vector<512x1xf32>
      %cst_34 = arith.constant 0.000000e+00 : f32
      %49 = vector.broadcast %cst_34 : f32 to vector<512x1xf32>
      %50 = arith.maximumf %48, %49 : vector<512x1xf32>
      %c512_i32 = arith.constant 512 : i32
      %51 = arith.muli %arg0, %c512_i32 : i32
      %52 = tpu.iota {dimensions = array<i32: 0>} : vector<512x1xi32>
      %53 = vector.broadcast %51 : i32 to vector<512x1xi32>
      %54 = arith.addi %53, %52 : vector<512x1xi32>
      %c8_i32 = arith.constant 8 : i32
      %55 = vector.broadcast %c8_i32 : i32 to vector<512x1xi32>
      %56 = arith.cmpi slt, %54, %55 : vector<512x1xi32>
      %cst_35 = arith.constant 0.000000e+00 : f32
      %57 = vector.broadcast %cst_35 : f32 to vector<512x1xf32>
      %58 = arith.select %56, %50, %57 : vector<512x1xi1>, vector<512x1xf32>
      %59 = tpu.transpose %58, [1, 0] : vector<512x1xf32> -> vector<1x512xf32>
      %60 = vector.shape_cast %59 : vector<1x512xf32> to vector<1x1x512xf32>
      %c0_36 = arith.constant 0 : index
      %c0_37 = arith.constant 0 : index
      %c0_38 = arith.constant 0 : index
      %61 = vector.load %arg8[%c0_36, %c0_37, %c0_38] : memref<1x1x512xf32, #tpu.memory_space<vmem>>, vector<1x1x512xf32>
      tpu.vector_store %arg8[%c0_36, %c0_37, %c0_38], %60 {strides = array<i32>} : memref<1x1x512xf32, #tpu.memory_space<vmem>>, vector<1x1x512xf32>,
    } else {
    }
    return
  }
  func.func @transform_0(%arg0: i32, %arg1: i32) -> (i32, i32) {
    %c0_i32 = arith.constant 0 : i32
    %c0_i32_0 = arith.constant 0 : i32
    return %arg0, %c0_i32 : i32, i32
  }
  func.func @transform_1(%arg0: i32, %arg1: i32) -> (i32, i32) {
    %c0_i32 = arith.constant 0 : i32
    %c0_i32_0 = arith.constant 0 : i32
    return %c0_i32, %arg1 : i32, i32
  }
  func.func @transform_2(%arg0: i32, %arg1: i32) -> (i32, i32) {
    %c0_i32 = arith.constant 0 : i32
    %c0_i32_0 = arith.constant 0 : i32
    return %arg0, %c0_i32 : i32, i32
  }
  func.func @transform_3(%arg0: i32, %arg1: i32) -> (i32, i32) {
    %c0_i32 = arith.constant 0 : i32
    %c0_i32_0 = arith.constant 0 : i32
    return %c0_i32, %arg1 : i32, i32
  }
  func.func @transform_4(%arg0: i32, %arg1: i32) -> (i32, i32) {
    %c0_i32 = arith.constant 0 : i32
    %c0_i32_0 = arith.constant 0 : i32
    return %arg0, %c0_i32 : i32, i32
  }
  func.func @transform_5(%arg0: i32, %arg1: i32) -> (i32, i32) {
    %c0_i32 = arith.constant 0 : i32
    %c0_i32_0 = arith.constant 0 : i32
    return %c0_i32, %arg1 : i32, i32
  }
  func.func @transform_6(%arg0: i32, %arg1: i32) -> (i32, i32, i32) {
    %c0_i32 = arith.constant 0 : i32
    %c0_i32_0 = arith.constant 0 : i32
    %c0_i32_1 = arith.constant 0 : i32
    return %arg0, %c0_i32, %c0_i32_0 : i32, i32, i32
  }
}

</mosaic_0001>

<llo_original>
// kernel: tpu_custom_call.1
$region0: #{tpu_custom_call.1}
  #allocation0 [shape = 'u32[]', space=smem, size = 0x4, offset = 0x4, fixed_abs, tag = 'smem constant byte address 0x4 - core index']
  #allocation1 [shape = 'u32[144,128]{1,0:T(1,128)}', space=vmem, size = 0x12000, scoped, tag = 'internal scratch']
  #allocation2 [shape = 'f32[512,1]{1,0:T(8,128)}', space=vmem, size = 0x40000, scoped, tag = 'scratch operand']
  #allocation3 [shape = 'f32[512,1]{1,0:T(8,128)}', space=vmem, size = 0x40000, scoped, tag = 'scratch operand']
  %s0 = inlined_call_operand.vmem [shape: f32[512,128], index: 0, kind: input, shape index: {}]
  %s1 = inlined_call_operand.vmem [shape: f32[128,512], index: 1, kind: input, shape index: {}]
  %s2 = inlined_call_operand.vmem [shape: f32[512,1], index: 2, kind: input, shape index: {}]
  %s3 = inlined_call_operand.vmem [shape: f32[1,512], index: 3, kind: input, shape index: {}]
  %s4 = inlined_call_operand.vmem [shape: s32[512,1], index: 4, kind: input, shape index: {}]
  %s5 = inlined_call_operand.vmem [shape: s32[1,512], index: 5, kind: input, shape index: {}]
  %s6 = inlined_call_operand.hbm [shape: f32[1,1,512], index: 6, kind: output, shape index: {}]
  %s7 = sld [smem:[#allocation0]]
  $region88: #{tpu_custom_call.1} parent=0
    _
  %s9 = ssub.s32 1, %s7
  %s10 = scalar_select 0, %s9, %s7
  $region1: #{tpu_custom_call.1} parent=0
    #allocation4 [shape = 'u8[262144]{0}', space=vmem, size = 0x40000, scoped, tag = 'input window, operand 1']
    #allocation5 [shape = 'u8[2048]{0}', space=vmem, size = 0x800, scoped, tag = 'output window, operand 0, single buffered']
    #allocation6 [shape = 's32[2]{0}', space=sflag, size = 0x8, scoped, tag = 'scoped memory for tpu_custom_call.1']
    %11 = vsyncpa [#allocation6], 0
    loop: start=0, step=1, limit=4
    $region2: #{tpu_custom_call.1} parent=1 // loop_pre_header
      _
    $region3: #{tpu_custom_call.1} parent=1 // loop_header
      %s13 = sphi 0, %s17
      %p14 = scmp.ge.s32.totalorder %s13, 4
      %s20 = sphi 0, %s32
      %s21 = sphi 0, %s28
      %s22 = sphi 0, %s20
      %s23 = sphi 0, %s21
      %s24 = sphi 0, %s22
      %s25 = sphi 0, %s23
      %s35 = sphi 0, %s37
      %s38 = sphi 0, %s35
      %s39 = sphi 0, %s38
      %s55 = sphi 0, %s39
      %s61 = sphi 0, %s63
      %s64 = sphi 0, %s61
      %s65 = sphi 0, %s64
      %s81 = sphi 0, %s65
      %s87 = sphi 0, %s89
      %s90 = sphi 0, %s87
      %s91 = sphi 0, %s90
      %s107 = sphi 0, %s91
      %s113 = sphi 0, %s115
      %s116 = sphi 0, %s113
      %s117 = sphi 0, %s116
      %s133 = sphi 0, %s117
      %s139 = sphi 0, %s141
      %s142 = sphi 0, %s139
      %s143 = sphi 0, %s142
      %s159 = sphi 0, %s143
      %s165 = sphi 0, %s167
      %s168 = sphi 0, %s165
      %s169 = sphi 0, %s168
      %s185 = sphi 0, %s169
      %s191 = sphi 0, %s193
      %s194 = sphi 0, %s191
      %s195 = sphi 0, %s194
      %s211 = sphi 0, %s195
    $region4: #{tpu_custom_call.1} parent=1 // loop_header_branch
      %16 = sbr.rel (%p14) target = $region8
    $region5: #{tpu_custom_call.1} parent=1 // loop_body
      %s18 = ssub.s32 %s13, 1
      %s19 = ssub.s32 %s13, 2
      %s26 = sadd.s32 1, %s21
      %p27 = scmp.ge.s32.totalorder %s26, 2
      %s28 = scalar_select %p27, 0, %s26
      %s29 = sadd.s32 1, %s20
      %s30 = scalar_select %p27, %s29, %s20
      %p31 = scmp.ge.s32.totalorder %s30, 1
      %s32 = scalar_select %p31, 0, %s30
      %s33 = ssub.s32 %s20, %s32
      %p34 = scmp.eq.s32.totalorder %s33, 0
      %s36 = sadd.s32 %s35, 1
      %s37 = scalar_select %p34, %s35, %s36
      %p40 = pneg %p34
      %p41 = scmp.eq.s32.totalorder %s13, 1
      %p42 = por %p40, %p41
      %p43 = scmp.ne.s32.totalorder %s35, %s38
      %p44 = scmp.eq.s32.totalorder %s13, 0
      %p45 = por %p43, %p44
      %p46 = scmp.ne.s32.totalorder %s35, %s38
      %p47 = scmp.eq.s32.totalorder %s18, 1
      %p48 = por %p46, %p47
      %p49 = scmp.ne.s32.totalorder %s38, %s39
      %p50 = scmp.eq.s32.totalorder %s18, 0
      %p51 = por %p49, %p50
      %p52 = scmp.ne.s32.totalorder %s38, %s39
      %p53 = scmp.eq.s32.totalorder %s19, 1
      %p54 = por %p52, %p53
      %p56 = scmp.ne.s32.totalorder %s39, %s55
      %p57 = scmp.eq.s32.totalorder %s19, 0
      %p58 = por %p56, %p57
      %s59 = ssub.s32 %s21, %s28
      %p60 = scmp.eq.s32.totalorder %s59, 0
      %s62 = sadd.s32 %s61, 1
      %s63 = scalar_select %p60, %s61, %s62
      %p66 = pneg %p60
      %p67 = scmp.eq.s32.totalorder %s13, 1
      %p68 = por %p66, %p67
      %p69 = scmp.ne.s32.totalorder %s61, %s64
      %p70 = scmp.eq.s32.totalorder %s13, 0
      %p71 = por %p69, %p70
      %p72 = scmp.ne.s32.totalorder %s61, %s64
      %p73 = scmp.eq.s32.totalorder %s18, 1
      %p74 = por %p72, %p73
      %p75 = scmp.ne.s32.totalorder %s64, %s65
      %p76 = scmp.eq.s32.totalorder %s18, 0
      %p77 = por %p75, %p76
      %p78 = scmp.ne.s32.totalorder %s64, %s65
      %p79 = scmp.eq.s32.totalorder %s19, 1
      %p80 = por %p78, %p79
      %p82 = scmp.ne.s32.totalorder %s65, %s81
      %p83 = scmp.eq.s32.totalorder %s19, 0
      %p84 = por %p82, %p83
      %s85 = ssub.s32 %s20, %s32
      %p86 = scmp.eq.s32.totalorder %s85, 0
      %s88 = sadd.s32 %s87, 1
      %s89 = scalar_select %p86, %s87, %s88
      %p92 = pneg %p86
      %p93 = scmp.eq.s32.totalorder %s13, 1
      %p94 = por %p92, %p93
      %p95 = scmp.ne.s32.totalorder %s87, %s90
      %p96 = scmp.eq.s32.totalorder %s13, 0
      %p97 = por %p95, %p96
      %p98 = scmp.ne.s32.totalorder %s87, %s90
      %p99 = scmp.eq.s32.totalorder %s18, 1
      %p100 = por %p98, %p99
      %p101 = scmp.ne.s32.totalorder %s90, %s91
      %p102 = scmp.eq.s32.totalorder %s18, 0
      %p103 = por %p101, %p102
      %p104 = scmp.ne.s32.totalorder %s90, %s91
      %p105 = scmp.eq.s32.totalorder %s19, 1
      %p106 = por %p104, %p105
      %p108 = scmp.ne.s32.totalorder %s91, %s107
      %p109 = scmp.eq.s32.totalorder %s19, 0
      %p110 = por %p108, %p109
      %s111 = ssub.s32 %s21, %s28
      %p112 = scmp.eq.s32.totalorder %s111, 0
      %s114 = sadd.s32 %s113, 1
      %s115 = scalar_select %p112, %s113, %s114
      %p118 = pneg %p112
      %p119 = scmp.eq.s32.totalorder %s13, 1
      %p120 = por %p118, %p119
      %p121 = scmp.ne.s32.totalorder %s113, %s116
      %p122 = scmp.eq.s32.totalorder %s13, 0
      %p123 = por %p121, %p122
      %p124 = scmp.ne.s32.totalorder %s113, %s116
      %p125 = scmp.eq.s32.totalorder %s18, 1
      %p126 = por %p124, %p125
      %p127 = scmp.ne.s32.totalorder %s116, %s117
      %p128 = scmp.eq.s32.totalorder %s18, 0
      %p129 = por %p127, %p128
      %p130 = scmp.ne.s32.totalorder %s116, %s117
      %p131 = scmp.eq.s32.totalorder %s19, 1
      %p132 = por %p130, %p131
      %p134 = scmp.ne.s32.totalorder %s117, %s133
      %p135 = scmp.eq.s32.totalorder %s19, 0
      %p136 = por %p134, %p135
      %s137 = ssub.s32 %s20, %s32
      %p138 = scmp.eq.s32.totalorder %s137, 0
      %s140 = sadd.s32 %s139, 1
      %s141 = scalar_select %p138, %s139, %s140
      %p144 = pneg %p138
      %p145 = scmp.eq.s32.totalorder %s13, 1
      %p146 = por %p144, %p145
      %p147 = scmp.ne.s32.totalorder %s139, %s142
      %p148 = scmp.eq.s32.totalorder %s13, 0
      %p149 = por %p147, %p148
      %p150 = scmp.ne.s32.totalorder %s139, %s142
      %p151 = scmp.eq.s32.totalorder %s18, 1
      %p152 = por %p150, %p151
      %p153 = scmp.ne.s32.totalorder %s142, %s143
      %p154 = scmp.eq.s32.totalorder %s18, 0
      %p155 = por %p153, %p154
      %p156 = scmp.ne.s32.totalorder %s142, %s143
      %p157 = scmp.eq.s32.totalorder %s19, 1
      %p158 = por %p156, %p157
      %p160 = scmp.ne.s32.totalorder %s143, %s159
      %p161 = scmp.eq.s32.totalorder %s19, 0
      %p162 = por %p160, %p161
      %s163 = ssub.s32 %s21, %s28
      %p164 = scmp.eq.s32.totalorder %s163, 0
      %s166 = sadd.s32 %s165, 1
      %s167 = scalar_select %p164, %s165, %s166
      %p170 = pneg %p164
      %p171 = scmp.eq.s32.totalorder %s13, 1
      %p172 = por %p170, %p171
      %p173 = scmp.ne.s32.totalorder %s165, %s168
      %p174 = scmp.eq.s32.totalorder %s13, 0
      %p175 = por %p173, %p174
      %p176 = scmp.ne.s32.totalorder %s165, %s168
      %p177 = scmp.eq.s32.totalorder %s18, 1
      %p178 = por %p176, %p177
      %p179 = scmp.ne.s32.totalorder %s168, %s169
      %p180 = scmp.eq.s32.totalorder %s18, 0
      %p181 = por %p179, %p180
      %p182 = scmp.ne.s32.totalorder %s168, %s169
      %p183 = scmp.eq.s32.totalorder %s19, 1
      %p184 = por %p182, %p183
      %p186 = scmp.ne.s32.totalorder %s169, %s185
      %p187 = scmp.eq.s32.totalorder %s19, 0
      %p188 = por %p186, %p187
      %s189 = ssub.s32 %s20, %s32
      %p190 = scmp.eq.s32.totalorder %s189, 0
      %s192 = sadd.s32 %s191, 1
      %s193 = scalar_select %p190, %s191, %s192
      %p196 = pneg %p190
      %p197 = scmp.eq.s32.totalorder %s13, 1
      %p198 = por %p196, %p197
      %p199 = scmp.ne.s32.totalorder %s191, %s194
      %p200 = scmp.eq.s32.totalorder %s13, 0
      %p201 = por %p199, %p200
      %p202 = scmp.ne.s32.totalorder %s191, %s194
      %p203 = scmp.eq.s32.totalorder %s18, 1
      %p204 = por %p202, %p203
      %p205 = scmp.ne.s32.totalorder %s194, %s195
      %p206 = scmp.eq.s32.totalorder %s18, 0
      %p207 = por %p205, %p206
      %p208 = scmp.ne.s32.totalorder %s194, %s195
      %p209 = scmp.eq.s32.totalorder %s19, 1
      %p210 = por %p208, %p209
      %p212 = scmp.ne.s32.totalorder %s195, %s211
      %p213 = scmp.eq.s32.totalorder %s19, 0
      %p214 = por %p212, %p213
      %p215 = scmp.le.s32.totalorder 1, %s13
      %p216 = scmp.lt.s32.totalorder %s13, 3
      %p217 = pnand %p215, %p216
      %p218 = pneg %p217
      // Predicated region
      $region9: #{tpu_custom_call.1} parent=5 // pred_check
        _
      $region10: #{tpu_custom_call.1} parent=5 // pred_check_branch
        %220 = sbr.rel (%p217) target = $region12
      $region11: #{tpu_custom_call.1} parent=5 // pred_region
        %s221 = ssub.s32 %s13, 1
        // Predicated region
        $region13: #{tpu_custom_call.1} parent=11 // pred_check
          %p222 = pneg %p51
        $region14: #{tpu_custom_call.1} parent=11 // pred_check_branch
          %224 = sbr.rel (%p222) target = $region16
        $region15: #{tpu_custom_call.1} parent=11 // pred_region
          %s225 = smul.u32 64, %s22
          %p226 = scmp.lt.s32.totalorder %s225, 63
          %s227 = scalar_select %p226, %s225, 63
          %s228 = smul.addr %s227, 8
          %s229 = scalar_lea.vmem %s0, %s228
          %s230 = smul.u32 64, %s22
        $region16: #{tpu_custom_call.1} parent=11 // pred_fallthru
          _
        // Predicated region
        $region17: #{tpu_custom_call.1} parent=11 // pred_check
          %p231 = pneg %p103
        $region18: #{tpu_custom_call.1} parent=11 // pred_check_branch
          %233 = sbr.rel (%p231) target = $region20
        $region19: #{tpu_custom_call.1} parent=11 // pred_region
          %s234 = smul.u32 64, %s22
          %p235 = scmp.lt.s32.totalorder %s234, 63
          %s236 = scalar_select %p235, %s234, 63
          %s237 = smul.addr %s236, 8
          %s238 = scalar_lea.vmem %s2, %s237
          %s239 = smul.u32 64, %s22
        $region20: #{tpu_custom_call.1} parent=11 // pred_fallthru
          _
        // Predicated region
        $region21: #{tpu_custom_call.1} parent=11 // pred_check
          %p240 = pneg %p155
        $region22: #{tpu_custom_call.1} parent=11 // pred_check_branch
          %242 = sbr.rel (%p240) target = $region24
        $region23: #{tpu_custom_call.1} parent=11 // pred_region
          %s243 = smul.u32 64, %s22
          %p244 = scmp.lt.s32.totalorder %s243, 63
          %s245 = scalar_select %p244, %s243, 63
          %s246 = smul.addr %s245, 8
          %s247 = scalar_lea.vmem %s4, %s246
          %s248 = smul.u32 64, %s22
        $region24: #{tpu_custom_call.1} parent=11 // pred_fallthru
          _
      $region12: #{tpu_custom_call.1} parent=5 // pred_fallthru
        _
      %p249 = scmp.lt.s32.totalorder %s13, 2
      // Predicated region
      $region25: #{tpu_custom_call.1} parent=5 // pred_check
        %p250 = pneg %p249
      $region26: #{tpu_custom_call.1} parent=5 // pred_check_branch
        %252 = sbr.rel (%p250) target = $region28
      $region27: #{tpu_custom_call.1} parent=5 // pred_region
        // Predicated region
        $region29: #{tpu_custom_call.1} parent=27 // pred_check
          %p253 = pneg %p71
        $region30: #{tpu_custom_call.1} parent=27 // pred_check_branch
          %255 = sbr.rel (%p253) target = $region32
        $region31: #{tpu_custom_call.1} parent=27 // pred_region
          %s256 = sand.u32 %s61, 1
          %s257 = sand.u32 %s61, 1
          %s258 = smul.addr %s257, 256
          %s259 = scalar_lea.vmem [#allocation4], %s258
          %s260 = smul.u32 2, %s21
          %s261 = smul.addr %s260, 8
          %s262 = scalar_lea.vmem %s1, %s261
          // Predicated region
          $region33: #{tpu_custom_call.1} parent=31 // pred_check
            _
          $region34: #{tpu_custom_call.1} parent=31 // pred_check_branch
            %264 = sbr.rel (0) target = $region36
          $region35: #{tpu_custom_call.1} parent=31 // pred_region
            // Predicated region
            $region37: #{tpu_custom_call.1} parent=35 // pred_check
              _
            $region38: #{tpu_custom_call.1} parent=35 // pred_check_branch
              %266 = sbr.rel (0) target = $region40
            $region39: #{tpu_custom_call.1} parent=35 // pred_region
              loop: start=0, step=1, limit=1
              $region41: #{tpu_custom_call.1} parent=39 // loop_pre_header
                _
              $region42: #{tpu_custom_call.1} parent=39 // loop_header
                %s268 = sphi 0, %s272
                %p269 = scmp.ge.s32.totalorder %s268, 1
                %s273 = sphi %s262, %s262
                %s274 = sphi %s259, %s259
              $region43: #{tpu_custom_call.1} parent=39 // loop_header_branch
                %271 = sbr.rel (%p269) target = $region47
              $region44: #{tpu_custom_call.1} parent=39 // loop_body
                %v275 = vld [vmem:[%s273] sm:$0xff]
                %276 = vst [vmem:[%s274] sm:$0xff] %v275
                %v277 = vld [vmem:[%s273 + $0x8] sm:$0xff]
                %278 = vst [vmem:[%s274 + $0x8] sm:$0xff] %v277
                %v279 = vld [vmem:[%s273 + $0x20] sm:$0xff]
                %280 = vst [vmem:[%s274 + $0x10] sm:$0xff] %v279
                %v281 = vld [vmem:[%s273 + $0x28] sm:$0xff]
                %282 = vst [vmem:[%s274 + $0x18] sm:$0xff] %v281
                %v283 = vld [vmem:[%s273 + $0x40] sm:$0xff]
                %284 = vst [vmem:[%s274 + $0x20] sm:$0xff] %v283
                %v285 = vld [vmem:[%s273 + $0x48] sm:$0xff]
                %286 = vst [vmem:[%s274 + $0x28] sm:$0xff] %v285
                %v287 = vld [vmem:[%s273 + $0x60] sm:$0xff]
                %288 = vst [vmem:[%s274 + $0x30] sm:$0xff] %v287
                %v289 = vld [vmem:[%s273 + $0x68] sm:$0xff]
                %290 = vst [vmem:[%s274 + $0x38] sm:$0xff] %v289
                %v291 = vld [vmem:[%s273 + $0x80] sm:$0xff]
                %292 = vst [vmem:[%s274 + $0x40] sm:$0xff] %v291
                %v293 = vld [vmem:[%s273 + $0x88] sm:$0xff]
                %294 = vst [vmem:[%s274 + $0x48] sm:$0xff] %v293
                %v295 = vld [vmem:[%s273 + $0xa0] sm:$0xff]
                %296 = vst [vmem:[%s274 + $0x50] sm:$0xff] %v295
                %v297 = vld [vmem:[%s273 + $0xa8] sm:$0xff]
                %298 = vst [vmem:[%s274 + $0x58] sm:$0xff] %v297
                %v299 = vld [vmem:[%s273 + $0xc0] sm:$0xff]
                %300 = vst [vmem:[%s274 + $0x60] sm:$0xff] %v299
                %v301 = vld [vmem:[%s273 + $0xc8] sm:$0xff]
                %302 = vst [vmem:[%s274 + $0x68] sm:$0xff] %v301
                %v303 = vld [vmem:[%s273 + $0xe0] sm:$0xff]
                %304 = vst [vmem:[%s274 + $0x70] sm:$0xff] %v303
                %v305 = vld [vmem:[%s273 + $0xe8] sm:$0xff]
                %306 = vst [vmem:[%s274 + $0x78] sm:$0xff] %v305
                %v307 = vld [vmem:[%s273 + $0x100] sm:$0xff]
                %308 = vst [vmem:[%s274 + $0x80] sm:$0xff] %v307
                %v309 = vld [vmem:[%s273 + $0x108] sm:$0xff]
                %310 = vst [vmem:[%s274 + $0x88] sm:$0xff] %v309
                %v311 = vld [vmem:[%s273 + $0x120] sm:$0xff]
                %312 = vst [vmem:[%s274 + $0x90] sm:$0xff] %v311
                %v313 = vld [vmem:[%s273 + $0x128] sm:$0xff]
                %314 = vst [vmem:[%s274 + $0x98] sm:$0xff] %v313
                %v315 = vld [vmem:[%s273 + $0x140] sm:$0xff]
                %316 = vst [vmem:[%s274 + $0xa0] sm:$0xff] %v315
                %v317 = vld [vmem:[%s273 + $0x148] sm:$0xff]
                %318 = vst [vmem:[%s274 + $0xa8] sm:$0xff] %v317
                %v319 = vld [vmem:[%s273 + $0x160] sm:$0xff]
                %320 = vst [vmem:[%s274 + $0xb0] sm:$0xff] %v319
                %v321 = vld [vmem:[%s273 + $0x168] sm:$0xff]
                %322 = vst [vmem:[%s274 + $0xb8] sm:$0xff] %v321
                %v323 = vld [vmem:[%s273 + $0x180] sm:$0xff]
                %324 = vst [vmem:[%s274 + $0xc0] sm:$0xff] %v323
                %v325 = vld [vmem:[%s273 + $0x188] sm:$0xff]
                %326 = vst [vmem:[%s274 + $0xc8] sm:$0xff] %v325
                %v327 = vld [vmem:[%s273 + $0x1a0] sm:$0xff]
                %328 = vst [vmem:[%s274 + $0xd0] sm:$0xff] %v327
                %v329 = vld [vmem:[%s273 + $0x1a8] sm:$0xff]
                %330 = vst [vmem:[%s274 + $0xd8] sm:$0xff] %v329
                %v331 = vld [vmem:[%s273 + $0x1c0] sm:$0xff]
                %332 = vst [vmem:[%s274 + $0xe0] sm:$0xff] %v331
                %v333 = vld [vmem:[%s273 + $0x1c8] sm:$0xff]
                %334 = vst [vmem:[%s274 + $0xe8] sm:$0xff] %v333
                %v335 = vld [vmem:[%s273 + $0x1e0] sm:$0xff]
                %336 = vst [vmem:[%s274 + $0xf0] sm:$0xff] %v335
                %v337 = vld [vmem:[%s273 + $0x1e8] sm:$0xff]
                %338 = vst [vmem:[%s274 + $0xf8] sm:$0xff] %v337
              $region45: #{tpu_custom_call.1} parent=39 // loop_footer
                %s272 = sadd.s32 1, %s268
              $region46: #{tpu_custom_call.1} parent=39 // loop_footer_branch
                %267 = sbr.rel target = $region42
              $region47: #{tpu_custom_call.1} parent=39 // loop_exit
                _
            $region40: #{tpu_custom_call.1} parent=35 // pred_fallthru
              _
            // Predicated region
            $region48: #{tpu_custom_call.1} parent=35 // pred_check
              _
            $region49: #{tpu_custom_call.1} parent=35 // pred_check_branch
              %340 = sbr.rel target = $region51
            $region50: #{tpu_custom_call.1} parent=35 // pred_region
              _
            $region51: #{tpu_custom_call.1} parent=35 // pred_fallthru
              _
          $region36: #{tpu_custom_call.1} parent=31 // pred_fallthru
            _
          %341 = vnop
        $region32: #{tpu_custom_call.1} parent=27 // pred_fallthru
          _
        // Predicated region
        $region52: #{tpu_custom_call.1} parent=27 // pred_check
          %p342 = pneg %p123
        $region53: #{tpu_custom_call.1} parent=27 // pred_check_branch
          %344 = sbr.rel (%p342) target = $region55
        $region54: #{tpu_custom_call.1} parent=27 // pred_region
          %s345 = smul.u32 2, %s21
          %p346 = scmp.lt.s32.totalorder %s345, 3
          %s347 = scalar_select %p346, %s345, 3
          %s348 = scalar_lea.vmem %s3, %s347
          %s349 = smul.u32 2, %s21
        $region55: #{tpu_custom_call.1} parent=27 // pred_fallthru
          _
        // Predicated region
        $region56: #{tpu_custom_call.1} parent=27 // pred_check
          %p350 = pneg %p175
        $region57: #{tpu_custom_call.1} parent=27 // pred_check_branch
          %352 = sbr.rel (%p350) target = $region59
        $region58: #{tpu_custom_call.1} parent=27 // pred_region
          %s353 = smul.u32 2, %s21
          %p354 = scmp.lt.s32.totalorder %s353, 3
          %s355 = scalar_select %p354, %s353, 3
          %s356 = scalar_lea.vmem %s5, %s355
          %s357 = smul.u32 2, %s21
        $region59: #{tpu_custom_call.1} parent=27 // pred_fallthru
          _
      $region28: #{tpu_custom_call.1} parent=5 // pred_fallthru
        _
      %p358 = scmp.le.s32.totalorder 1, %s13
      %p359 = scmp.lt.s32.totalorder %s13, 3
      %p360 = pnand %p358, %p359
      %p361 = pneg %p360
      // Predicated region
      $region60: #{tpu_custom_call.1} parent=5 // pred_check
        _
      $region61: #{tpu_custom_call.1} parent=5 // pred_check_branch
        %363 = sbr.rel (%p360) target = $region63
      $region62: #{tpu_custom_call.1} parent=5 // pred_region
        %s364 = ssub.s32 %s13, 1
        %s365 = sand.u32 %s64, 1
        %s366 = sand.u32 %s64, 1
        %s367 = smul.addr %s366, 256
        %s368 = scalar_lea.vmem [#allocation4], %s367
        // Predicated region
        $region64: #{tpu_custom_call.1} parent=62 // pred_check
          %p369 = pneg %p77
        $region65: #{tpu_custom_call.1} parent=62 // pred_check_branch
          %371 = sbr.rel (%p369) target = $region67
        $region66: #{tpu_custom_call.1} parent=62 // pred_region
          _
        $region67: #{tpu_custom_call.1} parent=62 // pred_fallthru
          _
        %s372 = smul.u32 64, %s22
        %p373 = scmp.lt.s32.totalorder %s372, 63
        %s374 = scalar_select %p373, %s372, 63
        %s375 = smul.addr %s374, 8
        %s376 = scalar_lea.vmem %s0, %s375
        %p377 = pneg %p51
        %p378 = pneg %p48
        %s379 = sand.u32 %s64, 1
        %s380 = sand.u32 %s64, 1
        %s381 = smul.addr %s380, 256
        %s382 = scalar_lea.vmem [#allocation4], %s381
        %p383 = pneg %p77
        %p384 = pneg %p74
        %s385 = smul.u32 64, %s22
        %p386 = scmp.lt.s32.totalorder %s385, 63
        %s387 = scalar_select %p386, %s385, 63
        %s388 = smul.addr %s387, 8
        %s389 = scalar_lea.vmem %s2, %s388
        %p390 = pneg %p103
        %p391 = pneg %p100
        %s392 = smul.u32 2, %s23
        %p393 = scmp.lt.s32.totalorder %s392, 3
        %s394 = scalar_select %p393, %s392, 3
        %s395 = scalar_lea.vmem %s3, %s394
        %p396 = pneg %p129
        %p397 = pneg %p126
        %s398 = smul.u32 64, %s22
        %p399 = scmp.lt.s32.totalorder %s398, 63
        %s400 = scalar_select %p399, %s398, 63
        %s401 = smul.addr %s400, 8
        %s402 = scalar_lea.vmem %s4, %s401
        %p403 = pneg %p155
        %p404 = pneg %p152
        %s405 = smul.u32 2, %s23
        %p406 = scmp.lt.s32.totalorder %s405, 3
        %s407 = scalar_select %p406, %s405, 3
        %s408 = scalar_lea.vmem %s5, %s407
        %p409 = pneg %p181
        %p410 = pneg %p178
        %p411 = pneg %p207
        %p412 = pneg %p204
        %s413 = smul.u32 64, %s22
        %p414 = scmp.lt.s32.totalorder %s413, 63
        %s415 = scalar_select %p414, %s413, 63
        %s416 = smul.addr %s415, 8
        %s417 = scalar_lea.vmem %s0, %s416
        %s418 = smul.u32 64, %s22
        %s419 = smul.u32 2, %s23
        %s420 = smul.u32 64, %s22
        %p421 = scmp.lt.s32.totalorder %s420, 63
        %s422 = scalar_select %p421, %s420, 63
        %s423 = smul.addr %s422, 8
        %s424 = scalar_lea.vmem %s2, %s423
        %s425 = smul.u32 64, %s22
        %s426 = smul.u32 2, %s23
        %p427 = scmp.lt.s32.totalorder %s426, 3
        %s428 = scalar_select %p427, %s426, 3
        %s429 = scalar_lea.vmem %s3, %s428
        %s430 = smul.u32 2, %s23
        %s431 = smul.u32 64, %s22
        %p432 = scmp.lt.s32.totalorder %s431, 63
        %s433 = scalar_select %p432, %s431, 63
        %s434 = smul.addr %s433, 8
        %s435 = scalar_lea.vmem %s4, %s434
        %s436 = smul.u32 64, %s22
        %s437 = smul.u32 2, %s23
        %p438 = scmp.lt.s32.totalorder %s437, 3
        %s439 = scalar_select %p438, %s437, 3
        %s440 = scalar_lea.vmem %s5, %s439
        %s441 = smul.u32 2, %s23
        %p442 = scmp.eq.s32.totalorder %s23, 0
        // Predicated region
        $region68: #{tpu_custom_call.1} parent=62 // pred_check
          %p443 = pneg %p442
        $region69: #{tpu_custom_call.1} parent=62 // pred_check_branch
          %445 = sbr.rel (%p443) target = $region71
        $region70: #{tpu_custom_call.1} parent=62 // pred_region
          %vm446 = vcmask 7168
          %447 = vst.msk [vmem:[#allocation2] sm:$0xff] %vm446, 5e+11
          %448 = vst.msk [vmem:[#allocation2 + $0x8] sm:$0xff] %vm446, 5e+11
          %449 = vst.msk [vmem:[#allocation2 + $0x10] sm:$0xff] %vm446, 5e+11
          %450 = vst.msk [vmem:[#allocation2 + $0x18] sm:$0xff] %vm446, 5e+11
          %451 = vst.msk [vmem:[#allocation2 + $0x20] sm:$0xff] %vm446, 5e+11
          %452 = vst.msk [vmem:[#allocation2 + $0x28] sm:$0xff] %vm446, 5e+11
          %453 = vst.msk [vmem:[#allocation2 + $0x30] sm:$0xff] %vm446, 5e+11
          %454 = vst.msk [vmem:[#allocation2 + $0x38] sm:$0xff] %vm446, 5e+11
          %455 = vst.msk [vmem:[#allocation2 + $0x40] sm:$0xff] %vm446, 5e+11
          %456 = vst.msk [vmem:[#allocation2 + $0x48] sm:$0xff] %vm446, 5e+11
          %457 = vst.msk [vmem:[#allocation2 + $0x50] sm:$0xff] %vm446, 5e+11
          %458 = vst.msk [vmem:[#allocation2 + $0x58] sm:$0xff] %vm446, 5e+11
          %459 = vst.msk [vmem:[#allocation2 + $0x60] sm:$0xff] %vm446, 5e+11
          %460 = vst.msk [vmem:[#allocation2 + $0x68] sm:$0xff] %vm446, 5e+11
          %461 = vst.msk [vmem:[#allocation2 + $0x70] sm:$0xff] %vm446, 5e+11
          %462 = vst.msk [vmem:[#allocation2 + $0x78] sm:$0xff] %vm446, 5e+11
          %463 = vst.msk [vmem:[#allocation2 + $0x80] sm:$0xff] %vm446, 5e+11
          %464 = vst.msk [vmem:[#allocation2 + $0x88] sm:$0xff] %vm446, 5e+11
          %465 = vst.msk [vmem:[#allocation2 + $0x90] sm:$0xff] %vm446, 5e+11
          %466 = vst.msk [vmem:[#allocation2 + $0x98] sm:$0xff] %vm446, 5e+11
          %467 = vst.msk [vmem:[#allocation2 + $0xa0] sm:$0xff] %vm446, 5e+11
          %468 = vst.msk [vmem:[#allocation2 + $0xa8] sm:$0xff] %vm446, 5e+11
          %469 = vst.msk [vmem:[#allocation2 + $0xb0] sm:$0xff] %vm446, 5e+11
          %470 = vst.msk [vmem:[#allocation2 + $0xb8] sm:$0xff] %vm446, 5e+11
          %471 = vst.msk [vmem:[#allocation2 + $0xc0] sm:$0xff] %vm446, 5e+11
          %472 = vst.msk [vmem:[#allocation2 + $0xc8] sm:$0xff] %vm446, 5e+11
          %473 = vst.msk [vmem:[#allocation2 + $0xd0] sm:$0xff] %vm446, 5e+11
          %474 = vst.msk [vmem:[#allocation2 + $0xd8] sm:$0xff] %vm446, 5e+11
          %475 = vst.msk [vmem:[#allocation2 + $0xe0] sm:$0xff] %vm446, 5e+11
          %476 = vst.msk [vmem:[#allocation2 + $0xe8] sm:$0xff] %vm446, 5e+11
          %477 = vst.msk [vmem:[#allocation2 + $0xf0] sm:$0xff] %vm446, 5e+11
          %478 = vst.msk [vmem:[#allocation2 + $0xf8] sm:$0xff] %vm446, 5e+11
          %479 = vst.msk [vmem:[#allocation2 + $0x100] sm:$0xff] %vm446, 5e+11
          %480 = vst.msk [vmem:[#allocation2 + $0x108] sm:$0xff] %vm446, 5e+11
          %481 = vst.msk [vmem:[#allocation2 + $0x110] sm:$0xff] %vm446, 5e+11
          %482 = vst.msk [vmem:[#allocation2 + $0x118] sm:$0xff] %vm446, 5e+11
          %483 = vst.msk [vmem:[#allocation2 + $0x120] sm:$0xff] %vm446, 5e+11
          %484 = vst.msk [vmem:[#allocation2 + $0x128] sm:$0xff] %vm446, 5e+11
          %485 = vst.msk [vmem:[#allocation2 + $0x130] sm:$0xff] %vm446, 5e+11
          %486 = vst.msk [vmem:[#allocation2 + $0x138] sm:$0xff] %vm446, 5e+11
          %487 = vst.msk [vmem:[#allocation2 + $0x140] sm:$0xff] %vm446, 5e+11
          %488 = vst.msk [vmem:[#allocation2 + $0x148] sm:$0xff] %vm446, 5e+11
          %489 = vst.msk [vmem:[#allocation2 + $0x150] sm:$0xff] %vm446, 5e+11
          %490 = vst.msk [vmem:[#allocation2 + $0x158] sm:$0xff] %vm446, 5e+11
          %491 = vst.msk [vmem:[#allocation2 + $0x160] sm:$0xff] %vm446, 5e+11
          %492 = vst.msk [vmem:[#allocation2 + $0x168] sm:$0xff] %vm446, 5e+11
          %493 = vst.msk [vmem:[#allocation2 + $0x170] sm:$0xff] %vm446, 5e+11
          %494 = vst.msk [vmem:[#allocation2 + $0x178] sm:$0xff] %vm446, 5e+11
          %495 = vst.msk [vmem:[#allocation2 + $0x180] sm:$0xff] %vm446, 5e+11
          %496 = vst.msk [vmem:[#allocation2 + $0x188] sm:$0xff] %vm446, 5e+11
          %497 = vst.msk [vmem:[#allocation2 + $0x190] sm:$0xff] %vm446, 5e+11
          %498 = vst.msk [vmem:[#allocation2 + $0x198] sm:$0xff] %vm446, 5e+11
          %499 = vst.msk [vmem:[#allocation2 + $0x1a0] sm:$0xff] %vm446, 5e+11
          %500 = vst.msk [vmem:[#allocation2 + $0x1a8] sm:$0xff] %vm446, 5e+11
          %501 = vst.msk [vmem:[#allocation2 + $0x1b0] sm:$0xff] %vm446, 5e+11
          %502 = vst.msk [vmem:[#allocation2 + $0x1b8] sm:$0xff] %vm446, 5e+11
          %503 = vst.msk [vmem:[#allocation2 + $0x1c0] sm:$0xff] %vm446, 5e+11
          %504 = vst.msk [vmem:[#allocation2 + $0x1c8] sm:$0xff] %vm446, 5e+11
          %505 = vst.msk [vmem:[#allocation2 + $0x1d0] sm:$0xff] %vm446, 5e+11
          %506 = vst.msk [vmem:[#allocation2 + $0x1d8] sm:$0xff] %vm446, 5e+11
          %507 = vst.msk [vmem:[#allocation2 + $0x1e0] sm:$0xff] %vm446, 5e+11
          %508 = vst.msk [vmem:[#allocation2 + $0x1e8] sm:$0xff] %vm446, 5e+11
          %509 = vst.msk [vmem:[#allocation2 + $0x1f0] sm:$0xff] %vm446, 5e+11
          %510 = vst.msk [vmem:[#allocation2 + $0x1f8] sm:$0xff] %vm446, 5e+11
          %511 = vst.msk [vmem:[#allocation3] sm:$0xff] %vm446, -5e+11
          %512 = vst.msk [vmem:[#allocation3 + $0x8] sm:$0xff] %vm446, -5e+11
          %513 = vst.msk [vmem:[#allocation3 + $0x10] sm:$0xff] %vm446, -5e+11
          %514 = vst.msk [vmem:[#allocation3 + $0x18] sm:$0xff] %vm446, -5e+11
          %515 = vst.msk [vmem:[#allocation3 + $0x20] sm:$0xff] %vm446, -5e+11
          %516 = vst.msk [vmem:[#allocation3 + $0x28] sm:$0xff] %vm446, -5e+11
          %517 = vst.msk [vmem:[#allocation3 + $0x30] sm:$0xff] %vm446, -5e+11
          %518 = vst.msk [vmem:[#allocation3 + $0x38] sm:$0xff] %vm446, -5e+11
          %519 = vst.msk [vmem:[#allocation3 + $0x40] sm:$0xff] %vm446, -5e+11
          %520 = vst.msk [vmem:[#allocation3 + $0x48] sm:$0xff] %vm446, -5e+11
          %521 = vst.msk [vmem:[#allocation3 + $0x50] sm:$0xff] %vm446, -5e+11
          %522 = vst.msk [vmem:[#allocation3 + $0x58] sm:$0xff] %vm446, -5e+11
          %523 = vst.msk [vmem:[#allocation3 + $0x60] sm:$0xff] %vm446, -5e+11
          %524 = vst.msk [vmem:[#allocation3 + $0x68] sm:$0xff] %vm446, -5e+11
          %525 = vst.msk [vmem:[#allocation3 + $0x70] sm:$0xff] %vm446, -5e+11
          %526 = vst.msk [vmem:[#allocation3 + $0x78] sm:$0xff] %vm446, -5e+11
          %527 = vst.msk [vmem:[#allocation3 + $0x80] sm:$0xff] %vm446, -5e+11
          %528 = vst.msk [vmem:[#allocation3 + $0x88] sm:$0xff] %vm446, -5e+11
          %529 = vst.msk [vmem:[#allocation3 + $0x90] sm:$0xff] %vm446, -5e+11
          %530 = vst.msk [vmem:[#allocation3 + $0x98] sm:$0xff] %vm446, -5e+11
          %531 = vst.msk [vmem:[#allocation3 + $0xa0] sm:$0xff] %vm446, -5e+11
          %532 = vst.msk [vmem:[#allocation3 + $0xa8] sm:$0xff] %vm446, -5e+11
          %533 = vst.msk [vmem:[#allocation3 + $0xb0] sm:$0xff] %vm446, -5e+11
          %534 = vst.msk [vmem:[#allocation3 + $0xb8] sm:$0xff] %vm446, -5e+11
          %535 = vst.msk [vmem:[#allocation3 + $0xc0] sm:$0xff] %vm446, -5e+11
          %536 = vst.msk [vmem:[#allocation3 + $0xc8] sm:$0xff] %vm446, -5e+11
          %537 = vst.msk [vmem:[#allocation3 + $0xd0] sm:$0xff] %vm446, -5e+11
          %538 = vst.msk [vmem:[#allocation3 + $0xd8] sm:$0xff] %vm446, -5e+11
          %539 = vst.msk [vmem:[#allocation3 + $0xe0] sm:$0xff] %vm446, -5e+11
          %540 = vst.msk [vmem:[#allocation3 + $0xe8] sm:$0xff] %vm446, -5e+11
          %541 = vst.msk [vmem:[#allocation3 + $0xf0] sm:$0xff] %vm446, -5e+11
          %542 = vst.msk [vmem:[#allocation3 + $0xf8] sm:$0xff] %vm446, -5e+11
          %543 = vst.msk [vmem:[#allocation3 + $0x100] sm:$0xff] %vm446, -5e+11
          %544 = vst.msk [vmem:[#allocation3 + $0x108] sm:$0xff] %vm446, -5e+11
          %545 = vst.msk [vmem:[#allocation3 + $0x110] sm:$0xff] %vm446, -5e+11
          %546 = vst.msk [vmem:[#allocation3 + $0x118] sm:$0xff] %vm446, -5e+11
          %547 = vst.msk [vmem:[#allocation3 + $0x120] sm:$0xff] %vm446, -5e+11
          %548 = vst.msk [vmem:[#allocation3 + $0x128] sm:$0xff] %vm446, -5e+11
          %549 = vst.msk [vmem:[#allocation3 + $0x130] sm:$0xff] %vm446, -5e+11
          %550 = vst.msk [vmem:[#allocation3 + $0x138] sm:$0xff] %vm446, -5e+11
          %551 = vst.msk [vmem:[#allocation3 + $0x140] sm:$0xff] %vm446, -5e+11
          %552 = vst.msk [vmem:[#allocation3 + $0x148] sm:$0xff] %vm446, -5e+11
          %553 = vst.msk [vmem:[#allocation3 + $0x150] sm:$0xff] %vm446, -5e+11
          %554 = vst.msk [vmem:[#allocation3 + $0x158] sm:$0xff] %vm446, -5e+11
          %555 = vst.msk [vmem:[#allocation3 + $0x160] sm:$0xff] %vm446, -5e+11
          %556 = vst.msk [vmem:[#allocation3 + $0x168] sm:$0xff] %vm446, -5e+11
          %557 = vst.msk [vmem:[#allocation3 + $0x170] sm:$0xff] %vm446, -5e+11
          %558 = vst.msk [vmem:[#allocation3 + $0x178] sm:$0xff] %vm446, -5e+11
          %559 = vst.msk [vmem:[#allocation3 + $0x180] sm:$0xff] %vm446, -5e+11
          %560 = vst.msk [vmem:[#allocation3 + $0x188] sm:$0xff] %vm446, -5e+11
          %561 = vst.msk [vmem:[#allocation3 + $0x190] sm:$0xff] %vm446, -5e+11
          %562 = vst.msk [vmem:[#allocation3 + $0x198] sm:$0xff] %vm446, -5e+11
          %563 = vst.msk [vmem:[#allocation3 + $0x1a0] sm:$0xff] %vm446, -5e+11
          %564 = vst.msk [vmem:[#allocation3 + $0x1a8] sm:$0xff] %vm446, -5e+11
          %565 = vst.msk [vmem:[#allocation3 + $0x1b0] sm:$0xff] %vm446, -5e+11
          %566 = vst.msk [vmem:[#allocation3 + $0x1b8] sm:$0xff] %vm446, -5e+11
          %567 = vst.msk [vmem:[#allocation3 + $0x1c0] sm:$0xff] %vm446, -5e+11
          %568 = vst.msk [vmem:[#allocation3 + $0x1c8] sm:$0xff] %vm446, -5e+11
          %569 = vst.msk [vmem:[#allocation3 + $0x1d0] sm:$0xff] %vm446, -5e+11
          %570 = vst.msk [vmem:[#allocation3 + $0x1d8] sm:$0xff] %vm446, -5e+11
          %571 = vst.msk [vmem:[#allocation3 + $0x1e0] sm:$0xff] %vm446, -5e+11
          %572 = vst.msk [vmem:[#allocation3 + $0x1e8] sm:$0xff] %vm446, -5e+11
          %573 = vst.msk [vmem:[#allocation3 + $0x1f0] sm:$0xff] %vm446, -5e+11
          %574 = vst.msk [vmem:[#allocation3 + $0x1f8] sm:$0xff] %vm446, -5e+11
        $region71: #{tpu_custom_call.1} parent=62 // pred_fallthru
          _
        %v575 = vld [vmem:[%s417] sm:$0xff]
        %v576 = vld [vmem:[%s417 + $0x8] sm:$0xff]
        %v577 = vld [vmem:[%s417 + $0x10] sm:$0xff]
        %v578 = vld [vmem:[%s417 + $0x18] sm:$0xff]
        %v579 = vld [vmem:[%s417 + $0x20] sm:$0xff]
        %v580 = vld [vmem:[%s417 + $0x28] sm:$0xff]
        %v581 = vld [vmem:[%s417 + $0x30] sm:$0xff]
        %v582 = vld [vmem:[%s417 + $0x38] sm:$0xff]
        %v583 = vld [vmem:[%s417 + $0x40] sm:$0xff]
        %v584 = vld [vmem:[%s417 + $0x48] sm:$0xff]
        %v585 = vld [vmem:[%s417 + $0x50] sm:$0xff]
        %v586 = vld [vmem:[%s417 + $0x58] sm:$0xff]
        %v587 = vld [vmem:[%s417 + $0x60] sm:$0xff]
        %v588 = vld [vmem:[%s417 + $0x68] sm:$0xff]
        %v589 = vld [vmem:[%s417 + $0x70] sm:$0xff]
        %v590 = vld [vmem:[%s417 + $0x78] sm:$0xff]
        %v591 = vld [vmem:[%s417 + $0x80] sm:$0xff]
        %v592 = vld [vmem:[%s417 + $0x88] sm:$0xff]
        %v593 = vld [vmem:[%s417 + $0x90] sm:$0xff]
        %v594 = vld [vmem:[%s417 + $0x98] sm:$0xff]
        %v595 = vld [vmem:[%s417 + $0xa0] sm:$0xff]
        %v596 = vld [vmem:[%s417 + $0xa8] sm:$0xff]
        %v597 = vld [vmem:[%s417 + $0xb0] sm:$0xff]
        %v598 = vld [vmem:[%s417 + $0xb8] sm:$0xff]
        %v599 = vld [vmem:[%s417 + $0xc0] sm:$0xff]
        %v600 = vld [vmem:[%s417 + $0xc8] sm:$0xff]
        %v601 = vld [vmem:[%s417 + $0xd0] sm:$0xff]
        %v602 = vld [vmem:[%s417 + $0xd8] sm:$0xff]
        %v603 = vld [vmem:[%s417 + $0xe0] sm:$0xff]
        %v604 = vld [vmem:[%s417 + $0xe8] sm:$0xff]
        %v605 = vld [vmem:[%s417 + $0xf0] sm:$0xff]
        %v606 = vld [vmem:[%s417 + $0xf8] sm:$0xff]
        %v607 = vld [vmem:[%s417 + $0x100] sm:$0xff]
        %v608 = vld [vmem:[%s417 + $0x108] sm:$0xff]
        %v609 = vld [vmem:[%s417 + $0x110] sm:$0xff]
        %v610 = vld [vmem:[%s417 + $0x118] sm:$0xff]
        %v611 = vld [vmem:[%s417 + $0x120] sm:$0xff]
        %v612 = vld [vmem:[%s417 + $0x128] sm:$0xff]
        %v613 = vld [vmem:[%s417 + $0x130] sm:$0xff]
        %v614 = vld [vmem:[%s417 + $0x138] sm:$0xff]
        %v615 = vld [vmem:[%s417 + $0x140] sm:$0xff]
        %v616 = vld [vmem:[%s417 + $0x148] sm:$0xff]
        %v617 = vld [vmem:[%s417 + $0x150] sm:$0xff]
        %v618 = vld [vmem:[%s417 + $0x158] sm:$0xff]
        %v619 = vld [vmem:[%s417 + $0x160] sm:$0xff]
        %v620 = vld [vmem:[%s417 + $0x168] sm:$0xff]
        %v621 = vld [vmem:[%s417 + $0x170] sm:$0xff]
        %v622 = vld [vmem:[%s417 + $0x178] sm:$0xff]
        %v623 = vld [vmem:[%s417 + $0x180] sm:$0xff]
        %v624 = vld [vmem:[%s417 + $0x188] sm:$0xff]
        %v625 = vld [vmem:[%s417 + $0x190] sm:$0xff]
        %v626 = vld [vmem:[%s417 + $0x198] sm:$0xff]
        %v627 = vld [vmem:[%s417 + $0x1a0] sm:$0xff]
        %v628 = vld [vmem:[%s417 + $0x1a8] sm:$0xff]
        %v629 = vld [vmem:[%s417 + $0x1b0] sm:$0xff]
        %v630 = vld [vmem:[%s417 + $0x1b8] sm:$0xff]
        %v631 = vld [vmem:[%s417 + $0x1c0] sm:$0xff]
        %v632 = vld [vmem:[%s417 + $0x1c8] sm:$0xff]
        %v633 = vld [vmem:[%s417 + $0x1d0] sm:$0xff]
        %v634 = vld [vmem:[%s417 + $0x1d8] sm:$0xff]
        %v635 = vld [vmem:[%s417 + $0x1e0] sm:$0xff]
        %v636 = vld [vmem:[%s417 + $0x1e8] sm:$0xff]
        %v637 = vld [vmem:[%s417 + $0x1f0] sm:$0xff]
        %v638 = vld [vmem:[%s417 + $0x1f8] sm:$0xff]
        %v639 = vld [vmem:[%s368] sm:$0xff]
        %v640 = vld [vmem:[%s368 + $0x8] sm:$0xff]
        %v641 = vld [vmem:[%s368 + $0x10] sm:$0xff]
        %v642 = vld [vmem:[%s368 + $0x18] sm:$0xff]
        %v643 = vld [vmem:[%s368 + $0x20] sm:$0xff]
        %v644 = vld [vmem:[%s368 + $0x28] sm:$0xff]
        %v645 = vld [vmem:[%s368 + $0x30] sm:$0xff]
        %v646 = vld [vmem:[%s368 + $0x38] sm:$0xff]
        %v647 = vld [vmem:[%s368 + $0x40] sm:$0xff]
        %v648 = vld [vmem:[%s368 + $0x48] sm:$0xff]
        %v649 = vld [vmem:[%s368 + $0x50] sm:$0xff]
        %v650 = vld [vmem:[%s368 + $0x58] sm:$0xff]
        %v651 = vld [vmem:[%s368 + $0x60] sm:$0xff]
        %v652 = vld [vmem:[%s368 + $0x68] sm:$0xff]
        %v653 = vld [vmem:[%s368 + $0x70] sm:$0xff]
        %v654 = vld [vmem:[%s368 + $0x78] sm:$0xff]
        %v655 = vld [vmem:[%s368 + $0x80] sm:$0xff]
        %v656 = vld [vmem:[%s368 + $0x88] sm:$0xff]
        %v657 = vld [vmem:[%s368 + $0x90] sm:$0xff]
        %v658 = vld [vmem:[%s368 + $0x98] sm:$0xff]
        %v659 = vld [vmem:[%s368 + $0xa0] sm:$0xff]
        %v660 = vld [vmem:[%s368 + $0xa8] sm:$0xff]
        %v661 = vld [vmem:[%s368 + $0xb0] sm:$0xff]
        %v662 = vld [vmem:[%s368 + $0xb8] sm:$0xff]
        %v663 = vld [vmem:[%s368 + $0xc0] sm:$0xff]
        %v664 = vld [vmem:[%s368 + $0xc8] sm:$0xff]
        %v665 = vld [vmem:[%s368 + $0xd0] sm:$0xff]
        %v666 = vld [vmem:[%s368 + $0xd8] sm:$0xff]
        %v667 = vld [vmem:[%s368 + $0xe0] sm:$0xff]
        %v668 = vld [vmem:[%s368 + $0xe8] sm:$0xff]
        %v669 = vld [vmem:[%s368 + $0xf0] sm:$0xff]
        %v670 = vld [vmem:[%s368 + $0xf8] sm:$0xff]
        %671 = vmatprep.subr.mxu0 %v640
        %672 = vmatpush1.msra.mxu0 %v639
        %673 = vmatprep.subr.mxu0 %v642
        %674 = vmatpush1.msra.mxu0 %v641
        %675 = vmatprep.subr.mxu0 %v644
        %676 = vmatpush1.msra.mxu0 %v643
        %677 = vmatprep.subr.mxu0 %v646
        %678 = vmatpush1.msra.mxu0 %v645
        %679 = vmatprep.subr.mxu0 %v648
        %680 = vmatpush1.msra.mxu0 %v647
        %681 = vmatprep.subr.mxu0 %v650
        %682 = vmatpush1.msra.mxu0 %v649
        %683 = vmatprep.subr.mxu0 %v652
        %684 = vmatpush1.msra.mxu0 %v651
        %685 = vmatprep.subr.mxu0 %v654
        %686 = vmatpush1.msra.mxu0 %v653
        %687 = vmatprep.subr.mxu0 %v656
        %688 = vmatpush1.msra.mxu0 %v655
        %689 = vmatprep.subr.mxu0 %v658
        %690 = vmatpush1.msra.mxu0 %v657
        %691 = vmatprep.subr.mxu0 %v660
        %692 = vmatpush1.msra.mxu0 %v659
        %693 = vmatprep.subr.mxu0 %v662
        %694 = vmatpush1.msra.mxu0 %v661
        %695 = vmatprep.subr.mxu0 %v664
        %696 = vmatpush1.msra.mxu0 %v663
        %697 = vmatprep.subr.mxu0 %v666
        %698 = vmatpush1.msra.mxu0 %v665
        %699 = vmatprep.subr.mxu0 %v668
        %700 = vmatpush1.msra.mxu0 %v667
        %701 = vmatprep.subr.mxu0 %v670
        %702 = vmatpush1.msra.mxu0 %v669
        %703 = vmatprep.subr.mxu0 0.0
        %704 = vmatpush1.msra.mxu0 0.0
        %705 = vmatprep.subr.mxu0 0.0
        %706 = vmatpush1.msra.mxu0 0.0
        %707 = vmatprep.subr.mxu0 0.0
        %708 = vmatpush1.msra.mxu0 0.0
        %709 = vmatprep.subr.mxu0 0.0
        %710 = vmatpush1.msra.mxu0 0.0
        %711 = vmatprep.subr.mxu0 0.0
        %712 = vmatpush1.msra.mxu0 0.0
        %713 = vmatprep.subr.mxu0 0.0
        %714 = vmatpush1.msra.mxu0 0.0
        %715 = vmatprep.subr.mxu0 0.0
        %716 = vmatpush1.msra.mxu0 0.0
        %717 = vmatprep.subr.mxu0 0.0
        %718 = vmatpush1.msra.mxu0 0.0
        %719 = vmatprep.subr.mxu0 0.0
        %720 = vmatpush1.msra.mxu0 0.0
        %721 = vmatprep.subr.mxu0 0.0
        %722 = vmatpush1.msra.mxu0 0.0
        %723 = vmatprep.subr.mxu0 0.0
        %724 = vmatpush1.msra.mxu0 0.0
        %725 = vmatprep.subr.mxu0 0.0
        %726 = vmatpush1.msra.mxu0 0.0
        %727 = vmatprep.subr.mxu0 0.0
        %728 = vmatpush1.msra.mxu0 0.0
        %729 = vmatprep.subr.mxu0 0.0
        %730 = vmatpush1.msra.mxu0 0.0
        %731 = vmatprep.subr.mxu0 0.0
        %732 = vmatpush1.msra.mxu0 0.0
        %733 = vmatprep.subr.mxu0 0.0
        %734 = vmatpush1.msra.mxu0 0.0
        %735 = vmatprep.mubr.f32.mxu0 0.0
        %736 = vmatmul.mubr.f32.gmra.mrb[0].mxu0 %v575
        %v737 = vpop.f32.mrb[0].mxu0
        %v738 = vadd.f32 0.0, %v737
        %v739 = vpop.f32.mrb[0].mxu0
        %v740 = vadd.f32 0.0, %v739
        %741 = vmatprep.mubr.f32.mxu0 0.0
        %742 = vmatmul.mubr.f32.gmra.mrb[0].mxu0 %v576
        %v743 = vpop.f32.mrb[0].mxu0
        %v744 = vadd.f32 0.0, %v743
        %v745 = vpop.f32.mrb[0].mxu0
        %v746 = vadd.f32 0.0, %v745
        %747 = vmatprep.mubr.f32.mxu0 0.0
        %748 = vmatmul.mubr.f32.gmra.mrb[0].mxu0 %v577
        %v749 = vpop.f32.mrb[0].mxu0
        %v750 = vadd.f32 0.0, %v749
        %v751 = vpop.f32.mrb[0].mxu0
        %v752 = vadd.f32 0.0, %v751
        %753 = vmatprep.mubr.f32.mxu0 0.0
        %754 = vmatmul.mubr.f32.gmra.mrb[0].mxu0 %v578
        %v755 = vpop.f32.mrb[0].mxu0
        %v756 = vadd.f32 0.0, %v755
        %v757 = vpop.f32.mrb[0].mxu0
        %v758 = vadd.f32 0.0, %v757
        %759 = vmatprep.mubr.f32.mxu0 0.0
        %760 = vmatmul.mubr.f32.gmra.mrb[0].mxu0 %v579
        %v761 = vpop.f32.mrb[0].mxu0
        %v762 = vadd.f32 0.0, %v761
        %v763 = vpop.f32.mrb[0].mxu0
        %v764 = vadd.f32 0.0, %v763
        %765 = vmatprep.mubr.f32.mxu0 0.0
        %766 = vmatmul.mubr.f32.gmra.mrb[0].mxu0 %v580
        %v767 = vpop.f32.mrb[0].mxu0
        %v768 = vadd.f32 0.0, %v767
        %v769 = vpop.f32.mrb[0].mxu0
        %v770 = vadd.f32 0.0, %v769
        %771 = vmatprep.mubr.f32.mxu0 0.0
        %772 = vmatmul.mubr.f32.gmra.mrb[0].mxu0 %v581
        %v773 = vpop.f32.mrb[0].mxu0
        %v774 = vadd.f32 0.0, %v773
        %v775 = vpop.f32.mrb[0].mxu0
        %v776 = vadd.f32 0.0, %v775
        %777 = vmatprep.mubr.f32.mxu0 0.0
        %778 = vmatmul.mubr.f32.gmra.mrb[0].mxu0 %v582
        %v779 = vpop.f32.mrb[0].mxu0
        %v780 = vadd.f32 0.0, %v779
        %v781 = vpop.f32.mrb[0].mxu0
        %v782 = vadd.f32 0.0, %v781
        %783 = vmatprep.mubr.f32.mxu0 0.0
        %784 = vmatmul.mubr.f32.gmra.mrb[0].mxu0 %v583
        %v785 = vpop.f32.mrb[0].mxu0
        %v786 = vadd.f32 0.0, %v785
        %v787 = vpop.f32.mrb[0].mxu0
        %v788 = vadd.f32 0.0, %v787
        %789 = vmatprep.mubr.f32.mxu0 0.0
        %790 = vmatmul.mubr.f32.gmra.mrb[0].mxu0 %v584
        %v791 = vpop.f32.mrb[0].mxu0
        %v792 = vadd.f32 0.0, %v791
        %v793 = vpop.f32.mrb[0].mxu0
        %v794 = vadd.f32 0.0, %v793
        %795 = vmatprep.mubr.f32.mxu0 0.0
        %796 = vmatmul.mubr.f32.gmra.mrb[0].mxu0 %v585
        %v797 = vpop.f32.mrb[0].mxu0
        %v798 = vadd.f32 0.0, %v797
        %v799 = vpop.f32.mrb[0].mxu0
        %v800 = vadd.f32 0.0, %v799
        %801 = vmatprep.mubr.f32.mxu0 0.0
        %802 = vmatmul.mubr.f32.gmra.mrb[0].mxu0 %v586
        %v803 = vpop.f32.mrb[0].mxu0
        %v804 = vadd.f32 0.0, %v803
        %v805 = vpop.f32.mrb[0].mxu0
        %v806 = vadd.f32 0.0, %v805
        %807 = vmatprep.mubr.f32.mxu0 0.0
        %808 = vmatmul.mubr.f32.gmra.mrb[0].mxu0 %v587
        %v809 = vpop.f32.mrb[0].mxu0
        %v810 = vadd.f32 0.0, %v809
        %v811 = vpop.f32.mrb[0].mxu0
        %v812 = vadd.f32 0.0, %v811
        %813 = vmatprep.mubr.f32.mxu0 0.0
        %814 = vmatmul.mubr.f32.gmra.mrb[0].mxu0 %v588
        %v815 = vpop.f32.mrb[0].mxu0
        %v816 = vadd.f32 0.0, %v815
        %v817 = vpop.f32.mrb[0].mxu0
        %v818 = vadd.f32 0.0, %v817
        %819 = vmatprep.mubr.f32.mxu0 0.0
        %820 = vmatmul.mubr.f32.gmra.mrb[0].mxu0 %v589
        %v821 = vpop.f32.mrb[0].mxu0
        %v822 = vadd.f32 0.0, %v821
        %v823 = vpop.f32.mrb[0].mxu0
        %v824 = vadd.f32 0.0, %v823
        %825 = vmatprep.mubr.f32.mxu0 0.0
        %826 = vmatmul.mubr.f32.gmra.mrb[0].mxu0 %v590
        %v827 = vpop.f32.mrb[0].mxu0
        %v828 = vadd.f32 0.0, %v827
        %v829 = vpop.f32.mrb[0].mxu0
        %v830 = vadd.f32 0.0, %v829
        %831 = vmatprep.mubr.f32.mxu0 0.0
        %832 = vmatmul.mubr.f32.gmra.mrb[0].mxu0 %v591
        %v833 = vpop.f32.mrb[0].mxu0
        %v834 = vadd.f32 0.0, %v833
        %v835 = vpop.f32.mrb[0].mxu0
        %v836 = vadd.f32 0.0, %v835
        %837 = vmatprep.mubr.f32.mxu0 0.0
        %838 = vmatmul.mubr.f32.gmra.mrb[0].mxu0 %v592
        %v839 = vpop.f32.mrb[0].mxu0
        %v840 = vadd.f32 0.0, %v839
        %v841 = vpop.f32.mrb[0].mxu0
        %v842 = vadd.f32 0.0, %v841
        %843 = vmatprep.mubr.f32.mxu0 0.0
        %844 = vmatmul.mubr.f32.gmra.mrb[0].mxu0 %v593
        %v845 = vpop.f32.mrb[0].mxu0
        %v846 = vadd.f32 0.0, %v845
        %v847 = vpop.f32.mrb[0].mxu0
        %v848 = vadd.f32 0.0, %v847
        %849 = vmatprep.mubr.f32.mxu0 0.0
        %850 = vmatmul.mubr.f32.gmra.mrb[0].mxu0 %v594
        %v851 = vpop.f32.mrb[0].mxu0
        %v852 = vadd.f32 0.0, %v851
        %v853 = vpop.f32.mrb[0].mxu0
        %v854 = vadd.f32 0.0, %v853
        %855 = vmatprep.mubr.f32.mxu0 0.0
        %856 = vmatmul.mubr.f32.gmra.mrb[0].mxu0 %v595
        %v857 = vpop.f32.mrb[0].mxu0
        %v858 = vadd.f32 0.0, %v857
        %v859 = vpop.f32.mrb[0].mxu0
        %v860 = vadd.f32 0.0, %v859
        %861 = vmatprep.mubr.f32.mxu0 0.0
        %862 = vmatmul.mubr.f32.gmra.mrb[0].mxu0 %v596
        %v863 = vpop.f32.mrb[0].mxu0
        %v864 = vadd.f32 0.0, %v863
        %v865 = vpop.f32.mrb[0].mxu0
        %v866 = vadd.f32 0.0, %v865
        %867 = vmatprep.mubr.f32.mxu0 0.0
        %868 = vmatmul.mubr.f32.gmra.mrb[0].mxu0 %v597
        %v869 = vpop.f32.mrb[0].mxu0
        %v870 = vadd.f32 0.0, %v869
        %v871 = vpop.f32.mrb[0].mxu0
        %v872 = vadd.f32 0.0, %v871
        %873 = vmatprep.mubr.f32.mxu0 0.0
        %874 = vmatmul.mubr.f32.gmra.mrb[0].mxu0 %v598
        %v875 = vpop.f32.mrb[0].mxu0
        %v876 = vadd.f32 0.0, %v875
        %v877 = vpop.f32.mrb[0].mxu0
        %v878 = vadd.f32 0.0, %v877
        %879 = vmatprep.mubr.f32.mxu0 0.0
        %880 = vmatmul.mubr.f32.gmra.mrb[0].mxu0 %v599
        %v881 = vpop.f32.mrb[0].mxu0
        %v882 = vadd.f32 0.0, %v881
        %v883 = vpop.f32.mrb[0].mxu0
        %v884 = vadd.f32 0.0, %v883
        %885 = vmatprep.mubr.f32.mxu0 0.0
        %886 = vmatmul.mubr.f32.gmra.mrb[0].mxu0 %v600
        %v887 = vpop.f32.mrb[0].mxu0
        %v888 = vadd.f32 0.0, %v887
        %v889 = vpop.f32.mrb[0].mxu0
        %v890 = vadd.f32 0.0, %v889
        %891 = vmatprep.mubr.f32.mxu0 0.0
        %892 = vmatmul.mubr.f32.gmra.mrb[0].mxu0 %v601
        %v893 = vpop.f32.mrb[0].mxu0
        %v894 = vadd.f32 0.0, %v893
        %v895 = vpop.f32.mrb[0].mxu0
        %v896 = vadd.f32 0.0, %v895
        %897 = vmatprep.mubr.f32.mxu0 0.0
        %898 = vmatmul.mubr.f32.gmra.mrb[0].mxu0 %v602
        %v899 = vpop.f32.mrb[0].mxu0
        %v900 = vadd.f32 0.0, %v899
        %v901 = vpop.f32.mrb[0].mxu0
        %v902 = vadd.f32 0.0, %v901
        %903 = vmatprep.mubr.f32.mxu0 0.0
        %904 = vmatmul.mubr.f32.gmra.mrb[0].mxu0 %v603
        %v905 = vpop.f32.mrb[0].mxu0
        %v906 = vadd.f32 0.0, %v905
        %v907 = vpop.f32.mrb[0].mxu0
        %v908 = vadd.f32 0.0, %v907
        %909 = vmatprep.mubr.f32.mxu0 0.0
        %910 = vmatmul.mubr.f32.gmra.mrb[0].mxu0 %v604
        %v911 = vpop.f32.mrb[0].mxu0
        %v912 = vadd.f32 0.0, %v911
        %v913 = vpop.f32.mrb[0].mxu0
        %v914 = vadd.f32 0.0, %v913
        %915 = vmatprep.mubr.f32.mxu0 0.0
        %916 = vmatmul.mubr.f32.gmra.mrb[0].mxu0 %v605
        %v917 = vpop.f32.mrb[0].mxu0
        %v918 = vadd.f32 0.0, %v917
        %v919 = vpop.f32.mrb[0].mxu0
        %v920 = vadd.f32 0.0, %v919
        %921 = vmatprep.mubr.f32.mxu0 0.0
        %922 = vmatmul.mubr.f32.gmra.mrb[0].mxu0 %v606
        %v923 = vpop.f32.mrb[0].mxu0
        %v924 = vadd.f32 0.0, %v923
        %v925 = vpop.f32.mrb[0].mxu0
        %v926 = vadd.f32 0.0, %v925
        %927 = vmatprep.mubr.f32.mxu0 0.0
        %928 = vmatmul.mubr.f32.gmra.mrb[0].mxu0 %v607
        %v929 = vpop.f32.mrb[0].mxu0
        %v930 = vadd.f32 0.0, %v929
        %v931 = vpop.f32.mrb[0].mxu0
        %v932 = vadd.f32 0.0, %v931
        %933 = vmatprep.mubr.f32.mxu0 0.0
        %934 = vmatmul.mubr.f32.gmra.mrb[0].mxu0 %v608
        %v935 = vpop.f32.mrb[0].mxu0
        %v936 = vadd.f32 0.0, %v935
        %v937 = vpop.f32.mrb[0].mxu0
        %v938 = vadd.f32 0.0, %v937
        %939 = vmatprep.mubr.f32.mxu0 0.0
        %940 = vmatmul.mubr.f32.gmra.mrb[0].mxu0 %v609
        %v941 = vpop.f32.mrb[0].mxu0
        %v942 = vadd.f32 0.0, %v941
        %v943 = vpop.f32.mrb[0].mxu0
        %v944 = vadd.f32 0.0, %v943
        %945 = vmatprep.mubr.f32.mxu0 0.0
        %946 = vmatmul.mubr.f32.gmra.mrb[0].mxu0 %v610
        %v947 = vpop.f32.mrb[0].mxu0
        %v948 = vadd.f32 0.0, %v947
        %v949 = vpop.f32.mrb[0].mxu0
        %v950 = vadd.f32 0.0, %v949
        %951 = vmatprep.mubr.f32.mxu0 0.0
        %952 = vmatmul.mubr.f32.gmra.mrb[0].mxu0 %v611
        %v953 = vpop.f32.mrb[0].mxu0
        %v954 = vadd.f32 0.0, %v953
        %v955 = vpop.f32.mrb[0].mxu0
        %v956 = vadd.f32 0.0, %v955
        %957 = vmatprep.mubr.f32.mxu0 0.0
        %958 = vmatmul.mubr.f32.gmra.mrb[0].mxu0 %v612
        %v959 = vpop.f32.mrb[0].mxu0
        %v960 = vadd.f32 0.0, %v959
        %v961 = vpop.f32.mrb[0].mxu0
        %v962 = vadd.f32 0.0, %v961
        %963 = vmatprep.mubr.f32.mxu0 0.0
        %964 = vmatmul.mubr.f32.gmra.mrb[0].mxu0 %v613
        %v965 = vpop.f32.mrb[0].mxu0
        %v966 = vadd.f32 0.0, %v965
        %v967 = vpop.f32.mrb[0].mxu0
        %v968 = vadd.f32 0.0, %v967
        %969 = vmatprep.mubr.f32.mxu0 0.0
        %970 = vmatmul.mubr.f32.gmra.mrb[0].mxu0 %v614
        %v971 = vpop.f32.mrb[0].mxu0
        %v972 = vadd.f32 0.0, %v971
        %v973 = vpop.f32.mrb[0].mxu0
        %v974 = vadd.f32 0.0, %v973
        %975 = vmatprep.mubr.f32.mxu0 0.0
        %976 = vmatmul.mubr.f32.gmra.mrb[0].mxu0 %v615
        %v977 = vpop.f32.mrb[0].mxu0
        %v978 = vadd.f32 0.0, %v977
        %v979 = vpop.f32.mrb[0].mxu0
        %v980 = vadd.f32 0.0, %v979
        %981 = vmatprep.mubr.f32.mxu0 0.0
        %982 = vmatmul.mubr.f32.gmra.mrb[0].mxu0 %v616
        %v983 = vpop.f32.mrb[0].mxu0
        %v984 = vadd.f32 0.0, %v983
        %v985 = vpop.f32.mrb[0].mxu0
        %v986 = vadd.f32 0.0, %v985
        %987 = vmatprep.mubr.f32.mxu0 0.0
        %988 = vmatmul.mubr.f32.gmra.mrb[0].mxu0 %v617
        %v989 = vpop.f32.mrb[0].mxu0
        %v990 = vadd.f32 0.0, %v989
        %v991 = vpop.f32.mrb[0].mxu0
        %v992 = vadd.f32 0.0, %v991
        %993 = vmatprep.mubr.f32.mxu0 0.0
        %994 = vmatmul.mubr.f32.gmra.mrb[0].mxu0 %v618
        %v995 = vpop.f32.mrb[0].mxu0
        %v996 = vadd.f32 0.0, %v995
        %v997 = vpop.f32.mrb[0].mxu0
        %v998 = vadd.f32 0.0, %v997
        %999 = vmatprep.mubr.f32.mxu0 0.0
        %1000 = vmatmul.mubr.f32.gmra.mrb[0].mxu0 %v619
        %v1001 = vpop.f32.mrb[0].mxu0
        %v1002 = vadd.f32 0.0, %v1001
        %v1003 = vpop.f32.mrb[0].mxu0
        %v1004 = vadd.f32 0.0, %v1003
        %1005 = vmatprep.mubr.f32.mxu0 0.0
        %1006 = vmatmul.mubr.f32.gmra.mrb[0].mxu0 %v620
        %v1007 = vpop.f32.mrb[0].mxu0
        %v1008 = vadd.f32 0.0, %v1007
        %v1009 = vpop.f32.mrb[0].mxu0
        %v1010 = vadd.f32 0.0, %v1009
        %1011 = vmatprep.mubr.f32.mxu0 0.0
        %1012 = vmatmul.mubr.f32.gmra.mrb[0].mxu0 %v621
        %v1013 = vpop.f32.mrb[0].mxu0
        %v1014 = vadd.f32 0.0, %v1013
        %v1015 = vpop.f32.mrb[0].mxu0
        %v1016 = vadd.f32 0.0, %v1015
        %1017 = vmatprep.mubr.f32.mxu0 0.0
        %1018 = vmatmul.mubr.f32.gmra.mrb[0].mxu0 %v622
        %v1019 = vpop.f32.mrb[0].mxu0
        %v1020 = vadd.f32 0.0, %v1019
        %v1021 = vpop.f32.mrb[0].mxu0
        %v1022 = vadd.f32 0.0, %v1021
        %1023 = vmatprep.mubr.f32.mxu0 0.0
        %1024 = vmatmul.mubr.f32.gmra.mrb[0].mxu0 %v623
        %v1025 = vpop.f32.mrb[0].mxu0
        %v1026 = vadd.f32 0.0, %v1025
        %v1027 = vpop.f32.mrb[0].mxu0
        %v1028 = vadd.f32 0.0, %v1027
        %1029 = vmatprep.mubr.f32.mxu0 0.0
        %1030 = vmatmul.mubr.f32.gmra.mrb[0].mxu0 %v624
        %v1031 = vpop.f32.mrb[0].mxu0
        %v1032 = vadd.f32 0.0, %v1031
        %v1033 = vpop.f32.mrb[0].mxu0
        %v1034 = vadd.f32 0.0, %v1033
        %1035 = vmatprep.mubr.f32.mxu0 0.0
        %1036 = vmatmul.mubr.f32.gmra.mrb[0].mxu0 %v625
        %v1037 = vpop.f32.mrb[0].mxu0
        %v1038 = vadd.f32 0.0, %v1037
        %v1039 = vpop.f32.mrb[0].mxu0
        %v1040 = vadd.f32 0.0, %v1039
        %1041 = vmatprep.mubr.f32.mxu0 0.0
        %1042 = vmatmul.mubr.f32.gmra.mrb[0].mxu0 %v626
        %v1043 = vpop.f32.mrb[0].mxu0
        %v1044 = vadd.f32 0.0, %v1043
        %v1045 = vpop.f32.mrb[0].mxu0
        %v1046 = vadd.f32 0.0, %v1045
        %1047 = vmatprep.mubr.f32.mxu0 0.0
        %1048 = vmatmul.mubr.f32.gmra.mrb[0].mxu0 %v627
        %v1049 = vpop.f32.mrb[0].mxu0
        %v1050 = vadd.f32 0.0, %v1049
        %v1051 = vpop.f32.mrb[0].mxu0
        %v1052 = vadd.f32 0.0, %v1051
        %1053 = vmatprep.mubr.f32.mxu0 0.0
        %1054 = vmatmul.mubr.f32.gmra.mrb[0].mxu0 %v628
        %v1055 = vpop.f32.mrb[0].mxu0
        %v1056 = vadd.f32 0.0, %v1055
        %v1057 = vpop.f32.mrb[0].mxu0
        %v1058 = vadd.f32 0.0, %v1057
        %1059 = vmatprep.mubr.f32.mxu0 0.0
        %1060 = vmatmul.mubr.f32.gmra.mrb[0].mxu0 %v629
        %v1061 = vpop.f32.mrb[0].mxu0
        %v1062 = vadd.f32 0.0, %v1061
        %v1063 = vpop.f32.mrb[0].mxu0
        %v1064 = vadd.f32 0.0, %v1063
        %1065 = vmatprep.mubr.f32.mxu0 0.0
        %1066 = vmatmul.mubr.f32.gmra.mrb[0].mxu0 %v630
        %v1067 = vpop.f32.mrb[0].mxu0
        %v1068 = vadd.f32 0.0, %v1067
        %v1069 = vpop.f32.mrb[0].mxu0
        %v1070 = vadd.f32 0.0, %v1069
        %1071 = vmatprep.mubr.f32.mxu0 0.0
        %1072 = vmatmul.mubr.f32.gmra.mrb[0].mxu0 %v631
        %v1073 = vpop.f32.mrb[0].mxu0
        %v1074 = vadd.f32 0.0, %v1073
        %v1075 = vpop.f32.mrb[0].mxu0
        %v1076 = vadd.f32 0.0, %v1075
        %1077 = vmatprep.mubr.f32.mxu0 0.0
        %1078 = vmatmul.mubr.f32.gmra.mrb[0].mxu0 %v632
        %v1079 = vpop.f32.mrb[0].mxu0
        %v1080 = vadd.f32 0.0, %v1079
        %v1081 = vpop.f32.mrb[0].mxu0
        %v1082 = vadd.f32 0.0, %v1081
        %1083 = vmatprep.mubr.f32.mxu0 0.0
        %1084 = vmatmul.mubr.f32.gmra.mrb[0].mxu0 %v633
        %v1085 = vpop.f32.mrb[0].mxu0
        %v1086 = vadd.f32 0.0, %v1085
        %v1087 = vpop.f32.mrb[0].mxu0
        %v1088 = vadd.f32 0.0, %v1087
        %1089 = vmatprep.mubr.f32.mxu0 0.0
        %1090 = vmatmul.mubr.f32.gmra.mrb[0].mxu0 %v634
        %v1091 = vpop.f32.mrb[0].mxu0
        %v1092 = vadd.f32 0.0, %v1091
        %v1093 = vpop.f32.mrb[0].mxu0
        %v1094 = vadd.f32 0.0, %v1093
        %1095 = vmatprep.mubr.f32.mxu0 0.0
        %1096 = vmatmul.mubr.f32.gmra.mrb[0].mxu0 %v635
        %v1097 = vpop.f32.mrb[0].mxu0
        %v1098 = vadd.f32 0.0, %v1097
        %v1099 = vpop.f32.mrb[0].mxu0
        %v1100 = vadd.f32 0.0, %v1099
        %1101 = vmatprep.mubr.f32.mxu0 0.0
        %1102 = vmatmul.mubr.f32.gmra.mrb[0].mxu0 %v636
        %v1103 = vpop.f32.mrb[0].mxu0
        %v1104 = vadd.f32 0.0, %v1103
        %v1105 = vpop.f32.mrb[0].mxu0
        %v1106 = vadd.f32 0.0, %v1105
        %1107 = vmatprep.mubr.f32.mxu0 0.0
        %1108 = vmatmul.mubr.f32.gmra.mrb[0].mxu0 %v637
        %v1109 = vpop.f32.mrb[0].mxu0
        %v1110 = vadd.f32 0.0, %v1109
        %v1111 = vpop.f32.mrb[0].mxu0
        %v1112 = vadd.f32 0.0, %v1111
        %1113 = vmatprep.mubr.f32.mxu0 0.0
        %1114 = vmatmul.mubr.f32.gmra.mrb[0].mxu0 %v638
        %v1115 = vpop.f32.mrb[0].mxu0
        %v1116 = vadd.f32 0.0, %v1115
        %v1117 = vpop.f32.mrb[0].mxu0
        %v1118 = vadd.f32 0.0, %v1117
        %1119 = vdwg.mxu0
        %v1120 = vld [vmem:[%s429] sm:$0x3]
        %v1122 = vlaneseq
        %v1123 = vshrl.u32 %v1122, 7
        %v1124 = vsub.s32 0, %v1123
        %v1125 = vrot.slane %v1120, %v1124
        %v1126 = vlaneseq
        %v1127 = vshrl.u32 %v1126, 7
        %v1128 = vsub.s32 1, %v1127
        %v1129 = vrot.slane %v1120, %v1128
        %v1132 = vsub.f32 %v738, %v1125
        %v1133 = vsub.f32 %v740, %v1129
        %v1134 = vsub.f32 %v744, %v1125
        %v1135 = vsub.f32 %v746, %v1129
        %v1136 = vsub.f32 %v750, %v1125
        %v1137 = vsub.f32 %v752, %v1129
        %v1138 = vsub.f32 %v756, %v1125
        %v1139 = vsub.f32 %v758, %v1129
        %v1140 = vsub.f32 %v762, %v1125
        %v1141 = vsub.f32 %v764, %v1129
        %v1142 = vsub.f32 %v768, %v1125
        %v1143 = vsub.f32 %v770, %v1129
        %v1144 = vsub.f32 %v774, %v1125
        %v1145 = vsub.f32 %v776, %v1129
        %v1146 = vsub.f32 %v780, %v1125
        %v1147 = vsub.f32 %v782, %v1129
        %v1148 = vsub.f32 %v786, %v1125
        %v1149 = vsub.f32 %v788, %v1129
        %v1150 = vsub.f32 %v792, %v1125
        %v1151 = vsub.f32 %v794, %v1129
        %v1152 = vsub.f32 %v798, %v1125
        %v1153 = vsub.f32 %v800, %v1129
        %v1154 = vsub.f32 %v804, %v1125
        %v1155 = vsub.f32 %v806, %v1129
        %v1156 = vsub.f32 %v810, %v1125
        %v1157 = vsub.f32 %v812, %v1129
        %v1158 = vsub.f32 %v816, %v1125
        %v1159 = vsub.f32 %v818, %v1129
        %v1160 = vsub.f32 %v822, %v1125
        %v1161 = vsub.f32 %v824, %v1129
        %v1162 = vsub.f32 %v828, %v1125
        %v1163 = vsub.f32 %v830, %v1129
        %v1164 = vsub.f32 %v834, %v1125
        %v1165 = vsub.f32 %v836, %v1129
        %v1166 = vsub.f32 %v840, %v1125
        %v1167 = vsub.f32 %v842, %v1129
        %v1168 = vsub.f32 %v846, %v1125
        %v1169 = vsub.f32 %v848, %v1129
        %v1170 = vsub.f32 %v852, %v1125
        %v1171 = vsub.f32 %v854, %v1129
        %v1172 = vsub.f32 %v858, %v1125
        %v1173 = vsub.f32 %v860, %v1129
        %v1174 = vsub.f32 %v864, %v1125
        %v1175 = vsub.f32 %v866, %v1129
        %v1176 = vsub.f32 %v870, %v1125
        %v1177 = vsub.f32 %v872, %v1129
        %v1178 = vsub.f32 %v876, %v1125
        %v1179 = vsub.f32 %v878, %v1129
        %v1180 = vsub.f32 %v882, %v1125
        %v1181 = vsub.f32 %v884, %v1129
        %v1182 = vsub.f32 %v888, %v1125
        %v1183 = vsub.f32 %v890, %v1129
        %v1184 = vsub.f32 %v894, %v1125
        %v1185 = vsub.f32 %v896, %v1129
        %v1186 = vsub.f32 %v900, %v1125
        %v1187 = vsub.f32 %v902, %v1129
        %v1188 = vsub.f32 %v906, %v1125
        %v1189 = vsub.f32 %v908, %v1129
        %v1190 = vsub.f32 %v912, %v1125
        %v1191 = vsub.f32 %v914, %v1129
        %v1192 = vsub.f32 %v918, %v1125
        %v1193 = vsub.f32 %v920, %v1129
        %v1194 = vsub.f32 %v924, %v1125
        %v1195 = vsub.f32 %v926, %v1129
        %v1196 = vsub.f32 %v930, %v1125
        %v1197 = vsub.f32 %v932, %v1129
        %v1198 = vsub.f32 %v936, %v1125
        %v1199 = vsub.f32 %v938, %v1129
        %v1200 = vsub.f32 %v942, %v1125
        %v1201 = vsub.f32 %v944, %v1129
        %v1202 = vsub.f32 %v948, %v1125
        %v1203 = vsub.f32 %v950, %v1129
        %v1204 = vsub.f32 %v954, %v1125
        %v1205 = vsub.f32 %v956, %v1129
        %v1206 = vsub.f32 %v960, %v1125
        %v1207 = vsub.f32 %v962, %v1129
        %v1208 = vsub.f32 %v966, %v1125
        %v1209 = vsub.f32 %v968, %v1129
        %v1210 = vsub.f32 %v972, %v1125
        %v1211 = vsub.f32 %v974, %v1129
        %v1212 = vsub.f32 %v978, %v1125
        %v1213 = vsub.f32 %v980, %v1129
        %v1214 = vsub.f32 %v984, %v1125
        %v1215 = vsub.f32 %v986, %v1129
        %v1216 = vsub.f32 %v990, %v1125
        %v1217 = vsub.f32 %v992, %v1129
        %v1218 = vsub.f32 %v996, %v1125
        %v1219 = vsub.f32 %v998, %v1129
        %v1220 = vsub.f32 %v1002, %v1125
        %v1221 = vsub.f32 %v1004, %v1129
        %v1222 = vsub.f32 %v1008, %v1125
        %v1223 = vsub.f32 %v1010, %v1129
        %v1224 = vsub.f32 %v1014, %v1125
        %v1225 = vsub.f32 %v1016, %v1129
        %v1226 = vsub.f32 %v1020, %v1125
        %v1227 = vsub.f32 %v1022, %v1129
        %v1228 = vsub.f32 %v1026, %v1125
        %v1229 = vsub.f32 %v1028, %v1129
        %v1230 = vsub.f32 %v1032, %v1125
        %v1231 = vsub.f32 %v1034, %v1129
        %v1232 = vsub.f32 %v1038, %v1125
        %v1233 = vsub.f32 %v1040, %v1129
        %v1234 = vsub.f32 %v1044, %v1125
        %v1235 = vsub.f32 %v1046, %v1129
        %v1236 = vsub.f32 %v1050, %v1125
        %v1237 = vsub.f32 %v1052, %v1129
        %v1238 = vsub.f32 %v1056, %v1125
        %v1239 = vsub.f32 %v1058, %v1129
        %v1240 = vsub.f32 %v1062, %v1125
        %v1241 = vsub.f32 %v1064, %v1129
        %v1242 = vsub.f32 %v1068, %v1125
        %v1243 = vsub.f32 %v1070, %v1129
        %v1244 = vsub.f32 %v1074, %v1125
        %v1245 = vsub.f32 %v1076, %v1129
        %v1246 = vsub.f32 %v1080, %v1125
        %v1247 = vsub.f32 %v1082, %v1129
        %v1248 = vsub.f32 %v1086, %v1125
        %v1249 = vsub.f32 %v1088, %v1129
        %v1250 = vsub.f32 %v1092, %v1125
        %v1251 = vsub.f32 %v1094, %v1129
        %v1252 = vsub.f32 %v1098, %v1125
        %v1253 = vsub.f32 %v1100, %v1129
        %v1254 = vsub.f32 %v1104, %v1125
        %v1255 = vsub.f32 %v1106, %v1129
        %v1256 = vsub.f32 %v1110, %v1125
        %v1257 = vsub.f32 %v1112, %v1129
        %v1258 = vsub.f32 %v1116, %v1125
        %v1259 = vsub.f32 %v1118, %v1129
        %v1260 = vld [vmem:[%s435] sm:$0xff]
        %v1261 = vld [vmem:[%s435 + $0x8] sm:$0xff]
        %v1262 = vld [vmem:[%s435 + $0x10] sm:$0xff]
        %v1263 = vld [vmem:[%s435 + $0x18] sm:$0xff]
        %v1264 = vld [vmem:[%s435 + $0x20] sm:$0xff]
        %v1265 = vld [vmem:[%s435 + $0x28] sm:$0xff]
        %v1266 = vld [vmem:[%s435 + $0x30] sm:$0xff]
        %v1267 = vld [vmem:[%s435 + $0x38] sm:$0xff]
        %v1268 = vld [vmem:[%s435 + $0x40] sm:$0xff]
        %v1269 = vld [vmem:[%s435 + $0x48] sm:$0xff]
        %v1270 = vld [vmem:[%s435 + $0x50] sm:$0xff]
        %v1271 = vld [vmem:[%s435 + $0x58] sm:$0xff]
        %v1272 = vld [vmem:[%s435 + $0x60] sm:$0xff]
        %v1273 = vld [vmem:[%s435 + $0x68] sm:$0xff]
        %v1274 = vld [vmem:[%s435 + $0x70] sm:$0xff]
        %v1275 = vld [vmem:[%s435 + $0x78] sm:$0xff]
        %v1276 = vld [vmem:[%s435 + $0x80] sm:$0xff]
        %v1277 = vld [vmem:[%s435 + $0x88] sm:$0xff]
        %v1278 = vld [vmem:[%s435 + $0x90] sm:$0xff]
        %v1279 = vld [vmem:[%s435 + $0x98] sm:$0xff]
        %v1280 = vld [vmem:[%s435 + $0xa0] sm:$0xff]
        %v1281 = vld [vmem:[%s435 + $0xa8] sm:$0xff]
        %v1282 = vld [vmem:[%s435 + $0xb0] sm:$0xff]
        %v1283 = vld [vmem:[%s435 + $0xb8] sm:$0xff]
        %v1284 = vld [vmem:[%s435 + $0xc0] sm:$0xff]
        %v1285 = vld [vmem:[%s435 + $0xc8] sm:$0xff]
        %v1286 = vld [vmem:[%s435 + $0xd0] sm:$0xff]
        %v1287 = vld [vmem:[%s435 + $0xd8] sm:$0xff]
        %v1288 = vld [vmem:[%s435 + $0xe0] sm:$0xff]
        %v1289 = vld [vmem:[%s435 + $0xe8] sm:$0xff]
        %v1290 = vld [vmem:[%s435 + $0xf0] sm:$0xff]
        %v1291 = vld [vmem:[%s435 + $0xf8] sm:$0xff]
        %v1292 = vld [vmem:[%s435 + $0x100] sm:$0xff]
        %v1293 = vld [vmem:[%s435 + $0x108] sm:$0xff]
        %v1294 = vld [vmem:[%s435 + $0x110] sm:$0xff]
        %v1295 = vld [vmem:[%s435 + $0x118] sm:$0xff]
        %v1296 = vld [vmem:[%s435 + $0x120] sm:$0xff]
        %v1297 = vld [vmem:[%s435 + $0x128] sm:$0xff]
        %v1298 = vld [vmem:[%s435 + $0x130] sm:$0xff]
        %v1299 = vld [vmem:[%s435 + $0x138] sm:$0xff]
        %v1300 = vld [vmem:[%s435 + $0x140] sm:$0xff]
        %v1301 = vld [vmem:[%s435 + $0x148] sm:$0xff]
        %v1302 = vld [vmem:[%s435 + $0x150] sm:$0xff]
        %v1303 = vld [vmem:[%s435 + $0x158] sm:$0xff]
        %v1304 = vld [vmem:[%s435 + $0x160] sm:$0xff]
        %v1305 = vld [vmem:[%s435 + $0x168] sm:$0xff]
        %v1306 = vld [vmem:[%s435 + $0x170] sm:$0xff]
        %v1307 = vld [vmem:[%s435 + $0x178] sm:$0xff]
        %v1308 = vld [vmem:[%s435 + $0x180] sm:$0xff]
        %v1309 = vld [vmem:[%s435 + $0x188] sm:$0xff]
        %v1310 = vld [vmem:[%s435 + $0x190] sm:$0xff]
        %v1311 = vld [vmem:[%s435 + $0x198] sm:$0xff]
        %v1312 = vld [vmem:[%s435 + $0x1a0] sm:$0xff]
        %v1313 = vld [vmem:[%s435 + $0x1a8] sm:$0xff]
        %v1314 = vld [vmem:[%s435 + $0x1b0] sm:$0xff]
        %v1315 = vld [vmem:[%s435 + $0x1b8] sm:$0xff]
        %v1316 = vld [vmem:[%s435 + $0x1c0] sm:$0xff]
        %v1317 = vld [vmem:[%s435 + $0x1c8] sm:$0xff]
        %v1318 = vld [vmem:[%s435 + $0x1d0] sm:$0xff]
        %v1319 = vld [vmem:[%s435 + $0x1d8] sm:$0xff]
        %v1320 = vld [vmem:[%s435 + $0x1e0] sm:$0xff]
        %v1321 = vld [vmem:[%s435 + $0x1e8] sm:$0xff]
        %v1322 = vld [vmem:[%s435 + $0x1f0] sm:$0xff]
        %v1323 = vld [vmem:[%s435 + $0x1f8] sm:$0xff]
        %v1324 = vld [vmem:[%s440] sm:$0x3]
        %1325 = vset.pattern.permute.xlu0 0
        %1326 = vperm.xlu0 %1325, %v1260
        %v1327 = vpop.permute.xlu0 %1326
        %1328 = vset.pattern.permute.xlu0 0
        %1329 = vperm.xlu0 %1328, %v1261
        %v1330 = vpop.permute.xlu0 %1329
        %1331 = vset.pattern.permute.xlu0 0
        %1332 = vperm.xlu0 %1331, %v1262
        %v1333 = vpop.permute.xlu0 %1332
        %1334 = vset.pattern.permute.xlu0 0
        %1335 = vperm.xlu0 %1334, %v1263
        %v1336 = vpop.permute.xlu0 %1335
        %1337 = vset.pattern.permute.xlu0 0
        %1338 = vperm.xlu0 %1337, %v1264
        %v1339 = vpop.permute.xlu0 %1338
        %1340 = vset.pattern.permute.xlu0 0
        %1341 = vperm.xlu0 %1340, %v1265
        %v1342 = vpop.permute.xlu0 %1341
        %1343 = vset.pattern.permute.xlu0 0
        %1344 = vperm.xlu0 %1343, %v1266
        %v1345 = vpop.permute.xlu0 %1344
        %1346 = vset.pattern.permute.xlu0 0
        %1347 = vperm.xlu0 %1346, %v1267
        %v1348 = vpop.permute.xlu0 %1347
        %1349 = vset.pattern.permute.xlu0 0
        %1350 = vperm.xlu0 %1349, %v1268
        %v1351 = vpop.permute.xlu0 %1350
        %1352 = vset.pattern.permute.xlu0 0
        %1353 = vperm.xlu0 %1352, %v1269
        %v1354 = vpop.permute.xlu0 %1353
        %1355 = vset.pattern.permute.xlu0 0
        %1356 = vperm.xlu0 %1355, %v1270
        %v1357 = vpop.permute.xlu0 %1356
        %1358 = vset.pattern.permute.xlu0 0
        %1359 = vperm.xlu0 %1358, %v1271
        %v1360 = vpop.permute.xlu0 %1359
        %1361 = vset.pattern.permute.xlu0 0
        %1362 = vperm.xlu0 %1361, %v1272
        %v1363 = vpop.permute.xlu0 %1362
        %1364 = vset.pattern.permute.xlu0 0
        %1365 = vperm.xlu0 %1364, %v1273
        %v1366 = vpop.permute.xlu0 %1365
        %1367 = vset.pattern.permute.xlu0 0
        %1368 = vperm.xlu0 %1367, %v1274
        %v1369 = vpop.permute.xlu0 %1368
        %1370 = vset.pattern.permute.xlu0 0
        %1371 = vperm.xlu0 %1370, %v1275
        %v1372 = vpop.permute.xlu0 %1371
        %1373 = vset.pattern.permute.xlu0 0
        %1374 = vperm.xlu0 %1373, %v1276
        %v1375 = vpop.permute.xlu0 %1374
        %1376 = vset.pattern.permute.xlu0 0
        %1377 = vperm.xlu0 %1376, %v1277
        %v1378 = vpop.permute.xlu0 %1377
        %1379 = vset.pattern.permute.xlu0 0
        %1380 = vperm.xlu0 %1379, %v1278
        %v1381 = vpop.permute.xlu0 %1380
        %1382 = vset.pattern.permute.xlu0 0
        %1383 = vperm.xlu0 %1382, %v1279
        %v1384 = vpop.permute.xlu0 %1383
        %1385 = vset.pattern.permute.xlu0 0
        %1386 = vperm.xlu0 %1385, %v1280
        %v1387 = vpop.permute.xlu0 %1386
        %1388 = vset.pattern.permute.xlu0 0
        %1389 = vperm.xlu0 %1388, %v1281
        %v1390 = vpop.permute.xlu0 %1389
        %1391 = vset.pattern.permute.xlu0 0
        %1392 = vperm.xlu0 %1391, %v1282
        %v1393 = vpop.permute.xlu0 %1392
        %1394 = vset.pattern.permute.xlu0 0
        %1395 = vperm.xlu0 %1394, %v1283
        %v1396 = vpop.permute.xlu0 %1395
        %1397 = vset.pattern.permute.xlu0 0
        %1398 = vperm.xlu0 %1397, %v1284
        %v1399 = vpop.permute.xlu0 %1398
        %1400 = vset.pattern.permute.xlu0 0
        %1401 = vperm.xlu0 %1400, %v1285
        %v1402 = vpop.permute.xlu0 %1401
        %1403 = vset.pattern.permute.xlu0 0
        %1404 = vperm.xlu0 %1403, %v1286
        %v1405 = vpop.permute.xlu0 %1404
        %1406 = vset.pattern.permute.xlu0 0
        %1407 = vperm.xlu0 %1406, %v1287
        %v1408 = vpop.permute.xlu0 %1407
        %1409 = vset.pattern.permute.xlu0 0
        %1410 = vperm.xlu0 %1409, %v1288
        %v1411 = vpop.permute.xlu0 %1410
        %1412 = vset.pattern.permute.xlu0 0
        %1413 = vperm.xlu0 %1412, %v1289
        %v1414 = vpop.permute.xlu0 %1413
        %1415 = vset.pattern.permute.xlu0 0
        %1416 = vperm.xlu0 %1415, %v1290
        %v1417 = vpop.permute.xlu0 %1416
        %1418 = vset.pattern.permute.xlu0 0
        %1419 = vperm.xlu0 %1418, %v1291
        %v1420 = vpop.permute.xlu0 %1419
        %1421 = vset.pattern.permute.xlu0 0
        %1422 = vperm.xlu0 %1421, %v1292
        %v1423 = vpop.permute.xlu0 %1422
        %1424 = vset.pattern.permute.xlu0 0
        %1425 = vperm.xlu0 %1424, %v1293
        %v1426 = vpop.permute.xlu0 %1425
        %1427 = vset.pattern.permute.xlu0 0
        %1428 = vperm.xlu0 %1427, %v1294
        %v1429 = vpop.permute.xlu0 %1428
        %1430 = vset.pattern.permute.xlu0 0
        %1431 = vperm.xlu0 %1430, %v1295
        %v1432 = vpop.permute.xlu0 %1431
        %1433 = vset.pattern.permute.xlu0 0
        %1434 = vperm.xlu0 %1433, %v1296
        %v1435 = vpop.permute.xlu0 %1434
        %1436 = vset.pattern.permute.xlu0 0
        %1437 = vperm.xlu0 %1436, %v1297
        %v1438 = vpop.permute.xlu0 %1437
        %1439 = vset.pattern.permute.xlu0 0
        %1440 = vperm.xlu0 %1439, %v1298
        %v1441 = vpop.permute.xlu0 %1440
        %1442 = vset.pattern.permute.xlu0 0
        %1443 = vperm.xlu0 %1442, %v1299
        %v1444 = vpop.permute.xlu0 %1443
        %1445 = vset.pattern.permute.xlu0 0
        %1446 = vperm.xlu0 %1445, %v1300
        %v1447 = vpop.permute.xlu0 %1446
        %1448 = vset.pattern.permute.xlu0 0
        %1449 = vperm.xlu0 %1448, %v1301
        %v1450 = vpop.permute.xlu0 %1449
        %1451 = vset.pattern.permute.xlu0 0
        %1452 = vperm.xlu0 %1451, %v1302
        %v1453 = vpop.permute.xlu0 %1452
        %1454 = vset.pattern.permute.xlu0 0
        %1455 = vperm.xlu0 %1454, %v1303
        %v1456 = vpop.permute.xlu0 %1455
        %1457 = vset.pattern.permute.xlu0 0
        %1458 = vperm.xlu0 %1457, %v1304
        %v1459 = vpop.permute.xlu0 %1458
        %1460 = vset.pattern.permute.xlu0 0
        %1461 = vperm.xlu0 %1460, %v1305
        %v1462 = vpop.permute.xlu0 %1461
        %1463 = vset.pattern.permute.xlu0 0
        %1464 = vperm.xlu0 %1463, %v1306
        %v1465 = vpop.permute.xlu0 %1464
        %1466 = vset.pattern.permute.xlu0 0
        %1467 = vperm.xlu0 %1466, %v1307
        %v1468 = vpop.permute.xlu0 %1467
        %1469 = vset.pattern.permute.xlu0 0
        %1470 = vperm.xlu0 %1469, %v1308
        %v1471 = vpop.permute.xlu0 %1470
        %1472 = vset.pattern.permute.xlu0 0
        %1473 = vperm.xlu0 %1472, %v1309
        %v1474 = vpop.permute.xlu0 %1473
        %1475 = vset.pattern.permute.xlu0 0
        %1476 = vperm.xlu0 %1475, %v1310
        %v1477 = vpop.permute.xlu0 %1476
        %1478 = vset.pattern.permute.xlu0 0
        %1479 = vperm.xlu0 %1478, %v1311
        %v1480 = vpop.permute.xlu0 %1479
        %1481 = vset.pattern.permute.xlu0 0
        %1482 = vperm.xlu0 %1481, %v1312
        %v1483 = vpop.permute.xlu0 %1482
        %1484 = vset.pattern.permute.xlu0 0
        %1485 = vperm.xlu0 %1484, %v1313
        %v1486 = vpop.permute.xlu0 %1485
        %1487 = vset.pattern.permute.xlu0 0
        %1488 = vperm.xlu0 %1487, %v1314
        %v1489 = vpop.permute.xlu0 %1488
        %1490 = vset.pattern.permute.xlu0 0
        %1491 = vperm.xlu0 %1490, %v1315
        %v1492 = vpop.permute.xlu0 %1491
        %1493 = vset.pattern.permute.xlu0 0
        %1494 = vperm.xlu0 %1493, %v1316
        %v1495 = vpop.permute.xlu0 %1494
        %1496 = vset.pattern.permute.xlu0 0
        %1497 = vperm.xlu0 %1496, %v1317
        %v1498 = vpop.permute.xlu0 %1497
        %1499 = vset.pattern.permute.xlu0 0
        %1500 = vperm.xlu0 %1499, %v1318
        %v1501 = vpop.permute.xlu0 %1500
        %1502 = vset.pattern.permute.xlu0 0
        %1503 = vperm.xlu0 %1502, %v1319
        %v1504 = vpop.permute.xlu0 %1503
        %1505 = vset.pattern.permute.xlu0 0
        %1506 = vperm.xlu0 %1505, %v1320
        %v1507 = vpop.permute.xlu0 %1506
        %1508 = vset.pattern.permute.xlu0 0
        %1509 = vperm.xlu0 %1508, %v1321
        %v1510 = vpop.permute.xlu0 %1509
        %1511 = vset.pattern.permute.xlu0 0
        %1512 = vperm.xlu0 %1511, %v1322
        %v1513 = vpop.permute.xlu0 %1512
        %1514 = vset.pattern.permute.xlu0 0
        %1515 = vperm.xlu0 %1514, %v1323
        %v1516 = vpop.permute.xlu0 %1515
        %v1517 = vlaneseq
        %v1518 = vshrl.u32 %v1517, 7
        %v1519 = vsub.s32 0, %v1518
        %v1520 = vrot.slane %v1324, %v1519
        %v1521 = vlaneseq
        %v1522 = vshrl.u32 %v1521, 7
        %v1523 = vsub.s32 1, %v1522
        %v1524 = vrot.slane %v1324, %v1523
        %vm1525 = vcmp.eq.s32.totalorder %v1327, %v1520
        %vm1526 = vcmp.eq.s32.totalorder %v1327, %v1524
        %vm1527 = vcmp.eq.s32.totalorder %v1330, %v1520
        %vm1528 = vcmp.eq.s32.totalorder %v1330, %v1524
        %vm1529 = vcmp.eq.s32.totalorder %v1333, %v1520
        %vm1530 = vcmp.eq.s32.totalorder %v1333, %v1524
        %vm1531 = vcmp.eq.s32.totalorder %v1336, %v1520
        %vm1532 = vcmp.eq.s32.totalorder %v1336, %v1524
        %vm1533 = vcmp.eq.s32.totalorder %v1339, %v1520
        %vm1534 = vcmp.eq.s32.totalorder %v1339, %v1524
        %vm1535 = vcmp.eq.s32.totalorder %v1342, %v1520
        %vm1536 = vcmp.eq.s32.totalorder %v1342, %v1524
        %vm1537 = vcmp.eq.s32.totalorder %v1345, %v1520
        %vm1538 = vcmp.eq.s32.totalorder %v1345, %v1524
        %vm1539 = vcmp.eq.s32.totalorder %v1348, %v1520
        %vm1540 = vcmp.eq.s32.totalorder %v1348, %v1524
        %vm1541 = vcmp.eq.s32.totalorder %v1351, %v1520
        %vm1542 = vcmp.eq.s32.totalorder %v1351, %v1524
        %vm1543 = vcmp.eq.s32.totalorder %v1354, %v1520
        %vm1544 = vcmp.eq.s32.totalorder %v1354, %v1524
        %vm1545 = vcmp.eq.s32.totalorder %v1357, %v1520
        %vm1546 = vcmp.eq.s32.totalorder %v1357, %v1524
        %vm1547 = vcmp.eq.s32.totalorder %v1360, %v1520
        %vm1548 = vcmp.eq.s32.totalorder %v1360, %v1524
        %vm1549 = vcmp.eq.s32.totalorder %v1363, %v1520
        %vm1550 = vcmp.eq.s32.totalorder %v1363, %v1524
        %vm1551 = vcmp.eq.s32.totalorder %v1366, %v1520
        %vm1552 = vcmp.eq.s32.totalorder %v1366, %v1524
        %vm1553 = vcmp.eq.s32.totalorder %v1369, %v1520
        %vm1554 = vcmp.eq.s32.totalorder %v1369, %v1524
        %vm1555 = vcmp.eq.s32.totalorder %v1372, %v1520
        %vm1556 = vcmp.eq.s32.totalorder %v1372, %v1524
        %vm1557 = vcmp.eq.s32.totalorder %v1375, %v1520
        %vm1558 = vcmp.eq.s32.totalorder %v1375, %v1524
        %vm1559 = vcmp.eq.s32.totalorder %v1378, %v1520
        %vm1560 = vcmp.eq.s32.totalorder %v1378, %v1524
        %vm1561 = vcmp.eq.s32.totalorder %v1381, %v1520
        %vm1562 = vcmp.eq.s32.totalorder %v1381, %v1524
        %vm1563 = vcmp.eq.s32.totalorder %v1384, %v1520
        %vm1564 = vcmp.eq.s32.totalorder %v1384, %v1524
        %vm1565 = vcmp.eq.s32.totalorder %v1387, %v1520
        %vm1566 = vcmp.eq.s32.totalorder %v1387, %v1524
        %vm1567 = vcmp.eq.s32.totalorder %v1390, %v1520
        %vm1568 = vcmp.eq.s32.totalorder %v1390, %v1524
        %vm1569 = vcmp.eq.s32.totalorder %v1393, %v1520
        %vm1570 = vcmp.eq.s32.totalorder %v1393, %v1524
        %vm1571 = vcmp.eq.s32.totalorder %v1396, %v1520
        %vm1572 = vcmp.eq.s32.totalorder %v1396, %v1524
        %vm1573 = vcmp.eq.s32.totalorder %v1399, %v1520
        %vm1574 = vcmp.eq.s32.totalorder %v1399, %v1524
        %vm1575 = vcmp.eq.s32.totalorder %v1402, %v1520
        %vm1576 = vcmp.eq.s32.totalorder %v1402, %v1524
        %vm1577 = vcmp.eq.s32.totalorder %v1405, %v1520
        %vm1578 = vcmp.eq.s32.totalorder %v1405, %v1524
        %vm1579 = vcmp.eq.s32.totalorder %v1408, %v1520
        %vm1580 = vcmp.eq.s32.totalorder %v1408, %v1524
        %vm1581 = vcmp.eq.s32.totalorder %v1411, %v1520
        %vm1582 = vcmp.eq.s32.totalorder %v1411, %v1524
        %vm1583 = vcmp.eq.s32.totalorder %v1414, %v1520
        %vm1584 = vcmp.eq.s32.totalorder %v1414, %v1524
        %vm1585 = vcmp.eq.s32.totalorder %v1417, %v1520
        %vm1586 = vcmp.eq.s32.totalorder %v1417, %v1524
        %vm1587 = vcmp.eq.s32.totalorder %v1420, %v1520
        %vm1588 = vcmp.eq.s32.totalorder %v1420, %v1524
        %vm1589 = vcmp.eq.s32.totalorder %v1423, %v1520
        %vm1590 = vcmp.eq.s32.totalorder %v1423, %v1524
        %vm1591 = vcmp.eq.s32.totalorder %v1426, %v1520
        %vm1592 = vcmp.eq.s32.totalorder %v1426, %v1524
        %vm1593 = vcmp.eq.s32.totalorder %v1429, %v1520
        %vm1594 = vcmp.eq.s32.totalorder %v1429, %v1524
        %vm1595 = vcmp.eq.s32.totalorder %v1432, %v1520
        %vm1596 = vcmp.eq.s32.totalorder %v1432, %v1524
        %vm1597 = vcmp.eq.s32.totalorder %v1435, %v1520
        %vm1598 = vcmp.eq.s32.totalorder %v1435, %v1524
        %vm1599 = vcmp.eq.s32.totalorder %v1438, %v1520
        %vm1600 = vcmp.eq.s32.totalorder %v1438, %v1524
        %vm1601 = vcmp.eq.s32.totalorder %v1441, %v1520
        %vm1602 = vcmp.eq.s32.totalorder %v1441, %v1524
        %vm1603 = vcmp.eq.s32.totalorder %v1444, %v1520
        %vm1604 = vcmp.eq.s32.totalorder %v1444, %v1524
        %vm1605 = vcmp.eq.s32.totalorder %v1447, %v1520
        %vm1606 = vcmp.eq.s32.totalorder %v1447, %v1524
        %vm1607 = vcmp.eq.s32.totalorder %v1450, %v1520
        %vm1608 = vcmp.eq.s32.totalorder %v1450, %v1524
        %vm1609 = vcmp.eq.s32.totalorder %v1453, %v1520
        %vm1610 = vcmp.eq.s32.totalorder %v1453, %v1524
        %vm1611 = vcmp.eq.s32.totalorder %v1456, %v1520
        %vm1612 = vcmp.eq.s32.totalorder %v1456, %v1524
        %vm1613 = vcmp.eq.s32.totalorder %v1459, %v1520
        %vm1614 = vcmp.eq.s32.totalorder %v1459, %v1524
        %vm1615 = vcmp.eq.s32.totalorder %v1462, %v1520
        %vm1616 = vcmp.eq.s32.totalorder %v1462, %v1524
        %vm1617 = vcmp.eq.s32.totalorder %v1465, %v1520
        %vm1618 = vcmp.eq.s32.totalorder %v1465, %v1524
        %vm1619 = vcmp.eq.s32.totalorder %v1468, %v1520
        %vm1620 = vcmp.eq.s32.totalorder %v1468, %v1524
        %vm1621 = vcmp.eq.s32.totalorder %v1471, %v1520
        %vm1622 = vcmp.eq.s32.totalorder %v1471, %v1524
        %vm1623 = vcmp.eq.s32.totalorder %v1474, %v1520
        %vm1624 = vcmp.eq.s32.totalorder %v1474, %v1524
        %vm1625 = vcmp.eq.s32.totalorder %v1477, %v1520
        %vm1626 = vcmp.eq.s32.totalorder %v1477, %v1524
        %vm1627 = vcmp.eq.s32.totalorder %v1480, %v1520
        %vm1628 = vcmp.eq.s32.totalorder %v1480, %v1524
        %vm1629 = vcmp.eq.s32.totalorder %v1483, %v1520
        %vm1630 = vcmp.eq.s32.totalorder %v1483, %v1524
        %vm1631 = vcmp.eq.s32.totalorder %v1486, %v1520
        %vm1632 = vcmp.eq.s32.totalorder %v1486, %v1524
        %vm1633 = vcmp.eq.s32.totalorder %v1489, %v1520
        %vm1634 = vcmp.eq.s32.totalorder %v1489, %v1524
        %vm1635 = vcmp.eq.s32.totalorder %v1492, %v1520
        %vm1636 = vcmp.eq.s32.totalorder %v1492, %v1524
        %vm1637 = vcmp.eq.s32.totalorder %v1495, %v1520
        %vm1638 = vcmp.eq.s32.totalorder %v1495, %v1524
        %vm1639 = vcmp.eq.s32.totalorder %v1498, %v1520
        %vm1640 = vcmp.eq.s32.totalorder %v1498, %v1524
        %vm1641 = vcmp.eq.s32.totalorder %v1501, %v1520
        %vm1642 = vcmp.eq.s32.totalorder %v1501, %v1524
        %vm1643 = vcmp.eq.s32.totalorder %v1504, %v1520
        %vm1644 = vcmp.eq.s32.totalorder %v1504, %v1524
        %vm1645 = vcmp.eq.s32.totalorder %v1507, %v1520
        %vm1646 = vcmp.eq.s32.totalorder %v1507, %v1524
        %vm1647 = vcmp.eq.s32.totalorder %v1510, %v1520
        %vm1648 = vcmp.eq.s32.totalorder %v1510, %v1524
        %vm1649 = vcmp.eq.s32.totalorder %v1513, %v1520
        %vm1650 = vcmp.eq.s32.totalorder %v1513, %v1524
        %vm1651 = vcmp.eq.s32.totalorder %v1516, %v1520
        %vm1652 = vcmp.eq.s32.totalorder %v1516, %v1524
        %v1653 = vsel %vm1525, %v1132, 5e+11
        %v1654 = vsel %vm1526, %v1133, 5e+11
        %v1655 = vsel %vm1527, %v1134, 5e+11
        %v1656 = vsel %vm1528, %v1135, 5e+11
        %v1657 = vsel %vm1529, %v1136, 5e+11
        %v1658 = vsel %vm1530, %v1137, 5e+11
        %v1659 = vsel %vm1531, %v1138, 5e+11
        %v1660 = vsel %vm1532, %v1139, 5e+11
        %v1661 = vsel %vm1533, %v1140, 5e+11
        %v1662 = vsel %vm1534, %v1141, 5e+11
        %v1663 = vsel %vm1535, %v1142, 5e+11
        %v1664 = vsel %vm1536, %v1143, 5e+11
        %v1665 = vsel %vm1537, %v1144, 5e+11
        %v1666 = vsel %vm1538, %v1145, 5e+11
        %v1667 = vsel %vm1539, %v1146, 5e+11
        %v1668 = vsel %vm1540, %v1147, 5e+11
        %v1669 = vsel %vm1541, %v1148, 5e+11
        %v1670 = vsel %vm1542, %v1149, 5e+11
        %v1671 = vsel %vm1543, %v1150, 5e+11
        %v1672 = vsel %vm1544, %v1151, 5e+11
        %v1673 = vsel %vm1545, %v1152, 5e+11
        %v1674 = vsel %vm1546, %v1153, 5e+11
        %v1675 = vsel %vm1547, %v1154, 5e+11
        %v1676 = vsel %vm1548, %v1155, 5e+11
        %v1677 = vsel %vm1549, %v1156, 5e+11
        %v1678 = vsel %vm1550, %v1157, 5e+11
        %v1679 = vsel %vm1551, %v1158, 5e+11
        %v1680 = vsel %vm1552, %v1159, 5e+11
        %v1681 = vsel %vm1553, %v1160, 5e+11
        %v1682 = vsel %vm1554, %v1161, 5e+11
        %v1683 = vsel %vm1555, %v1162, 5e+11
        %v1684 = vsel %vm1556, %v1163, 5e+11
        %v1685 = vsel %vm1557, %v1164, 5e+11
        %v1686 = vsel %vm1558, %v1165, 5e+11
        %v1687 = vsel %vm1559, %v1166, 5e+11
        %v1688 = vsel %vm1560, %v1167, 5e+11
        %v1689 = vsel %vm1561, %v1168, 5e+11
        %v1690 = vsel %vm1562, %v1169, 5e+11
        %v1691 = vsel %vm1563, %v1170, 5e+11
        %v1692 = vsel %vm1564, %v1171, 5e+11
        %v1693 = vsel %vm1565, %v1172, 5e+11
        %v1694 = vsel %vm1566, %v1173, 5e+11
        %v1695 = vsel %vm1567, %v1174, 5e+11
        %v1696 = vsel %vm1568, %v1175, 5e+11
        %v1697 = vsel %vm1569, %v1176, 5e+11
        %v1698 = vsel %vm1570, %v1177, 5e+11
        %v1699 = vsel %vm1571, %v1178, 5e+11
        %v1700 = vsel %vm1572, %v1179, 5e+11
        %v1701 = vsel %vm1573, %v1180, 5e+11
        %v1702 = vsel %vm1574, %v1181, 5e+11
        %v1703 = vsel %vm1575, %v1182, 5e+11
        %v1704 = vsel %vm1576, %v1183, 5e+11
        %v1705 = vsel %vm1577, %v1184, 5e+11
        %v1706 = vsel %vm1578, %v1185, 5e+11
        %v1707 = vsel %vm1579, %v1186, 5e+11
        %v1708 = vsel %vm1580, %v1187, 5e+11
        %v1709 = vsel %vm1581, %v1188, 5e+11
        %v1710 = vsel %vm1582, %v1189, 5e+11
        %v1711 = vsel %vm1583, %v1190, 5e+11
        %v1712 = vsel %vm1584, %v1191, 5e+11
        %v1713 = vsel %vm1585, %v1192, 5e+11
        %v1714 = vsel %vm1586, %v1193, 5e+11
        %v1715 = vsel %vm1587, %v1194, 5e+11
        %v1716 = vsel %vm1588, %v1195, 5e+11
        %v1717 = vsel %vm1589, %v1196, 5e+11
        %v1718 = vsel %vm1590, %v1197, 5e+11
        %v1719 = vsel %vm1591, %v1198, 5e+11
        %v1720 = vsel %vm1592, %v1199, 5e+11
        %v1721 = vsel %vm1593, %v1200, 5e+11
        %v1722 = vsel %vm1594, %v1201, 5e+11
        %v1723 = vsel %vm1595, %v1202, 5e+11
        %v1724 = vsel %vm1596, %v1203, 5e+11
        %v1725 = vsel %vm1597, %v1204, 5e+11
        %v1726 = vsel %vm1598, %v1205, 5e+11
        %v1727 = vsel %vm1599, %v1206, 5e+11
        %v1728 = vsel %vm1600, %v1207, 5e+11
        %v1729 = vsel %vm1601, %v1208, 5e+11
        %v1730 = vsel %vm1602, %v1209, 5e+11
        %v1731 = vsel %vm1603, %v1210, 5e+11
        %v1732 = vsel %vm1604, %v1211, 5e+11
        %v1733 = vsel %vm1605, %v1212, 5e+11
        %v1734 = vsel %vm1606, %v1213, 5e+11
        %v1735 = vsel %vm1607, %v1214, 5e+11
        %v1736 = vsel %vm1608, %v1215, 5e+11
        %v1737 = vsel %vm1609, %v1216, 5e+11
        %v1738 = vsel %vm1610, %v1217, 5e+11
        %v1739 = vsel %vm1611, %v1218, 5e+11
        %v1740 = vsel %vm1612, %v1219, 5e+11
        %v1741 = vsel %vm1613, %v1220, 5e+11
        %v1742 = vsel %vm1614, %v1221, 5e+11
        %v1743 = vsel %vm1615, %v1222, 5e+11
        %v1744 = vsel %vm1616, %v1223, 5e+11
        %v1745 = vsel %vm1617, %v1224, 5e+11
        %v1746 = vsel %vm1618, %v1225, 5e+11
        %v1747 = vsel %vm1619, %v1226, 5e+11
        %v1748 = vsel %vm1620, %v1227, 5e+11
        %v1749 = vsel %vm1621, %v1228, 5e+11
        %v1750 = vsel %vm1622, %v1229, 5e+11
        %v1751 = vsel %vm1623, %v1230, 5e+11
        %v1752 = vsel %vm1624, %v1231, 5e+11
        %v1753 = vsel %vm1625, %v1232, 5e+11
        %v1754 = vsel %vm1626, %v1233, 5e+11
        %v1755 = vsel %vm1627, %v1234, 5e+11
        %v1756 = vsel %vm1628, %v1235, 5e+11
        %v1757 = vsel %vm1629, %v1236, 5e+11
        %v1758 = vsel %vm1630, %v1237, 5e+11
        %v1759 = vsel %vm1631, %v1238, 5e+11
        %v1760 = vsel %vm1632, %v1239, 5e+11
        %v1761 = vsel %vm1633, %v1240, 5e+11
        %v1762 = vsel %vm1634, %v1241, 5e+11
        %v1763 = vsel %vm1635, %v1242, 5e+11
        %v1764 = vsel %vm1636, %v1243, 5e+11
        %v1765 = vsel %vm1637, %v1244, 5e+11
        %v1766 = vsel %vm1638, %v1245, 5e+11
        %v1767 = vsel %vm1639, %v1246, 5e+11
        %v1768 = vsel %vm1640, %v1247, 5e+11
        %v1769 = vsel %vm1641, %v1248, 5e+11
        %v1770 = vsel %vm1642, %v1249, 5e+11
        %v1771 = vsel %vm1643, %v1250, 5e+11
        %v1772 = vsel %vm1644, %v1251, 5e+11
        %v1773 = vsel %vm1645, %v1252, 5e+11
        %v1774 = vsel %vm1646, %v1253, 5e+11
        %v1775 = vsel %vm1647, %v1254, 5e+11
        %v1776 = vsel %vm1648, %v1255, 5e+11
        %v1777 = vsel %vm1649, %v1256, 5e+11
        %v1778 = vsel %vm1650, %v1257, 5e+11
        %v1779 = vsel %vm1651, %v1258, 5e+11
        %v1780 = vsel %vm1652, %v1259, 5e+11
        %v1781 = vsel %vm1525, -5e+11, %v1132
        %v1782 = vsel %vm1526, -5e+11, %v1133
        %v1783 = vsel %vm1527, -5e+11, %v1134
        %v1784 = vsel %vm1528, -5e+11, %v1135
        %v1785 = vsel %vm1529, -5e+11, %v1136
        %v1786 = vsel %vm1530, -5e+11, %v1137
        %v1787 = vsel %vm1531, -5e+11, %v1138
        %v1788 = vsel %vm1532, -5e+11, %v1139
        %v1789 = vsel %vm1533, -5e+11, %v1140
        %v1790 = vsel %vm1534, -5e+11, %v1141
        %v1791 = vsel %vm1535, -5e+11, %v1142
        %v1792 = vsel %vm1536, -5e+11, %v1143
        %v1793 = vsel %vm1537, -5e+11, %v1144
        %v1794 = vsel %vm1538, -5e+11, %v1145
        %v1795 = vsel %vm1539, -5e+11, %v1146
        %v1796 = vsel %vm1540, -5e+11, %v1147
        %v1797 = vsel %vm1541, -5e+11, %v1148
        %v1798 = vsel %vm1542, -5e+11, %v1149
        %v1799 = vsel %vm1543, -5e+11, %v1150
        %v1800 = vsel %vm1544, -5e+11, %v1151
        %v1801 = vsel %vm1545, -5e+11, %v1152
        %v1802 = vsel %vm1546, -5e+11, %v1153
        %v1803 = vsel %vm1547, -5e+11, %v1154
        %v1804 = vsel %vm1548, -5e+11, %v1155
        %v1805 = vsel %vm1549, -5e+11, %v1156
        %v1806 = vsel %vm1550, -5e+11, %v1157
        %v1807 = vsel %vm1551, -5e+11, %v1158
        %v1808 = vsel %vm1552, -5e+11, %v1159
        %v1809 = vsel %vm1553, -5e+11, %v1160
        %v1810 = vsel %vm1554, -5e+11, %v1161
        %v1811 = vsel %vm1555, -5e+11, %v1162
        %v1812 = vsel %vm1556, -5e+11, %v1163
        %v1813 = vsel %vm1557, -5e+11, %v1164
        %v1814 = vsel %vm1558, -5e+11, %v1165
        %v1815 = vsel %vm1559, -5e+11, %v1166
        %v1816 = vsel %vm1560, -5e+11, %v1167
        %v1817 = vsel %vm1561, -5e+11, %v1168
        %v1818 = vsel %vm1562, -5e+11, %v1169
        %v1819 = vsel %vm1563, -5e+11, %v1170
        %v1820 = vsel %vm1564, -5e+11, %v1171
        %v1821 = vsel %vm1565, -5e+11, %v1172
        %v1822 = vsel %vm1566, -5e+11, %v1173
        %v1823 = vsel %vm1567, -5e+11, %v1174
        %v1824 = vsel %vm1568, -5e+11, %v1175
        %v1825 = vsel %vm1569, -5e+11, %v1176
        %v1826 = vsel %vm1570, -5e+11, %v1177
        %v1827 = vsel %vm1571, -5e+11, %v1178
        %v1828 = vsel %vm1572, -5e+11, %v1179
        %v1829 = vsel %vm1573, -5e+11, %v1180
        %v1830 = vsel %vm1574, -5e+11, %v1181
        %v1831 = vsel %vm1575, -5e+11, %v1182
        %v1832 = vsel %vm1576, -5e+11, %v1183
        %v1833 = vsel %vm1577, -5e+11, %v1184
        %v1834 = vsel %vm1578, -5e+11, %v1185
        %v1835 = vsel %vm1579, -5e+11, %v1186
        %v1836 = vsel %vm1580, -5e+11, %v1187
        %v1837 = vsel %vm1581, -5e+11, %v1188
        %v1838 = vsel %vm1582, -5e+11, %v1189
        %v1839 = vsel %vm1583, -5e+11, %v1190
        %v1840 = vsel %vm1584, -5e+11, %v1191
        %v1841 = vsel %vm1585, -5e+11, %v1192
        %v1842 = vsel %vm1586, -5e+11, %v1193
        %v1843 = vsel %vm1587, -5e+11, %v1194
        %v1844 = vsel %vm1588, -5e+11, %v1195
        %v1845 = vsel %vm1589, -5e+11, %v1196
        %v1846 = vsel %vm1590, -5e+11, %v1197
        %v1847 = vsel %vm1591, -5e+11, %v1198
        %v1848 = vsel %vm1592, -5e+11, %v1199
        %v1849 = vsel %vm1593, -5e+11, %v1200
        %v1850 = vsel %vm1594, -5e+11, %v1201
        %v1851 = vsel %vm1595, -5e+11, %v1202
        %v1852 = vsel %vm1596, -5e+11, %v1203
        %v1853 = vsel %vm1597, -5e+11, %v1204
        %v1854 = vsel %vm1598, -5e+11, %v1205
        %v1855 = vsel %vm1599, -5e+11, %v1206
        %v1856 = vsel %vm1600, -5e+11, %v1207
        %v1857 = vsel %vm1601, -5e+11, %v1208
        %v1858 = vsel %vm1602, -5e+11, %v1209
        %v1859 = vsel %vm1603, -5e+11, %v1210
        %v1860 = vsel %vm1604, -5e+11, %v1211
        %v1861 = vsel %vm1605, -5e+11, %v1212
        %v1862 = vsel %vm1606, -5e+11, %v1213
        %v1863 = vsel %vm1607, -5e+11, %v1214
        %v1864 = vsel %vm1608, -5e+11, %v1215
        %v1865 = vsel %vm1609, -5e+11, %v1216
        %v1866 = vsel %vm1610, -5e+11, %v1217
        %v1867 = vsel %vm1611, -5e+11, %v1218
        %v1868 = vsel %vm1612, -5e+11, %v1219
        %v1869 = vsel %vm1613, -5e+11, %v1220
        %v1870 = vsel %vm1614, -5e+11, %v1221
        %v1871 = vsel %vm1615, -5e+11, %v1222
        %v1872 = vsel %vm1616, -5e+11, %v1223
        %v1873 = vsel %vm1617, -5e+11, %v1224
        %v1874 = vsel %vm1618, -5e+11, %v1225
        %v1875 = vsel %vm1619, -5e+11, %v1226
        %v1876 = vsel %vm1620, -5e+11, %v1227
        %v1877 = vsel %vm1621, -5e+11, %v1228
        %v1878 = vsel %vm1622, -5e+11, %v1229
        %v1879 = vsel %vm1623, -5e+11, %v1230
        %v1880 = vsel %vm1624, -5e+11, %v1231
        %v1881 = vsel %vm1625, -5e+11, %v1232
        %v1882 = vsel %vm1626, -5e+11, %v1233
        %v1883 = vsel %vm1627, -5e+11, %v1234
        %v1884 = vsel %vm1628, -5e+11, %v1235
        %v1885 = vsel %vm1629, -5e+11, %v1236
        %v1886 = vsel %vm1630, -5e+11, %v1237
        %v1887 = vsel %vm1631, -5e+11, %v1238
        %v1888 = vsel %vm1632, -5e+11, %v1239
        %v1889 = vsel %vm1633, -5e+11, %v1240
        %v1890 = vsel %vm1634, -5e+11, %v1241
        %v1891 = vsel %vm1635, -5e+11, %v1242
        %v1892 = vsel %vm1636, -5e+11, %v1243
        %v1893 = vsel %vm1637, -5e+11, %v1244
        %v1894 = vsel %vm1638, -5e+11, %v1245
        %v1895 = vsel %vm1639, -5e+11, %v1246
        %v1896 = vsel %vm1640, -5e+11, %v1247
        %v1897 = vsel %vm1641, -5e+11, %v1248
        %v1898 = vsel %vm1642, -5e+11, %v1249
        %v1899 = vsel %vm1643, -5e+11, %v1250
        %v1900 = vsel %vm1644, -5e+11, %v1251
        %v1901 = vsel %vm1645, -5e+11, %v1252
        %v1902 = vsel %vm1646, -5e+11, %v1253
        %v1903 = vsel %vm1647, -5e+11, %v1254
        %v1904 = vsel %vm1648, -5e+11, %v1255
        %v1905 = vsel %vm1649, -5e+11, %v1256
        %v1906 = vsel %vm1650, -5e+11, %v1257
        %v1907 = vsel %vm1651, -5e+11, %v1258
        %v1908 = vsel %vm1652, -5e+11, %v1259
        %v1909 = vld [vmem:[#allocation2] sm:$0xff]
        %v1910 = vld [vmem:[#allocation2 + $0x8] sm:$0xff]
        %v1911 = vld [vmem:[#allocation2 + $0x10] sm:$0xff]
        %v1912 = vld [vmem:[#allocation2 + $0x18] sm:$0xff]
        %v1913 = vld [vmem:[#allocation2 + $0x20] sm:$0xff]
        %v1914 = vld [vmem:[#allocation2 + $0x28] sm:$0xff]
        %v1915 = vld [vmem:[#allocation2 + $0x30] sm:$0xff]
        %v1916 = vld [vmem:[#allocation2 + $0x38] sm:$0xff]
        %v1917 = vld [vmem:[#allocation2 + $0x40] sm:$0xff]
        %v1918 = vld [vmem:[#allocation2 + $0x48] sm:$0xff]
        %v1919 = vld [vmem:[#allocation2 + $0x50] sm:$0xff]
        %v1920 = vld [vmem:[#allocation2 + $0x58] sm:$0xff]
        %v1921 = vld [vmem:[#allocation2 + $0x60] sm:$0xff]
        %v1922 = vld [vmem:[#allocation2 + $0x68] sm:$0xff]
        %v1923 = vld [vmem:[#allocation2 + $0x70] sm:$0xff]
        %v1924 = vld [vmem:[#allocation2 + $0x78] sm:$0xff]
        %v1925 = vld [vmem:[#allocation2 + $0x80] sm:$0xff]
        %v1926 = vld [vmem:[#allocation2 + $0x88] sm:$0xff]
        %v1927 = vld [vmem:[#allocation2 + $0x90] sm:$0xff]
        %v1928 = vld [vmem:[#allocation2 + $0x98] sm:$0xff]
        %v1929 = vld [vmem:[#allocation2 + $0xa0] sm:$0xff]
        %v1930 = vld [vmem:[#allocation2 + $0xa8] sm:$0xff]
        %v1931 = vld [vmem:[#allocation2 + $0xb0] sm:$0xff]
        %v1932 = vld [vmem:[#allocation2 + $0xb8] sm:$0xff]
        %v1933 = vld [vmem:[#allocation2 + $0xc0] sm:$0xff]
        %v1934 = vld [vmem:[#allocation2 + $0xc8] sm:$0xff]
        %v1935 = vld [vmem:[#allocation2 + $0xd0] sm:$0xff]
        %v1936 = vld [vmem:[#allocation2 + $0xd8] sm:$0xff]
        %v1937 = vld [vmem:[#allocation2 + $0xe0] sm:$0xff]
        %v1938 = vld [vmem:[#allocation2 + $0xe8] sm:$0xff]
        %v1939 = vld [vmem:[#allocation2 + $0xf0] sm:$0xff]
        %v1940 = vld [vmem:[#allocation2 + $0xf8] sm:$0xff]
        %v1941 = vld [vmem:[#allocation2 + $0x100] sm:$0xff]
        %v1942 = vld [vmem:[#allocation2 + $0x108] sm:$0xff]
        %v1943 = vld [vmem:[#allocation2 + $0x110] sm:$0xff]
        %v1944 = vld [vmem:[#allocation2 + $0x118] sm:$0xff]
        %v1945 = vld [vmem:[#allocation2 + $0x120] sm:$0xff]
        %v1946 = vld [vmem:[#allocation2 + $0x128] sm:$0xff]
        %v1947 = vld [vmem:[#allocation2 + $0x130] sm:$0xff]
        %v1948 = vld [vmem:[#allocation2 + $0x138] sm:$0xff]
        %v1949 = vld [vmem:[#allocation2 + $0x140] sm:$0xff]
        %v1950 = vld [vmem:[#allocation2 + $0x148] sm:$0xff]
        %v1951 = vld [vmem:[#allocation2 + $0x150] sm:$0xff]
        %v1952 = vld [vmem:[#allocation2 + $0x158] sm:$0xff]
        %v1953 = vld [vmem:[#allocation2 + $0x160] sm:$0xff]
        %v1954 = vld [vmem:[#allocation2 + $0x168] sm:$0xff]
        %v1955 = vld [vmem:[#allocation2 + $0x170] sm:$0xff]
        %v1956 = vld [vmem:[#allocation2 + $0x178] sm:$0xff]
        %v1957 = vld [vmem:[#allocation2 + $0x180] sm:$0xff]
        %v1958 = vld [vmem:[#allocation2 + $0x188] sm:$0xff]
        %v1959 = vld [vmem:[#allocation2 + $0x190] sm:$0xff]
        %v1960 = vld [vmem:[#allocation2 + $0x198] sm:$0xff]
        %v1961 = vld [vmem:[#allocation2 + $0x1a0] sm:$0xff]
        %v1962 = vld [vmem:[#allocation2 + $0x1a8] sm:$0xff]
        %v1963 = vld [vmem:[#allocation2 + $0x1b0] sm:$0xff]
        %v1964 = vld [vmem:[#allocation2 + $0x1b8] sm:$0xff]
        %v1965 = vld [vmem:[#allocation2 + $0x1c0] sm:$0xff]
        %v1966 = vld [vmem:[#allocation2 + $0x1c8] sm:$0xff]
        %v1967 = vld [vmem:[#allocation2 + $0x1d0] sm:$0xff]
        %v1968 = vld [vmem:[#allocation2 + $0x1d8] sm:$0xff]
        %v1969 = vld [vmem:[#allocation2 + $0x1e0] sm:$0xff]
        %v1970 = vld [vmem:[#allocation2 + $0x1e8] sm:$0xff]
        %v1971 = vld [vmem:[#allocation2 + $0x1f0] sm:$0xff]
        %v1972 = vld [vmem:[#allocation2 + $0x1f8] sm:$0xff]
        %v1973 = vmin.f32 %v1653, %v1654
        %1974 = vmin.xlane.f32.xlu0 %v1973
        %v1975 = vpop.xlane.xlu0 %1974
        %v1976 = vmin.f32 %v1655, %v1656
        %1977 = vmin.xlane.f32.xlu0 %v1976
        %v1978 = vpop.xlane.xlu0 %1977
        %v1979 = vmin.f32 %v1657, %v1658
        %1980 = vmin.xlane.f32.xlu0 %v1979
        %v1981 = vpop.xlane.xlu0 %1980
        %v1982 = vmin.f32 %v1659, %v1660
        %1983 = vmin.xlane.f32.xlu0 %v1982
        %v1984 = vpop.xlane.xlu0 %1983
        %v1985 = vmin.f32 %v1661, %v1662
        %1986 = vmin.xlane.f32.xlu0 %v1985
        %v1987 = vpop.xlane.xlu0 %1986
        %v1988 = vmin.f32 %v1663, %v1664
        %1989 = vmin.xlane.f32.xlu0 %v1988
        %v1990 = vpop.xlane.xlu0 %1989
        %v1991 = vmin.f32 %v1665, %v1666
        %1992 = vmin.xlane.f32.xlu0 %v1991
        %v1993 = vpop.xlane.xlu0 %1992
        %v1994 = vmin.f32 %v1667, %v1668
        %1995 = vmin.xlane.f32.xlu0 %v1994
        %v1996 = vpop.xlane.xlu0 %1995
        %v1997 = vmin.f32 %v1669, %v1670
        %1998 = vmin.xlane.f32.xlu0 %v1997
        %v1999 = vpop.xlane.xlu0 %1998
        %v2000 = vmin.f32 %v1671, %v1672
        %2001 = vmin.xlane.f32.xlu0 %v2000
        %v2002 = vpop.xlane.xlu0 %2001
        %v2003 = vmin.f32 %v1673, %v1674
        %2004 = vmin.xlane.f32.xlu0 %v2003
        %v2005 = vpop.xlane.xlu0 %2004
        %v2006 = vmin.f32 %v1675, %v1676
        %2007 = vmin.xlane.f32.xlu0 %v2006
        %v2008 = vpop.xlane.xlu0 %2007
        %v2009 = vmin.f32 %v1677, %v1678
        %2010 = vmin.xlane.f32.xlu0 %v2009
        %v2011 = vpop.xlane.xlu0 %2010
        %v2012 = vmin.f32 %v1679, %v1680
        %2013 = vmin.xlane.f32.xlu0 %v2012
        %v2014 = vpop.xlane.xlu0 %2013
        %v2015 = vmin.f32 %v1681, %v1682
        %2016 = vmin.xlane.f32.xlu0 %v2015
        %v2017 = vpop.xlane.xlu0 %2016
        %v2018 = vmin.f32 %v1683, %v1684
        %2019 = vmin.xlane.f32.xlu0 %v2018
        %v2020 = vpop.xlane.xlu0 %2019
        %v2021 = vmin.f32 %v1685, %v1686
        %2022 = vmin.xlane.f32.xlu0 %v2021
        %v2023 = vpop.xlane.xlu0 %2022
        %v2024 = vmin.f32 %v1687, %v1688
        %2025 = vmin.xlane.f32.xlu0 %v2024
        %v2026 = vpop.xlane.xlu0 %2025
        %v2027 = vmin.f32 %v1689, %v1690
        %2028 = vmin.xlane.f32.xlu0 %v2027
        %v2029 = vpop.xlane.xlu0 %2028
        %v2030 = vmin.f32 %v1691, %v1692
        %2031 = vmin.xlane.f32.xlu0 %v2030
        %v2032 = vpop.xlane.xlu0 %2031
        %v2033 = vmin.f32 %v1693, %v1694
        %2034 = vmin.xlane.f32.xlu0 %v2033
        %v2035 = vpop.xlane.xlu0 %2034
        %v2036 = vmin.f32 %v1695, %v1696
        %2037 = vmin.xlane.f32.xlu0 %v2036
        %v2038 = vpop.xlane.xlu0 %2037
        %v2039 = vmin.f32 %v1697, %v1698
        %2040 = vmin.xlane.f32.xlu0 %v2039
        %v2041 = vpop.xlane.xlu0 %2040
        %v2042 = vmin.f32 %v1699, %v1700
        %2043 = vmin.xlane.f32.xlu0 %v2042
        %v2044 = vpop.xlane.xlu0 %2043
        %v2045 = vmin.f32 %v1701, %v1702
        %2046 = vmin.xlane.f32.xlu0 %v2045
        %v2047 = vpop.xlane.xlu0 %2046
        %v2048 = vmin.f32 %v1703, %v1704
        %2049 = vmin.xlane.f32.xlu0 %v2048
        %v2050 = vpop.xlane.xlu0 %2049
        %v2051 = vmin.f32 %v1705, %v1706
        %2052 = vmin.xlane.f32.xlu0 %v2051
        %v2053 = vpop.xlane.xlu0 %2052
        %v2054 = vmin.f32 %v1707, %v1708
        %2055 = vmin.xlane.f32.xlu0 %v2054
        %v2056 = vpop.xlane.xlu0 %2055
        %v2057 = vmin.f32 %v1709, %v1710
        %2058 = vmin.xlane.f32.xlu0 %v2057
        %v2059 = vpop.xlane.xlu0 %2058
        %v2060 = vmin.f32 %v1711, %v1712
        %2061 = vmin.xlane.f32.xlu0 %v2060
        %v2062 = vpop.xlane.xlu0 %2061
        %v2063 = vmin.f32 %v1713, %v1714
        %2064 = vmin.xlane.f32.xlu0 %v2063
        %v2065 = vpop.xlane.xlu0 %2064
        %v2066 = vmin.f32 %v1715, %v1716
        %2067 = vmin.xlane.f32.xlu0 %v2066
        %v2068 = vpop.xlane.xlu0 %2067
        %v2069 = vmin.f32 %v1717, %v1718
        %2070 = vmin.xlane.f32.xlu0 %v2069
        %v2071 = vpop.xlane.xlu0 %2070
        %v2072 = vmin.f32 %v1719, %v1720
        %2073 = vmin.xlane.f32.xlu0 %v2072
        %v2074 = vpop.xlane.xlu0 %2073
        %v2075 = vmin.f32 %v1721, %v1722
        %2076 = vmin.xlane.f32.xlu0 %v2075
        %v2077 = vpop.xlane.xlu0 %2076
        %v2078 = vmin.f32 %v1723, %v1724
        %2079 = vmin.xlane.f32.xlu0 %v2078
        %v2080 = vpop.xlane.xlu0 %2079
        %v2081 = vmin.f32 %v1725, %v1726
        %2082 = vmin.xlane.f32.xlu0 %v2081
        %v2083 = vpop.xlane.xlu0 %2082
        %v2084 = vmin.f32 %v1727, %v1728
        %2085 = vmin.xlane.f32.xlu0 %v2084
        %v2086 = vpop.xlane.xlu0 %2085
        %v2087 = vmin.f32 %v1729, %v1730
        %2088 = vmin.xlane.f32.xlu0 %v2087
        %v2089 = vpop.xlane.xlu0 %2088
        %v2090 = vmin.f32 %v1731, %v1732
        %2091 = vmin.xlane.f32.xlu0 %v2090
        %v2092 = vpop.xlane.xlu0 %2091
        %v2093 = vmin.f32 %v1733, %v1734
        %2094 = vmin.xlane.f32.xlu0 %v2093
        %v2095 = vpop.xlane.xlu0 %2094
        %v2096 = vmin.f32 %v1735, %v1736
        %2097 = vmin.xlane.f32.xlu0 %v2096
        %v2098 = vpop.xlane.xlu0 %2097
        %v2099 = vmin.f32 %v1737, %v1738
        %2100 = vmin.xlane.f32.xlu0 %v2099
        %v2101 = vpop.xlane.xlu0 %2100
        %v2102 = vmin.f32 %v1739, %v1740
        %2103 = vmin.xlane.f32.xlu0 %v2102
        %v2104 = vpop.xlane.xlu0 %2103
        %v2105 = vmin.f32 %v1741, %v1742
        %2106 = vmin.xlane.f32.xlu0 %v2105
        %v2107 = vpop.xlane.xlu0 %2106
        %v2108 = vmin.f32 %v1743, %v1744
        %2109 = vmin.xlane.f32.xlu0 %v2108
        %v2110 = vpop.xlane.xlu0 %2109
        %v2111 = vmin.f32 %v1745, %v1746
        %2112 = vmin.xlane.f32.xlu0 %v2111
        %v2113 = vpop.xlane.xlu0 %2112
        %v2114 = vmin.f32 %v1747, %v1748
        %2115 = vmin.xlane.f32.xlu0 %v2114
        %v2116 = vpop.xlane.xlu0 %2115
        %v2117 = vmin.f32 %v1749, %v1750
        %2118 = vmin.xlane.f32.xlu0 %v2117
        %v2119 = vpop.xlane.xlu0 %2118
        %v2120 = vmin.f32 %v1751, %v1752
        %2121 = vmin.xlane.f32.xlu0 %v2120
        %v2122 = vpop.xlane.xlu0 %2121
        %v2123 = vmin.f32 %v1753, %v1754
        %2124 = vmin.xlane.f32.xlu0 %v2123
        %v2125 = vpop.xlane.xlu0 %2124
        %v2126 = vmin.f32 %v1755, %v1756
        %2127 = vmin.xlane.f32.xlu0 %v2126
        %v2128 = vpop.xlane.xlu0 %2127
        %v2129 = vmin.f32 %v1757, %v1758
        %2130 = vmin.xlane.f32.xlu0 %v2129
        %v2131 = vpop.xlane.xlu0 %2130
        %v2132 = vmin.f32 %v1759, %v1760
        %2133 = vmin.xlane.f32.xlu0 %v2132
        %v2134 = vpop.xlane.xlu0 %2133
        %v2135 = vmin.f32 %v1761, %v1762
        %2136 = vmin.xlane.f32.xlu0 %v2135
        %v2137 = vpop.xlane.xlu0 %2136
        %v2138 = vmin.f32 %v1763, %v1764
        %2139 = vmin.xlane.f32.xlu0 %v2138
        %v2140 = vpop.xlane.xlu0 %2139
        %v2141 = vmin.f32 %v1765, %v1766
        %2142 = vmin.xlane.f32.xlu0 %v2141
        %v2143 = vpop.xlane.xlu0 %2142
        %v2144 = vmin.f32 %v1767, %v1768
        %2145 = vmin.xlane.f32.xlu0 %v2144
        %v2146 = vpop.xlane.xlu0 %2145
        %v2147 = vmin.f32 %v1769, %v1770
        %2148 = vmin.xlane.f32.xlu0 %v2147
        %v2149 = vpop.xlane.xlu0 %2148
        %v2150 = vmin.f32 %v1771, %v1772
        %2151 = vmin.xlane.f32.xlu0 %v2150
        %v2152 = vpop.xlane.xlu0 %2151
        %v2153 = vmin.f32 %v1773, %v1774
        %2154 = vmin.xlane.f32.xlu0 %v2153
        %v2155 = vpop.xlane.xlu0 %2154
        %v2156 = vmin.f32 %v1775, %v1776
        %2157 = vmin.xlane.f32.xlu0 %v2156
        %v2158 = vpop.xlane.xlu0 %2157
        %v2159 = vmin.f32 %v1777, %v1778
        %2160 = vmin.xlane.f32.xlu0 %v2159
        %v2161 = vpop.xlane.xlu0 %2160
        %v2162 = vmin.f32 %v1779, %v1780
        %2163 = vmin.xlane.f32.xlu0 %v2162
        %v2164 = vpop.xlane.xlu0 %2163
        %v2165 = vmin.f32 %v1909, %v1975
        %v2166 = vmin.f32 %v1910, %v1978
        %v2167 = vmin.f32 %v1911, %v1981
        %v2168 = vmin.f32 %v1912, %v1984
        %v2169 = vmin.f32 %v1913, %v1987
        %v2170 = vmin.f32 %v1914, %v1990
        %v2171 = vmin.f32 %v1915, %v1993
        %v2172 = vmin.f32 %v1916, %v1996
        %v2173 = vmin.f32 %v1917, %v1999
        %v2174 = vmin.f32 %v1918, %v2002
        %v2175 = vmin.f32 %v1919, %v2005
        %v2176 = vmin.f32 %v1920, %v2008
        %v2177 = vmin.f32 %v1921, %v2011
        %v2178 = vmin.f32 %v1922, %v2014
        %v2179 = vmin.f32 %v1923, %v2017
        %v2180 = vmin.f32 %v1924, %v2020
        %v2181 = vmin.f32 %v1925, %v2023
        %v2182 = vmin.f32 %v1926, %v2026
        %v2183 = vmin.f32 %v1927, %v2029
        %v2184 = vmin.f32 %v1928, %v2032
        %v2185 = vmin.f32 %v1929, %v2035
        %v2186 = vmin.f32 %v1930, %v2038
        %v2187 = vmin.f32 %v1931, %v2041
        %v2188 = vmin.f32 %v1932, %v2044
        %v2189 = vmin.f32 %v1933, %v2047
        %v2190 = vmin.f32 %v1934, %v2050
        %v2191 = vmin.f32 %v1935, %v2053
        %v2192 = vmin.f32 %v1936, %v2056
        %v2193 = vmin.f32 %v1937, %v2059
        %v2194 = vmin.f32 %v1938, %v2062
        %v2195 = vmin.f32 %v1939, %v2065
        %v2196 = vmin.f32 %v1940, %v2068
        %v2197 = vmin.f32 %v1941, %v2071
        %v2198 = vmin.f32 %v1942, %v2074
        %v2199 = vmin.f32 %v1943, %v2077
        %v2200 = vmin.f32 %v1944, %v2080
        %v2201 = vmin.f32 %v1945, %v2083
        %v2202 = vmin.f32 %v1946, %v2086
        %v2203 = vmin.f32 %v1947, %v2089
        %v2204 = vmin.f32 %v1948, %v2092
        %v2205 = vmin.f32 %v1949, %v2095
        %v2206 = vmin.f32 %v1950, %v2098
        %v2207 = vmin.f32 %v1951, %v2101
        %v2208 = vmin.f32 %v1952, %v2104
        %v2209 = vmin.f32 %v1953, %v2107
        %v2210 = vmin.f32 %v1954, %v2110
        %v2211 = vmin.f32 %v1955, %v2113
        %v2212 = vmin.f32 %v1956, %v2116
        %v2213 = vmin.f32 %v1957, %v2119
        %v2214 = vmin.f32 %v1958, %v2122
        %v2215 = vmin.f32 %v1959, %v2125
        %v2216 = vmin.f32 %v1960, %v2128
        %v2217 = vmin.f32 %v1961, %v2131
        %v2218 = vmin.f32 %v1962, %v2134
        %v2219 = vmin.f32 %v1963, %v2137
        %v2220 = vmin.f32 %v1964, %v2140
        %v2221 = vmin.f32 %v1965, %v2143
        %v2222 = vmin.f32 %v1966, %v2146
        %v2223 = vmin.f32 %v1967, %v2149
        %v2224 = vmin.f32 %v1968, %v2152
        %v2225 = vmin.f32 %v1969, %v2155
        %v2226 = vmin.f32 %v1970, %v2158
        %v2227 = vmin.f32 %v1971, %v2161
        %v2228 = vmin.f32 %v1972, %v2164
        %vm2229 = vcmask 7168
        %2230 = vst.msk [vmem:[#allocation2] sm:$0xff] %vm2229, %v2165
        %2231 = vst.msk [vmem:[#allocation2 + $0x8] sm:$0xff] %vm2229, %v2166
        %2232 = vst.msk [vmem:[#allocation2 + $0x10] sm:$0xff] %vm2229, %v2167
        %2233 = vst.msk [vmem:[#allocation2 + $0x18] sm:$0xff] %vm2229, %v2168
        %2234 = vst.msk [vmem:[#allocation2 + $0x20] sm:$0xff] %vm2229, %v2169
        %2235 = vst.msk [vmem:[#allocation2 + $0x28] sm:$0xff] %vm2229, %v2170
        %2236 = vst.msk [vmem:[#allocation2 + $0x30] sm:$0xff] %vm2229, %v2171
        %2237 = vst.msk [vmem:[#allocation2 + $0x38] sm:$0xff] %vm2229, %v2172
        %2238 = vst.msk [vmem:[#allocation2 + $0x40] sm:$0xff] %vm2229, %v2173
        %2239 = vst.msk [vmem:[#allocation2 + $0x48] sm:$0xff] %vm2229, %v2174
        %2240 = vst.msk [vmem:[#allocation2 + $0x50] sm:$0xff] %vm2229, %v2175
        %2241 = vst.msk [vmem:[#allocation2 + $0x58] sm:$0xff] %vm2229, %v2176
        %2242 = vst.msk [vmem:[#allocation2 + $0x60] sm:$0xff] %vm2229, %v2177
        %2243 = vst.msk [vmem:[#allocation2 + $0x68] sm:$0xff] %vm2229, %v2178
        %2244 = vst.msk [vmem:[#allocation2 + $0x70] sm:$0xff] %vm2229, %v2179
        %2245 = vst.msk [vmem:[#allocation2 + $0x78] sm:$0xff] %vm2229, %v2180
        %2246 = vst.msk [vmem:[#allocation2 + $0x80] sm:$0xff] %vm2229, %v2181
        %2247 = vst.msk [vmem:[#allocation2 + $0x88] sm:$0xff] %vm2229, %v2182
        %2248 = vst.msk [vmem:[#allocation2 + $0x90] sm:$0xff] %vm2229, %v2183
        %2249 = vst.msk [vmem:[#allocation2 + $0x98] sm:$0xff] %vm2229, %v2184
        %2250 = vst.msk [vmem:[#allocation2 + $0xa0] sm:$0xff] %vm2229, %v2185
        %2251 = vst.msk [vmem:[#allocation2 + $0xa8] sm:$0xff] %vm2229, %v2186
        %2252 = vst.msk [vmem:[#allocation2 + $0xb0] sm:$0xff] %vm2229, %v2187
        %2253 = vst.msk [vmem:[#allocation2 + $0xb8] sm:$0xff] %vm2229, %v2188
        %2254 = vst.msk [vmem:[#allocation2 + $0xc0] sm:$0xff] %vm2229, %v2189
        %2255 = vst.msk [vmem:[#allocation2 + $0xc8] sm:$0xff] %vm2229, %v2190
        %2256 = vst.msk [vmem:[#allocation2 + $0xd0] sm:$0xff] %vm2229, %v2191
        %2257 = vst.msk [vmem:[#allocation2 + $0xd8] sm:$0xff] %vm2229, %v2192
        %2258 = vst.msk [vmem:[#allocation2 + $0xe0] sm:$0xff] %vm2229, %v2193
        %2259 = vst.msk [vmem:[#allocation2 + $0xe8] sm:$0xff] %vm2229, %v2194
        %2260 = vst.msk [vmem:[#allocation2 + $0xf0] sm:$0xff] %vm2229, %v2195
        %2261 = vst.msk [vmem:[#allocation2 + $0xf8] sm:$0xff] %vm2229, %v2196
        %2262 = vst.msk [vmem:[#allocation2 + $0x100] sm:$0xff] %vm2229, %v2197
        %2263 = vst.msk [vmem:[#allocation2 + $0x108] sm:$0xff] %vm2229, %v2198
        %2264 = vst.msk [vmem:[#allocation2 + $0x110] sm:$0xff] %vm2229, %v2199
        %2265 = vst.msk [vmem:[#allocation2 + $0x118] sm:$0xff] %vm2229, %v2200
        %2266 = vst.msk [vmem:[#allocation2 + $0x120] sm:$0xff] %vm2229, %v2201
        %2267 = vst.msk [vmem:[#allocation2 + $0x128] sm:$0xff] %vm2229, %v2202
        %2268 = vst.msk [vmem:[#allocation2 + $0x130] sm:$0xff] %vm2229, %v2203
        %2269 = vst.msk [vmem:[#allocation2 + $0x138] sm:$0xff] %vm2229, %v2204
        %2270 = vst.msk [vmem:[#allocation2 + $0x140] sm:$0xff] %vm2229, %v2205
        %2271 = vst.msk [vmem:[#allocation2 + $0x148] sm:$0xff] %vm2229, %v2206
        %2272 = vst.msk [vmem:[#allocation2 + $0x150] sm:$0xff] %vm2229, %v2207
        %2273 = vst.msk [vmem:[#allocation2 + $0x158] sm:$0xff] %vm2229, %v2208
        %2274 = vst.msk [vmem:[#allocation2 + $0x160] sm:$0xff] %vm2229, %v2209
        %2275 = vst.msk [vmem:[#allocation2 + $0x168] sm:$0xff] %vm2229, %v2210
        %2276 = vst.msk [vmem:[#allocation2 + $0x170] sm:$0xff] %vm2229, %v2211
        %2277 = vst.msk [vmem:[#allocation2 + $0x178] sm:$0xff] %vm2229, %v2212
        %2278 = vst.msk [vmem:[#allocation2 + $0x180] sm:$0xff] %vm2229, %v2213
        %2279 = vst.msk [vmem:[#allocation2 + $0x188] sm:$0xff] %vm2229, %v2214
        %2280 = vst.msk [vmem:[#allocation2 + $0x190] sm:$0xff] %vm2229, %v2215
        %2281 = vst.msk [vmem:[#allocation2 + $0x198] sm:$0xff] %vm2229, %v2216
        %2282 = vst.msk [vmem:[#allocation2 + $0x1a0] sm:$0xff] %vm2229, %v2217
        %2283 = vst.msk [vmem:[#allocation2 + $0x1a8] sm:$0xff] %vm2229, %v2218
        %2284 = vst.msk [vmem:[#allocation2 + $0x1b0] sm:$0xff] %vm2229, %v2219
        %2285 = vst.msk [vmem:[#allocation2 + $0x1b8] sm:$0xff] %vm2229, %v2220
        %2286 = vst.msk [vmem:[#allocation2 + $0x1c0] sm:$0xff] %vm2229, %v2221
        %2287 = vst.msk [vmem:[#allocation2 + $0x1c8] sm:$0xff] %vm2229, %v2222
        %2288 = vst.msk [vmem:[#allocation2 + $0x1d0] sm:$0xff] %vm2229, %v2223
        %2289 = vst.msk [vmem:[#allocation2 + $0x1d8] sm:$0xff] %vm2229, %v2224
        %2290 = vst.msk [vmem:[#allocation2 + $0x1e0] sm:$0xff] %vm2229, %v2225
        %2291 = vst.msk [vmem:[#allocation2 + $0x1e8] sm:$0xff] %vm2229, %v2226
        %2292 = vst.msk [vmem:[#allocation2 + $0x1f0] sm:$0xff] %vm2229, %v2227
        %2293 = vst.msk [vmem:[#allocation2 + $0x1f8] sm:$0xff] %vm2229, %v2228
        %v2294 = vld [vmem:[#allocation3] sm:$0xff]
        %v2295 = vld [vmem:[#allocation3 + $0x8] sm:$0xff]
        %v2296 = vld [vmem:[#allocation3 + $0x10] sm:$0xff]
        %v2297 = vld [vmem:[#allocation3 + $0x18] sm:$0xff]
        %v2298 = vld [vmem:[#allocation3 + $0x20] sm:$0xff]
        %v2299 = vld [vmem:[#allocation3 + $0x28] sm:$0xff]
        %v2300 = vld [vmem:[#allocation3 + $0x30] sm:$0xff]
        %v2301 = vld [vmem:[#allocation3 + $0x38] sm:$0xff]
        %v2302 = vld [vmem:[#allocation3 + $0x40] sm:$0xff]
        %v2303 = vld [vmem:[#allocation3 + $0x48] sm:$0xff]
        %v2304 = vld [vmem:[#allocation3 + $0x50] sm:$0xff]
        %v2305 = vld [vmem:[#allocation3 + $0x58] sm:$0xff]
        %v2306 = vld [vmem:[#allocation3 + $0x60] sm:$0xff]
        %v2307 = vld [vmem:[#allocation3 + $0x68] sm:$0xff]
        %v2308 = vld [vmem:[#allocation3 + $0x70] sm:$0xff]
        %v2309 = vld [vmem:[#allocation3 + $0x78] sm:$0xff]
        %v2310 = vld [vmem:[#allocation3 + $0x80] sm:$0xff]
        %v2311 = vld [vmem:[#allocation3 + $0x88] sm:$0xff]
        %v2312 = vld [vmem:[#allocation3 + $0x90] sm:$0xff]
        %v2313 = vld [vmem:[#allocation3 + $0x98] sm:$0xff]
        %v2314 = vld [vmem:[#allocation3 + $0xa0] sm:$0xff]
        %v2315 = vld [vmem:[#allocation3 + $0xa8] sm:$0xff]
        %v2316 = vld [vmem:[#allocation3 + $0xb0] sm:$0xff]
        %v2317 = vld [vmem:[#allocation3 + $0xb8] sm:$0xff]
        %v2318 = vld [vmem:[#allocation3 + $0xc0] sm:$0xff]
        %v2319 = vld [vmem:[#allocation3 + $0xc8] sm:$0xff]
        %v2320 = vld [vmem:[#allocation3 + $0xd0] sm:$0xff]
        %v2321 = vld [vmem:[#allocation3 + $0xd8] sm:$0xff]
        %v2322 = vld [vmem:[#allocation3 + $0xe0] sm:$0xff]
        %v2323 = vld [vmem:[#allocation3 + $0xe8] sm:$0xff]
        %v2324 = vld [vmem:[#allocation3 + $0xf0] sm:$0xff]
        %v2325 = vld [vmem:[#allocation3 + $0xf8] sm:$0xff]
        %v2326 = vld [vmem:[#allocation3 + $0x100] sm:$0xff]
        %v2327 = vld [vmem:[#allocation3 + $0x108] sm:$0xff]
        %v2328 = vld [vmem:[#allocation3 + $0x110] sm:$0xff]
        %v2329 = vld [vmem:[#allocation3 + $0x118] sm:$0xff]
        %v2330 = vld [vmem:[#allocation3 + $0x120] sm:$0xff]
        %v2331 = vld [vmem:[#allocation3 + $0x128] sm:$0xff]
        %v2332 = vld [vmem:[#allocation3 + $0x130] sm:$0xff]
        %v2333 = vld [vmem:[#allocation3 + $0x138] sm:$0xff]
        %v2334 = vld [vmem:[#allocation3 + $0x140] sm:$0xff]
        %v2335 = vld [vmem:[#allocation3 + $0x148] sm:$0xff]
        %v2336 = vld [vmem:[#allocation3 + $0x150] sm:$0xff]
        %v2337 = vld [vmem:[#allocation3 + $0x158] sm:$0xff]
        %v2338 = vld [vmem:[#allocation3 + $0x160] sm:$0xff]
        %v2339 = vld [vmem:[#allocation3 + $0x168] sm:$0xff]
        %v2340 = vld [vmem:[#allocation3 + $0x170] sm:$0xff]
        %v2341 = vld [vmem:[#allocation3 + $0x178] sm:$0xff]
        %v2342 = vld [vmem:[#allocation3 + $0x180] sm:$0xff]
        %v2343 = vld [vmem:[#allocation3 + $0x188] sm:$0xff]
        %v2344 = vld [vmem:[#allocation3 + $0x190] sm:$0xff]
        %v2345 = vld [vmem:[#allocation3 + $0x198] sm:$0xff]
        %v2346 = vld [vmem:[#allocation3 + $0x1a0] sm:$0xff]
        %v2347 = vld [vmem:[#allocation3 + $0x1a8] sm:$0xff]
        %v2348 = vld [vmem:[#allocation3 + $0x1b0] sm:$0xff]
        %v2349 = vld [vmem:[#allocation3 + $0x1b8] sm:$0xff]
        %v2350 = vld [vmem:[#allocation3 + $0x1c0] sm:$0xff]
        %v2351 = vld [vmem:[#allocation3 + $0x1c8] sm:$0xff]
        %v2352 = vld [vmem:[#allocation3 + $0x1d0] sm:$0xff]
        %v2353 = vld [vmem:[#allocation3 + $0x1d8] sm:$0xff]
        %v2354 = vld [vmem:[#allocation3 + $0x1e0] sm:$0xff]
        %v2355 = vld [vmem:[#allocation3 + $0x1e8] sm:$0xff]
        %v2356 = vld [vmem:[#allocation3 + $0x1f0] sm:$0xff]
        %v2357 = vld [vmem:[#allocation3 + $0x1f8] sm:$0xff]
        %v2358 = vmax.f32 %v1781, %v1782
        %2359 = vmax.xlane.f32.xlu0 %v2358
        %v2360 = vpop.xlane.xlu0 %2359
        %v2361 = vmax.f32 %v1783, %v1784
        %2362 = vmax.xlane.f32.xlu0 %v2361
        %v2363 = vpop.xlane.xlu0 %2362
        %v2364 = vmax.f32 %v1785, %v1786
        %2365 = vmax.xlane.f32.xlu0 %v2364
        %v2366 = vpop.xlane.xlu0 %2365
        %v2367 = vmax.f32 %v1787, %v1788
        %2368 = vmax.xlane.f32.xlu0 %v2367
        %v2369 = vpop.xlane.xlu0 %2368
        %v2370 = vmax.f32 %v1789, %v1790
        %2371 = vmax.xlane.f32.xlu0 %v2370
        %v2372 = vpop.xlane.xlu0 %2371
        %v2373 = vmax.f32 %v1791, %v1792
        %2374 = vmax.xlane.f32.xlu0 %v2373
        %v2375 = vpop.xlane.xlu0 %2374
        %v2376 = vmax.f32 %v1793, %v1794
        %2377 = vmax.xlane.f32.xlu0 %v2376
        %v2378 = vpop.xlane.xlu0 %2377
        %v2379 = vmax.f32 %v1795, %v1796
        %2380 = vmax.xlane.f32.xlu0 %v2379
        %v2381 = vpop.xlane.xlu0 %2380
        %v2382 = vmax.f32 %v1797, %v1798
        %2383 = vmax.xlane.f32.xlu0 %v2382
        %v2384 = vpop.xlane.xlu0 %2383
        %v2385 = vmax.f32 %v1799, %v1800
        %2386 = vmax.xlane.f32.xlu0 %v2385
        %v2387 = vpop.xlane.xlu0 %2386
        %v2388 = vmax.f32 %v1801, %v1802
        %2389 = vmax.xlane.f32.xlu0 %v2388
        %v2390 = vpop.xlane.xlu0 %2389
        %v2391 = vmax.f32 %v1803, %v1804
        %2392 = vmax.xlane.f32.xlu0 %v2391
        %v2393 = vpop.xlane.xlu0 %2392
        %v2394 = vmax.f32 %v1805, %v1806
        %2395 = vmax.xlane.f32.xlu0 %v2394
        %v2396 = vpop.xlane.xlu0 %2395
        %v2397 = vmax.f32 %v1807, %v1808
        %2398 = vmax.xlane.f32.xlu0 %v2397
        %v2399 = vpop.xlane.xlu0 %2398
        %v2400 = vmax.f32 %v1809, %v1810
        %2401 = vmax.xlane.f32.xlu0 %v2400
        %v2402 = vpop.xlane.xlu0 %2401
        %v2403 = vmax.f32 %v1811, %v1812
        %2404 = vmax.xlane.f32.xlu0 %v2403
        %v2405 = vpop.xlane.xlu0 %2404
        %v2406 = vmax.f32 %v1813, %v1814
        %2407 = vmax.xlane.f32.xlu0 %v2406
        %v2408 = vpop.xlane.xlu0 %2407
        %v2409 = vmax.f32 %v1815, %v1816
        %2410 = vmax.xlane.f32.xlu0 %v2409
        %v2411 = vpop.xlane.xlu0 %2410
        %v2412 = vmax.f32 %v1817, %v1818
        %2413 = vmax.xlane.f32.xlu0 %v2412
        %v2414 = vpop.xlane.xlu0 %2413
        %v2415 = vmax.f32 %v1819, %v1820
        %2416 = vmax.xlane.f32.xlu0 %v2415
        %v2417 = vpop.xlane.xlu0 %2416
        %v2418 = vmax.f32 %v1821, %v1822
        %2419 = vmax.xlane.f32.xlu0 %v2418
        %v2420 = vpop.xlane.xlu0 %2419
        %v2421 = vmax.f32 %v1823, %v1824
        %2422 = vmax.xlane.f32.xlu0 %v2421
        %v2423 = vpop.xlane.xlu0 %2422
        %v2424 = vmax.f32 %v1825, %v1826
        %2425 = vmax.xlane.f32.xlu0 %v2424
        %v2426 = vpop.xlane.xlu0 %2425
        %v2427 = vmax.f32 %v1827, %v1828
        %2428 = vmax.xlane.f32.xlu0 %v2427
        %v2429 = vpop.xlane.xlu0 %2428
        %v2430 = vmax.f32 %v1829, %v1830
        %2431 = vmax.xlane.f32.xlu0 %v2430
        %v2432 = vpop.xlane.xlu0 %2431
        %v2433 = vmax.f32 %v1831, %v1832
        %2434 = vmax.xlane.f32.xlu0 %v2433
        %v2435 = vpop.xlane.xlu0 %2434
        %v2436 = vmax.f32 %v1833, %v1834
        %2437 = vmax.xlane.f32.xlu0 %v2436
        %v2438 = vpop.xlane.xlu0 %2437
        %v2439 = vmax.f32 %v1835, %v1836
        %2440 = vmax.xlane.f32.xlu0 %v2439
        %v2441 = vpop.xlane.xlu0 %2440
        %v2442 = vmax.f32 %v1837, %v1838
        %2443 = vmax.xlane.f32.xlu0 %v2442
        %v2444 = vpop.xlane.xlu0 %2443
        %v2445 = vmax.f32 %v1839, %v1840
        %2446 = vmax.xlane.f32.xlu0 %v2445
        %v2447 = vpop.xlane.xlu0 %2446
        %v2448 = vmax.f32 %v1841, %v1842
        %2449 = vmax.xlane.f32.xlu0 %v2448
        %v2450 = vpop.xlane.xlu0 %2449
        %v2451 = vmax.f32 %v1843, %v1844
        %2452 = vmax.xlane.f32.xlu0 %v2451
        %v2453 = vpop.xlane.xlu0 %2452
        %v2454 = vmax.f32 %v1845, %v1846
        %2455 = vmax.xlane.f32.xlu0 %v2454
        %v2456 = vpop.xlane.xlu0 %2455
        %v2457 = vmax.f32 %v1847, %v1848
        %2458 = vmax.xlane.f32.xlu0 %v2457
        %v2459 = vpop.xlane.xlu0 %2458
        %v2460 = vmax.f32 %v1849, %v1850
        %2461 = vmax.xlane.f32.xlu0 %v2460
        %v2462 = vpop.xlane.xlu0 %2461
        %v2463 = vmax.f32 %v1851, %v1852
        %2464 = vmax.xlane.f32.xlu0 %v2463
        %v2465 = vpop.xlane.xlu0 %2464
        %v2466 = vmax.f32 %v1853, %v1854
        %2467 = vmax.xlane.f32.xlu0 %v2466
        %v2468 = vpop.xlane.xlu0 %2467
        %v2469 = vmax.f32 %v1855, %v1856
        %2470 = vmax.xlane.f32.xlu0 %v2469
        %v2471 = vpop.xlane.xlu0 %2470
        %v2472 = vmax.f32 %v1857, %v1858
        %2473 = vmax.xlane.f32.xlu0 %v2472
        %v2474 = vpop.xlane.xlu0 %2473
        %v2475 = vmax.f32 %v1859, %v1860
        %2476 = vmax.xlane.f32.xlu0 %v2475
        %v2477 = vpop.xlane.xlu0 %2476
        %v2478 = vmax.f32 %v1861, %v1862
        %2479 = vmax.xlane.f32.xlu0 %v2478
        %v2480 = vpop.xlane.xlu0 %2479
        %v2481 = vmax.f32 %v1863, %v1864
        %2482 = vmax.xlane.f32.xlu0 %v2481
        %v2483 = vpop.xlane.xlu0 %2482
        %v2484 = vmax.f32 %v1865, %v1866
        %2485 = vmax.xlane.f32.xlu0 %v2484
        %v2486 = vpop.xlane.xlu0 %2485
        %v2487 = vmax.f32 %v1867, %v1868
        %2488 = vmax.xlane.f32.xlu0 %v2487
        %v2489 = vpop.xlane.xlu0 %2488
        %v2490 = vmax.f32 %v1869, %v1870
        %2491 = vmax.xlane.f32.xlu0 %v2490
        %v2492 = vpop.xlane.xlu0 %2491
        %v2493 = vmax.f32 %v1871, %v1872
        %2494 = vmax.xlane.f32.xlu0 %v2493
        %v2495 = vpop.xlane.xlu0 %2494
        %v2496 = vmax.f32 %v1873, %v1874
        %2497 = vmax.xlane.f32.xlu0 %v2496
        %v2498 = vpop.xlane.xlu0 %2497
        %v2499 = vmax.f32 %v1875, %v1876
        %2500 = vmax.xlane.f32.xlu0 %v2499
        %v2501 = vpop.xlane.xlu0 %2500
        %v2502 = vmax.f32 %v1877, %v1878
        %2503 = vmax.xlane.f32.xlu0 %v2502
        %v2504 = vpop.xlane.xlu0 %2503
        %v2505 = vmax.f32 %v1879, %v1880
        %2506 = vmax.xlane.f32.xlu0 %v2505
        %v2507 = vpop.xlane.xlu0 %2506
        %v2508 = vmax.f32 %v1881, %v1882
        %2509 = vmax.xlane.f32.xlu0 %v2508
        %v2510 = vpop.xlane.xlu0 %2509
        %v2511 = vmax.f32 %v1883, %v1884
        %2512 = vmax.xlane.f32.xlu0 %v2511
        %v2513 = vpop.xlane.xlu0 %2512
        %v2514 = vmax.f32 %v1885, %v1886
        %2515 = vmax.xlane.f32.xlu0 %v2514
        %v2516 = vpop.xlane.xlu0 %2515
        %v2517 = vmax.f32 %v1887, %v1888
        %2518 = vmax.xlane.f32.xlu0 %v2517
        %v2519 = vpop.xlane.xlu0 %2518
        %v2520 = vmax.f32 %v1889, %v1890
        %2521 = vmax.xlane.f32.xlu0 %v2520
        %v2522 = vpop.xlane.xlu0 %2521
        %v2523 = vmax.f32 %v1891, %v1892
        %2524 = vmax.xlane.f32.xlu0 %v2523
        %v2525 = vpop.xlane.xlu0 %2524
        %v2526 = vmax.f32 %v1893, %v1894
        %2527 = vmax.xlane.f32.xlu0 %v2526
        %v2528 = vpop.xlane.xlu0 %2527
        %v2529 = vmax.f32 %v1895, %v1896
        %2530 = vmax.xlane.f32.xlu0 %v2529
        %v2531 = vpop.xlane.xlu0 %2530
        %v2532 = vmax.f32 %v1897, %v1898
        %2533 = vmax.xlane.f32.xlu0 %v2532
        %v2534 = vpop.xlane.xlu0 %2533
        %v2535 = vmax.f32 %v1899, %v1900
        %2536 = vmax.xlane.f32.xlu0 %v2535
        %v2537 = vpop.xlane.xlu0 %2536
        %v2538 = vmax.f32 %v1901, %v1902
        %2539 = vmax.xlane.f32.xlu0 %v2538
        %v2540 = vpop.xlane.xlu0 %2539
        %v2541 = vmax.f32 %v1903, %v1904
        %2542 = vmax.xlane.f32.xlu0 %v2541
        %v2543 = vpop.xlane.xlu0 %2542
        %v2544 = vmax.f32 %v1905, %v1906
        %2545 = vmax.xlane.f32.xlu0 %v2544
        %v2546 = vpop.xlane.xlu0 %2545
        %v2547 = vmax.f32 %v1907, %v1908
        %2548 = vmax.xlane.f32.xlu0 %v2547
        %v2549 = vpop.xlane.xlu0 %2548
        %v2550 = vmax.f32 %v2294, %v2360
        %v2551 = vmax.f32 %v2295, %v2363
        %v2552 = vmax.f32 %v2296, %v2366
        %v2553 = vmax.f32 %v2297, %v2369
        %v2554 = vmax.f32 %v2298, %v2372
        %v2555 = vmax.f32 %v2299, %v2375
        %v2556 = vmax.f32 %v2300, %v2378
        %v2557 = vmax.f32 %v2301, %v2381
        %v2558 = vmax.f32 %v2302, %v2384
        %v2559 = vmax.f32 %v2303, %v2387
        %v2560 = vmax.f32 %v2304, %v2390
        %v2561 = vmax.f32 %v2305, %v2393
        %v2562 = vmax.f32 %v2306, %v2396
        %v2563 = vmax.f32 %v2307, %v2399
        %v2564 = vmax.f32 %v2308, %v2402
        %v2565 = vmax.f32 %v2309, %v2405
        %v2566 = vmax.f32 %v2310, %v2408
        %v2567 = vmax.f32 %v2311, %v2411
        %v2568 = vmax.f32 %v2312, %v2414
        %v2569 = vmax.f32 %v2313, %v2417
        %v2570 = vmax.f32 %v2314, %v2420
        %v2571 = vmax.f32 %v2315, %v2423
        %v2572 = vmax.f32 %v2316, %v2426
        %v2573 = vmax.f32 %v2317, %v2429
        %v2574 = vmax.f32 %v2318, %v2432
        %v2575 = vmax.f32 %v2319, %v2435
        %v2576 = vmax.f32 %v2320, %v2438
        %v2577 = vmax.f32 %v2321, %v2441
        %v2578 = vmax.f32 %v2322, %v2444
        %v2579 = vmax.f32 %v2323, %v2447
        %v2580 = vmax.f32 %v2324, %v2450
        %v2581 = vmax.f32 %v2325, %v2453
        %v2582 = vmax.f32 %v2326, %v2456
        %v2583 = vmax.f32 %v2327, %v2459
        %v2584 = vmax.f32 %v2328, %v2462
        %v2585 = vmax.f32 %v2329, %v2465
        %v2586 = vmax.f32 %v2330, %v2468
        %v2587 = vmax.f32 %v2331, %v2471
        %v2588 = vmax.f32 %v2332, %v2474
        %v2589 = vmax.f32 %v2333, %v2477
        %v2590 = vmax.f32 %v2334, %v2480
        %v2591 = vmax.f32 %v2335, %v2483
        %v2592 = vmax.f32 %v2336, %v2486
        %v2593 = vmax.f32 %v2337, %v2489
        %v2594 = vmax.f32 %v2338, %v2492
        %v2595 = vmax.f32 %v2339, %v2495
        %v2596 = vmax.f32 %v2340, %v2498
        %v2597 = vmax.f32 %v2341, %v2501
        %v2598 = vmax.f32 %v2342, %v2504
        %v2599 = vmax.f32 %v2343, %v2507
        %v2600 = vmax.f32 %v2344, %v2510
        %v2601 = vmax.f32 %v2345, %v2513
        %v2602 = vmax.f32 %v2346, %v2516
        %v2603 = vmax.f32 %v2347, %v2519
        %v2604 = vmax.f32 %v2348, %v2522
        %v2605 = vmax.f32 %v2349, %v2525
        %v2606 = vmax.f32 %v2350, %v2528
        %v2607 = vmax.f32 %v2351, %v2531
        %v2608 = vmax.f32 %v2352, %v2534
        %v2609 = vmax.f32 %v2353, %v2537
        %v2610 = vmax.f32 %v2354, %v2540
        %v2611 = vmax.f32 %v2355, %v2543
        %v2612 = vmax.f32 %v2356, %v2546
        %v2613 = vmax.f32 %v2357, %v2549
        %2614 = vst.msk [vmem:[#allocation3] sm:$0xff] %vm2229, %v2550
        %2615 = vst.msk [vmem:[#allocation3 + $0x8] sm:$0xff] %vm2229, %v2551
        %2616 = vst.msk [vmem:[#allocation3 + $0x10] sm:$0xff] %vm2229, %v2552
        %2617 = vst.msk [vmem:[#allocation3 + $0x18] sm:$0xff] %vm2229, %v2553
        %2618 = vst.msk [vmem:[#allocation3 + $0x20] sm:$0xff] %vm2229, %v2554
        %2619 = vst.msk [vmem:[#allocation3 + $0x28] sm:$0xff] %vm2229, %v2555
        %2620 = vst.msk [vmem:[#allocation3 + $0x30] sm:$0xff] %vm2229, %v2556
        %2621 = vst.msk [vmem:[#allocation3 + $0x38] sm:$0xff] %vm2229, %v2557
        %2622 = vst.msk [vmem:[#allocation3 + $0x40] sm:$0xff] %vm2229, %v2558
        %2623 = vst.msk [vmem:[#allocation3 + $0x48] sm:$0xff] %vm2229, %v2559
        %2624 = vst.msk [vmem:[#allocation3 + $0x50] sm:$0xff] %vm2229, %v2560
        %2625 = vst.msk [vmem:[#allocation3 + $0x58] sm:$0xff] %vm2229, %v2561
        %2626 = vst.msk [vmem:[#allocation3 + $0x60] sm:$0xff] %vm2229, %v2562
        %2627 = vst.msk [vmem:[#allocation3 + $0x68] sm:$0xff] %vm2229, %v2563
        %2628 = vst.msk [vmem:[#allocation3 + $0x70] sm:$0xff] %vm2229, %v2564
        %2629 = vst.msk [vmem:[#allocation3 + $0x78] sm:$0xff] %vm2229, %v2565
        %2630 = vst.msk [vmem:[#allocation3 + $0x80] sm:$0xff] %vm2229, %v2566
        %2631 = vst.msk [vmem:[#allocation3 + $0x88] sm:$0xff] %vm2229, %v2567
        %2632 = vst.msk [vmem:[#allocation3 + $0x90] sm:$0xff] %vm2229, %v2568
        %2633 = vst.msk [vmem:[#allocation3 + $0x98] sm:$0xff] %vm2229, %v2569
        %2634 = vst.msk [vmem:[#allocation3 + $0xa0] sm:$0xff] %vm2229, %v2570
        %2635 = vst.msk [vmem:[#allocation3 + $0xa8] sm:$0xff] %vm2229, %v2571
        %2636 = vst.msk [vmem:[#allocation3 + $0xb0] sm:$0xff] %vm2229, %v2572
        %2637 = vst.msk [vmem:[#allocation3 + $0xb8] sm:$0xff] %vm2229, %v2573
        %2638 = vst.msk [vmem:[#allocation3 + $0xc0] sm:$0xff] %vm2229, %v2574
        %2639 = vst.msk [vmem:[#allocation3 + $0xc8] sm:$0xff] %vm2229, %v2575
        %2640 = vst.msk [vmem:[#allocation3 + $0xd0] sm:$0xff] %vm2229, %v2576
        %2641 = vst.msk [vmem:[#allocation3 + $0xd8] sm:$0xff] %vm2229, %v2577
        %2642 = vst.msk [vmem:[#allocation3 + $0xe0] sm:$0xff] %vm2229, %v2578
        %2643 = vst.msk [vmem:[#allocation3 + $0xe8] sm:$0xff] %vm2229, %v2579
        %2644 = vst.msk [vmem:[#allocation3 + $0xf0] sm:$0xff] %vm2229, %v2580
        %2645 = vst.msk [vmem:[#allocation3 + $0xf8] sm:$0xff] %vm2229, %v2581
        %2646 = vst.msk [vmem:[#allocation3 + $0x100] sm:$0xff] %vm2229, %v2582
        %2647 = vst.msk [vmem:[#allocation3 + $0x108] sm:$0xff] %vm2229, %v2583
        %2648 = vst.msk [vmem:[#allocation3 + $0x110] sm:$0xff] %vm2229, %v2584
        %2649 = vst.msk [vmem:[#allocation3 + $0x118] sm:$0xff] %vm2229, %v2585
        %2650 = vst.msk [vmem:[#allocation3 + $0x120] sm:$0xff] %vm2229, %v2586
        %2651 = vst.msk [vmem:[#allocation3 + $0x128] sm:$0xff] %vm2229, %v2587
        %2652 = vst.msk [vmem:[#allocation3 + $0x130] sm:$0xff] %vm2229, %v2588
        %2653 = vst.msk [vmem:[#allocation3 + $0x138] sm:$0xff] %vm2229, %v2589
        %2654 = vst.msk [vmem:[#allocation3 + $0x140] sm:$0xff] %vm2229, %v2590
        %2655 = vst.msk [vmem:[#allocation3 + $0x148] sm:$0xff] %vm2229, %v2591
        %2656 = vst.msk [vmem:[#allocation3 + $0x150] sm:$0xff] %vm2229, %v2592
        %2657 = vst.msk [vmem:[#allocation3 + $0x158] sm:$0xff] %vm2229, %v2593
        %2658 = vst.msk [vmem:[#allocation3 + $0x160] sm:$0xff] %vm2229, %v2594
        %2659 = vst.msk [vmem:[#allocation3 + $0x168] sm:$0xff] %vm2229, %v2595
        %2660 = vst.msk [vmem:[#allocation3 + $0x170] sm:$0xff] %vm2229, %v2596
        %2661 = vst.msk [vmem:[#allocation3 + $0x178] sm:$0xff] %vm2229, %v2597
        %2662 = vst.msk [vmem:[#allocation3 + $0x180] sm:$0xff] %vm2229, %v2598
        %2663 = vst.msk [vmem:[#allocation3 + $0x188] sm:$0xff] %vm2229, %v2599
        %2664 = vst.msk [vmem:[#allocation3 + $0x190] sm:$0xff] %vm2229, %v2600
        %2665 = vst.msk [vmem:[#allocation3 + $0x198] sm:$0xff] %vm2229, %v2601
        %2666 = vst.msk [vmem:[#allocation3 + $0x1a0] sm:$0xff] %vm2229, %v2602
        %2667 = vst.msk [vmem:[#allocation3 + $0x1a8] sm:$0xff] %vm2229, %v2603
        %2668 = vst.msk [vmem:[#allocation3 + $0x1b0] sm:$0xff] %vm2229, %v2604
        %2669 = vst.msk [vmem:[#allocation3 + $0x1b8] sm:$0xff] %vm2229, %v2605
        %2670 = vst.msk [vmem:[#allocation3 + $0x1c0] sm:$0xff] %vm2229, %v2606
        %2671 = vst.msk [vmem:[#allocation3 + $0x1c8] sm:$0xff] %vm2229, %v2607
        %2672 = vst.msk [vmem:[#allocation3 + $0x1d0] sm:$0xff] %vm2229, %v2608
        %2673 = vst.msk [vmem:[#allocation3 + $0x1d8] sm:$0xff] %vm2229, %v2609
        %2674 = vst.msk [vmem:[#allocation3 + $0x1e0] sm:$0xff] %vm2229, %v2610
        %2675 = vst.msk [vmem:[#allocation3 + $0x1e8] sm:$0xff] %vm2229, %v2611
        %2676 = vst.msk [vmem:[#allocation3 + $0x1f0] sm:$0xff] %vm2229, %v2612
        %2677 = vst.msk [vmem:[#allocation3 + $0x1f8] sm:$0xff] %vm2229, %v2613
        %p2678 = scmp.eq.s32.totalorder %s23, 1
        // Predicated region
        $region72: #{tpu_custom_call.1} parent=62 // pred_check
          %p2679 = pneg %p2678
        $region73: #{tpu_custom_call.1} parent=62 // pred_check_branch
          %2681 = sbr.rel (%p2679) target = $region75
        $region74: #{tpu_custom_call.1} parent=62 // pred_region
          %v2682 = vld [vmem:[%s424] sm:$0xff]
          %v2683 = vld [vmem:[%s424 + $0x8] sm:$0xff]
          %v2684 = vld [vmem:[%s424 + $0x10] sm:$0xff]
          %v2685 = vld [vmem:[%s424 + $0x18] sm:$0xff]
          %v2686 = vld [vmem:[%s424 + $0x20] sm:$0xff]
          %v2687 = vld [vmem:[%s424 + $0x28] sm:$0xff]
          %v2688 = vld [vmem:[%s424 + $0x30] sm:$0xff]
          %v2689 = vld [vmem:[%s424 + $0x38] sm:$0xff]
          %v2690 = vld [vmem:[%s424 + $0x40] sm:$0xff]
          %v2691 = vld [vmem:[%s424 + $0x48] sm:$0xff]
          %v2692 = vld [vmem:[%s424 + $0x50] sm:$0xff]
          %v2693 = vld [vmem:[%s424 + $0x58] sm:$0xff]
          %v2694 = vld [vmem:[%s424 + $0x60] sm:$0xff]
          %v2695 = vld [vmem:[%s424 + $0x68] sm:$0xff]
          %v2696 = vld [vmem:[%s424 + $0x70] sm:$0xff]
          %v2697 = vld [vmem:[%s424 + $0x78] sm:$0xff]
          %v2698 = vld [vmem:[%s424 + $0x80] sm:$0xff]
          %v2699 = vld [vmem:[%s424 + $0x88] sm:$0xff]
          %v2700 = vld [vmem:[%s424 + $0x90] sm:$0xff]
          %v2701 = vld [vmem:[%s424 + $0x98] sm:$0xff]
          %v2702 = vld [vmem:[%s424 + $0xa0] sm:$0xff]
          %v2703 = vld [vmem:[%s424 + $0xa8] sm:$0xff]
          %v2704 = vld [vmem:[%s424 + $0xb0] sm:$0xff]
          %v2705 = vld [vmem:[%s424 + $0xb8] sm:$0xff]
          %v2706 = vld [vmem:[%s424 + $0xc0] sm:$0xff]
          %v2707 = vld [vmem:[%s424 + $0xc8] sm:$0xff]
          %v2708 = vld [vmem:[%s424 + $0xd0] sm:$0xff]
          %v2709 = vld [vmem:[%s424 + $0xd8] sm:$0xff]
          %v2710 = vld [vmem:[%s424 + $0xe0] sm:$0xff]
          %v2711 = vld [vmem:[%s424 + $0xe8] sm:$0xff]
          %v2712 = vld [vmem:[%s424 + $0xf0] sm:$0xff]
          %v2713 = vld [vmem:[%s424 + $0xf8] sm:$0xff]
          %v2714 = vld [vmem:[%s424 + $0x100] sm:$0xff]
          %v2715 = vld [vmem:[%s424 + $0x108] sm:$0xff]
          %v2716 = vld [vmem:[%s424 + $0x110] sm:$0xff]
          %v2717 = vld [vmem:[%s424 + $0x118] sm:$0xff]
          %v2718 = vld [vmem:[%s424 + $0x120] sm:$0xff]
          %v2719 = vld [vmem:[%s424 + $0x128] sm:$0xff]
          %v2720 = vld [vmem:[%s424 + $0x130] sm:$0xff]
          %v2721 = vld [vmem:[%s424 + $0x138] sm:$0xff]
          %v2722 = vld [vmem:[%s424 + $0x140] sm:$0xff]
          %v2723 = vld [vmem:[%s424 + $0x148] sm:$0xff]
          %v2724 = vld [vmem:[%s424 + $0x150] sm:$0xff]
          %v2725 = vld [vmem:[%s424 + $0x158] sm:$0xff]
          %v2726 = vld [vmem:[%s424 + $0x160] sm:$0xff]
          %v2727 = vld [vmem:[%s424 + $0x168] sm:$0xff]
          %v2728 = vld [vmem:[%s424 + $0x170] sm:$0xff]
          %v2729 = vld [vmem:[%s424 + $0x178] sm:$0xff]
          %v2730 = vld [vmem:[%s424 + $0x180] sm:$0xff]
          %v2731 = vld [vmem:[%s424 + $0x188] sm:$0xff]
          %v2732 = vld [vmem:[%s424 + $0x190] sm:$0xff]
          %v2733 = vld [vmem:[%s424 + $0x198] sm:$0xff]
          %v2734 = vld [vmem:[%s424 + $0x1a0] sm:$0xff]
          %v2735 = vld [vmem:[%s424 + $0x1a8] sm:$0xff]
          %v2736 = vld [vmem:[%s424 + $0x1b0] sm:$0xff]
          %v2737 = vld [vmem:[%s424 + $0x1b8] sm:$0xff]
          %v2738 = vld [vmem:[%s424 + $0x1c0] sm:$0xff]
          %v2739 = vld [vmem:[%s424 + $0x1c8] sm:$0xff]
          %v2740 = vld [vmem:[%s424 + $0x1d0] sm:$0xff]
          %v2741 = vld [vmem:[%s424 + $0x1d8] sm:$0xff]
          %v2742 = vld [vmem:[%s424 + $0x1e0] sm:$0xff]
          %v2743 = vld [vmem:[%s424 + $0x1e8] sm:$0xff]
          %v2744 = vld [vmem:[%s424 + $0x1f0] sm:$0xff]
          %v2745 = vld [vmem:[%s424 + $0x1f8] sm:$0xff]
          %v2746 = vld [vmem:[#allocation2] sm:$0xff]
          %v2747 = vld [vmem:[#allocation2 + $0x8] sm:$0xff]
          %v2748 = vld [vmem:[#allocation2 + $0x10] sm:$0xff]
          %v2749 = vld [vmem:[#allocation2 + $0x18] sm:$0xff]
          %v2750 = vld [vmem:[#allocation2 + $0x20] sm:$0xff]
          %v2751 = vld [vmem:[#allocation2 + $0x28] sm:$0xff]
          %v2752 = vld [vmem:[#allocation2 + $0x30] sm:$0xff]
          %v2753 = vld [vmem:[#allocation2 + $0x38] sm:$0xff]
          %v2754 = vld [vmem:[#allocation2 + $0x40] sm:$0xff]
          %v2755 = vld [vmem:[#allocation2 + $0x48] sm:$0xff]
          %v2756 = vld [vmem:[#allocation2 + $0x50] sm:$0xff]
          %v2757 = vld [vmem:[#allocation2 + $0x58] sm:$0xff]
          %v2758 = vld [vmem:[#allocation2 + $0x60] sm:$0xff]
          %v2759 = vld [vmem:[#allocation2 + $0x68] sm:$0xff]
          %v2760 = vld [vmem:[#allocation2 + $0x70] sm:$0xff]
          %v2761 = vld [vmem:[#allocation2 + $0x78] sm:$0xff]
          %v2762 = vld [vmem:[#allocation2 + $0x80] sm:$0xff]
          %v2763 = vld [vmem:[#allocation2 + $0x88] sm:$0xff]
          %v2764 = vld [vmem:[#allocation2 + $0x90] sm:$0xff]
          %v2765 = vld [vmem:[#allocation2 + $0x98] sm:$0xff]
          %v2766 = vld [vmem:[#allocation2 + $0xa0] sm:$0xff]
          %v2767 = vld [vmem:[#allocation2 + $0xa8] sm:$0xff]
          %v2768 = vld [vmem:[#allocation2 + $0xb0] sm:$0xff]
          %v2769 = vld [vmem:[#allocation2 + $0xb8] sm:$0xff]
          %v2770 = vld [vmem:[#allocation2 + $0xc0] sm:$0xff]
          %v2771 = vld [vmem:[#allocation2 + $0xc8] sm:$0xff]
          %v2772 = vld [vmem:[#allocation2 + $0xd0] sm:$0xff]
          %v2773 = vld [vmem:[#allocation2 + $0xd8] sm:$0xff]
          %v2774 = vld [vmem:[#allocation2 + $0xe0] sm:$0xff]
          %v2775 = vld [vmem:[#allocation2 + $0xe8] sm:$0xff]
          %v2776 = vld [vmem:[#allocation2 + $0xf0] sm:$0xff]
          %v2777 = vld [vmem:[#allocation2 + $0xf8] sm:$0xff]
          %v2778 = vld [vmem:[#allocation2 + $0x100] sm:$0xff]
          %v2779 = vld [vmem:[#allocation2 + $0x108] sm:$0xff]
          %v2780 = vld [vmem:[#allocation2 + $0x110] sm:$0xff]
          %v2781 = vld [vmem:[#allocation2 + $0x118] sm:$0xff]
          %v2782 = vld [vmem:[#allocation2 + $0x120] sm:$0xff]
          %v2783 = vld [vmem:[#allocation2 + $0x128] sm:$0xff]
          %v2784 = vld [vmem:[#allocation2 + $0x130] sm:$0xff]
          %v2785 = vld [vmem:[#allocation2 + $0x138] sm:$0xff]
          %v2786 = vld [vmem:[#allocation2 + $0x140] sm:$0xff]
          %v2787 = vld [vmem:[#allocation2 + $0x148] sm:$0xff]
          %v2788 = vld [vmem:[#allocation2 + $0x150] sm:$0xff]
          %v2789 = vld [vmem:[#allocation2 + $0x158] sm:$0xff]
          %v2790 = vld [vmem:[#allocation2 + $0x160] sm:$0xff]
          %v2791 = vld [vmem:[#allocation2 + $0x168] sm:$0xff]
          %v2792 = vld [vmem:[#allocation2 + $0x170] sm:$0xff]
          %v2793 = vld [vmem:[#allocation2 + $0x178] sm:$0xff]
          %v2794 = vld [vmem:[#allocation2 + $0x180] sm:$0xff]
          %v2795 = vld [vmem:[#allocation2 + $0x188] sm:$0xff]
          %v2796 = vld [vmem:[#allocation2 + $0x190] sm:$0xff]
          %v2797 = vld [vmem:[#allocation2 + $0x198] sm:$0xff]
          %v2798 = vld [vmem:[#allocation2 + $0x1a0] sm:$0xff]
          %v2799 = vld [vmem:[#allocation2 + $0x1a8] sm:$0xff]
          %v2800 = vld [vmem:[#allocation2 + $0x1b0] sm:$0xff]
          %v2801 = vld [vmem:[#allocation2 + $0x1b8] sm:$0xff]
          %v2802 = vld [vmem:[#allocation2 + $0x1c0] sm:$0xff]
          %v2803 = vld [vmem:[#allocation2 + $0x1c8] sm:$0xff]
          %v2804 = vld [vmem:[#allocation2 + $0x1d0] sm:$0xff]
          %v2805 = vld [vmem:[#allocation2 + $0x1d8] sm:$0xff]
          %v2806 = vld [vmem:[#allocation2 + $0x1e0] sm:$0xff]
          %v2807 = vld [vmem:[#allocation2 + $0x1e8] sm:$0xff]
          %v2808 = vld [vmem:[#allocation2 + $0x1f0] sm:$0xff]
          %v2809 = vld [vmem:[#allocation2 + $0x1f8] sm:$0xff]
          %v2810 = vsub.f32 %v2746, %v2682
          %v2811 = vsub.f32 %v2747, %v2683
          %v2812 = vsub.f32 %v2748, %v2684
          %v2813 = vsub.f32 %v2749, %v2685
          %v2814 = vsub.f32 %v2750, %v2686
          %v2815 = vsub.f32 %v2751, %v2687
          %v2816 = vsub.f32 %v2752, %v2688
          %v2817 = vsub.f32 %v2753, %v2689
          %v2818 = vsub.f32 %v2754, %v2690
          %v2819 = vsub.f32 %v2755, %v2691
          %v2820 = vsub.f32 %v2756, %v2692
          %v2821 = vsub.f32 %v2757, %v2693
          %v2822 = vsub.f32 %v2758, %v2694
          %v2823 = vsub.f32 %v2759, %v2695
          %v2824 = vsub.f32 %v2760, %v2696
          %v2825 = vsub.f32 %v2761, %v2697
          %v2826 = vsub.f32 %v2762, %v2698
          %v2827 = vsub.f32 %v2763, %v2699
          %v2828 = vsub.f32 %v2764, %v2700
          %v2829 = vsub.f32 %v2765, %v2701
          %v2830 = vsub.f32 %v2766, %v2702
          %v2831 = vsub.f32 %v2767, %v2703
          %v2832 = vsub.f32 %v2768, %v2704
          %v2833 = vsub.f32 %v2769, %v2705
          %v2834 = vsub.f32 %v2770, %v2706
          %v2835 = vsub.f32 %v2771, %v2707
          %v2836 = vsub.f32 %v2772, %v2708
          %v2837 = vsub.f32 %v2773, %v2709
          %v2838 = vsub.f32 %v2774, %v2710
          %v2839 = vsub.f32 %v2775, %v2711
          %v2840 = vsub.f32 %v2776, %v2712
          %v2841 = vsub.f32 %v2777, %v2713
          %v2842 = vsub.f32 %v2778, %v2714
          %v2843 = vsub.f32 %v2779, %v2715
          %v2844 = vsub.f32 %v2780, %v2716
          %v2845 = vsub.f32 %v2781, %v2717
          %v2846 = vsub.f32 %v2782, %v2718
          %v2847 = vsub.f32 %v2783, %v2719
          %v2848 = vsub.f32 %v2784, %v2720
          %v2849 = vsub.f32 %v2785, %v2721
          %v2850 = vsub.f32 %v2786, %v2722
          %v2851 = vsub.f32 %v2787, %v2723
          %v2852 = vsub.f32 %v2788, %v2724
          %v2853 = vsub.f32 %v2789, %v2725
          %v2854 = vsub.f32 %v2790, %v2726
          %v2855 = vsub.f32 %v2791, %v2727
          %v2856 = vsub.f32 %v2792, %v2728
          %v2857 = vsub.f32 %v2793, %v2729
          %v2858 = vsub.f32 %v2794, %v2730
          %v2859 = vsub.f32 %v2795, %v2731
          %v2860 = vsub.f32 %v2796, %v2732
          %v2861 = vsub.f32 %v2797, %v2733
          %v2862 = vsub.f32 %v2798, %v2734
          %v2863 = vsub.f32 %v2799, %v2735
          %v2864 = vsub.f32 %v2800, %v2736
          %v2865 = vsub.f32 %v2801, %v2737
          %v2866 = vsub.f32 %v2802, %v2738
          %v2867 = vsub.f32 %v2803, %v2739
          %v2868 = vsub.f32 %v2804, %v2740
          %v2869 = vsub.f32 %v2805, %v2741
          %v2870 = vsub.f32 %v2806, %v2742
          %v2871 = vsub.f32 %v2807, %v2743
          %v2872 = vsub.f32 %v2808, %v2744
          %v2873 = vsub.f32 %v2809, %v2745
          %v2874 = vmul.f32 %v2810, -2.0
          %v2875 = vmul.f32 %v2811, -2.0
          %v2876 = vmul.f32 %v2812, -2.0
          %v2877 = vmul.f32 %v2813, -2.0
          %v2878 = vmul.f32 %v2814, -2.0
          %v2879 = vmul.f32 %v2815, -2.0
          %v2880 = vmul.f32 %v2816, -2.0
          %v2881 = vmul.f32 %v2817, -2.0
          %v2882 = vmul.f32 %v2818, -2.0
          %v2883 = vmul.f32 %v2819, -2.0
          %v2884 = vmul.f32 %v2820, -2.0
          %v2885 = vmul.f32 %v2821, -2.0
          %v2886 = vmul.f32 %v2822, -2.0
          %v2887 = vmul.f32 %v2823, -2.0
          %v2888 = vmul.f32 %v2824, -2.0
          %v2889 = vmul.f32 %v2825, -2.0
          %v2890 = vmul.f32 %v2826, -2.0
          %v2891 = vmul.f32 %v2827, -2.0
          %v2892 = vmul.f32 %v2828, -2.0
          %v2893 = vmul.f32 %v2829, -2.0
          %v2894 = vmul.f32 %v2830, -2.0
          %v2895 = vmul.f32 %v2831, -2.0
          %v2896 = vmul.f32 %v2832, -2.0
          %v2897 = vmul.f32 %v2833, -2.0
          %v2898 = vmul.f32 %v2834, -2.0
          %v2899 = vmul.f32 %v2835, -2.0
          %v2900 = vmul.f32 %v2836, -2.0
          %v2901 = vmul.f32 %v2837, -2.0
          %v2902 = vmul.f32 %v2838, -2.0
          %v2903 = vmul.f32 %v2839, -2.0
          %v2904 = vmul.f32 %v2840, -2.0
          %v2905 = vmul.f32 %v2841, -2.0
          %v2906 = vmul.f32 %v2842, -2.0
          %v2907 = vmul.f32 %v2843, -2.0
          %v2908 = vmul.f32 %v2844, -2.0
          %v2909 = vmul.f32 %v2845, -2.0
          %v2910 = vmul.f32 %v2846, -2.0
          %v2911 = vmul.f32 %v2847, -2.0
          %v2912 = vmul.f32 %v2848, -2.0
          %v2913 = vmul.f32 %v2849, -2.0
          %v2914 = vmul.f32 %v2850, -2.0
          %v2915 = vmul.f32 %v2851, -2.0
          %v2916 = vmul.f32 %v2852, -2.0
          %v2917 = vmul.f32 %v2853, -2.0
          %v2918 = vmul.f32 %v2854, -2.0
          %v2919 = vmul.f32 %v2855, -2.0
          %v2920 = vmul.f32 %v2856, -2.0
          %v2921 = vmul.f32 %v2857, -2.0
          %v2922 = vmul.f32 %v2858, -2.0
          %v2923 = vmul.f32 %v2859, -2.0
          %v2924 = vmul.f32 %v2860, -2.0
          %v2925 = vmul.f32 %v2861, -2.0
          %v2926 = vmul.f32 %v2862, -2.0
          %v2927 = vmul.f32 %v2863, -2.0
          %v2928 = vmul.f32 %v2864, -2.0
          %v2929 = vmul.f32 %v2865, -2.0
          %v2930 = vmul.f32 %v2866, -2.0
          %v2931 = vmul.f32 %v2867, -2.0
          %v2932 = vmul.f32 %v2868, -2.0
          %v2933 = vmul.f32 %v2869, -2.0
          %v2934 = vmul.f32 %v2870, -2.0
          %v2935 = vmul.f32 %v2871, -2.0
          %v2936 = vmul.f32 %v2872, -2.0
          %v2937 = vmul.f32 %v2873, -2.0
          %v2938 = vmax.f32 %v2874, 0.0
          %v2939 = vmax.f32 %v2875, 0.0
          %v2940 = vmax.f32 %v2876, 0.0
          %v2941 = vmax.f32 %v2877, 0.0
          %v2942 = vmax.f32 %v2878, 0.0
          %v2943 = vmax.f32 %v2879, 0.0
          %v2944 = vmax.f32 %v2880, 0.0
          %v2945 = vmax.f32 %v2881, 0.0
          %v2946 = vmax.f32 %v2882, 0.0
          %v2947 = vmax.f32 %v2883, 0.0
          %v2948 = vmax.f32 %v2884, 0.0
          %v2949 = vmax.f32 %v2885, 0.0
          %v2950 = vmax.f32 %v2886, 0.0
          %v2951 = vmax.f32 %v2887, 0.0
          %v2952 = vmax.f32 %v2888, 0.0
          %v2953 = vmax.f32 %v2889, 0.0
          %v2954 = vmax.f32 %v2890, 0.0
          %v2955 = vmax.f32 %v2891, 0.0
          %v2956 = vmax.f32 %v2892, 0.0
          %v2957 = vmax.f32 %v2893, 0.0
          %v2958 = vmax.f32 %v2894, 0.0
          %v2959 = vmax.f32 %v2895, 0.0
          %v2960 = vmax.f32 %v2896, 0.0
          %v2961 = vmax.f32 %v2897, 0.0
          %v2962 = vmax.f32 %v2898, 0.0
          %v2963 = vmax.f32 %v2899, 0.0
          %v2964 = vmax.f32 %v2900, 0.0
          %v2965 = vmax.f32 %v2901, 0.0
          %v2966 = vmax.f32 %v2902, 0.0
          %v2967 = vmax.f32 %v2903, 0.0
          %v2968 = vmax.f32 %v2904, 0.0
          %v2969 = vmax.f32 %v2905, 0.0
          %v2970 = vmax.f32 %v2906, 0.0
          %v2971 = vmax.f32 %v2907, 0.0
          %v2972 = vmax.f32 %v2908, 0.0
          %v2973 = vmax.f32 %v2909, 0.0
          %v2974 = vmax.f32 %v2910, 0.0
          %v2975 = vmax.f32 %v2911, 0.0
          %v2976 = vmax.f32 %v2912, 0.0
          %v2977 = vmax.f32 %v2913, 0.0
          %v2978 = vmax.f32 %v2914, 0.0
          %v2979 = vmax.f32 %v2915, 0.0
          %v2980 = vmax.f32 %v2916, 0.0
          %v2981 = vmax.f32 %v2917, 0.0
          %v2982 = vmax.f32 %v2918, 0.0
          %v2983 = vmax.f32 %v2919, 0.0
          %v2984 = vmax.f32 %v2920, 0.0
          %v2985 = vmax.f32 %v2921, 0.0
          %v2986 = vmax.f32 %v2922, 0.0
          %v2987 = vmax.f32 %v2923, 0.0
          %v2988 = vmax.f32 %v2924, 0.0
          %v2989 = vmax.f32 %v2925, 0.0
          %v2990 = vmax.f32 %v2926, 0.0
          %v2991 = vmax.f32 %v2927, 0.0
          %v2992 = vmax.f32 %v2928, 0.0
          %v2993 = vmax.f32 %v2929, 0.0
          %v2994 = vmax.f32 %v2930, 0.0
          %v2995 = vmax.f32 %v2931, 0.0
          %v2996 = vmax.f32 %v2932, 0.0
          %v2997 = vmax.f32 %v2933, 0.0
          %v2998 = vmax.f32 %v2934, 0.0
          %v2999 = vmax.f32 %v2935, 0.0
          %v3000 = vmax.f32 %v2936, 0.0
          %v3001 = vmax.f32 %v2937, 0.0
          %v3002 = vld [vmem:[#allocation3] sm:$0xff]
          %v3003 = vld [vmem:[#allocation3 + $0x8] sm:$0xff]
          %v3004 = vld [vmem:[#allocation3 + $0x10] sm:$0xff]
          %v3005 = vld [vmem:[#allocation3 + $0x18] sm:$0xff]
          %v3006 = vld [vmem:[#allocation3 + $0x20] sm:$0xff]
          %v3007 = vld [vmem:[#allocation3 + $0x28] sm:$0xff]
          %v3008 = vld [vmem:[#allocation3 + $0x30] sm:$0xff]
          %v3009 = vld [vmem:[#allocation3 + $0x38] sm:$0xff]
          %v3010 = vld [vmem:[#allocation3 + $0x40] sm:$0xff]
          %v3011 = vld [vmem:[#allocation3 + $0x48] sm:$0xff]
          %v3012 = vld [vmem:[#allocation3 + $0x50] sm:$0xff]
          %v3013 = vld [vmem:[#allocation3 + $0x58] sm:$0xff]
          %v3014 = vld [vmem:[#allocation3 + $0x60] sm:$0xff]
          %v3015 = vld [vmem:[#allocation3 + $0x68] sm:$0xff]
          %v3016 = vld [vmem:[#allocation3 + $0x70] sm:$0xff]
          %v3017 = vld [vmem:[#allocation3 + $0x78] sm:$0xff]
          %v3018 = vld [vmem:[#allocation3 + $0x80] sm:$0xff]
          %v3019 = vld [vmem:[#allocation3 + $0x88] sm:$0xff]
          %v3020 = vld [vmem:[#allocation3 + $0x90] sm:$0xff]
          %v3021 = vld [vmem:[#allocation3 + $0x98] sm:$0xff]
          %v3022 = vld [vmem:[#allocation3 + $0xa0] sm:$0xff]
          %v3023 = vld [vmem:[#allocation3 + $0xa8] sm:$0xff]
          %v3024 = vld [vmem:[#allocation3 + $0xb0] sm:$0xff]
          %v3025 = vld [vmem:[#allocation3 + $0xb8] sm:$0xff]
          %v3026 = vld [vmem:[#allocation3 + $0xc0] sm:$0xff]
          %v3027 = vld [vmem:[#allocation3 + $0xc8] sm:$0xff]
          %v3028 = vld [vmem:[#allocation3 + $0xd0] sm:$0xff]
          %v3029 = vld [vmem:[#allocation3 + $0xd8] sm:$0xff]
          %v3030 = vld [vmem:[#allocation3 + $0xe0] sm:$0xff]
          %v3031 = vld [vmem:[#allocation3 + $0xe8] sm:$0xff]
          %v3032 = vld [vmem:[#allocation3 + $0xf0] sm:$0xff]
          %v3033 = vld [vmem:[#allocation3 + $0xf8] sm:$0xff]
          %v3034 = vld [vmem:[#allocation3 + $0x100] sm:$0xff]
          %v3035 = vld [vmem:[#allocation3 + $0x108] sm:$0xff]
          %v3036 = vld [vmem:[#allocation3 + $0x110] sm:$0xff]
          %v3037 = vld [vmem:[#allocation3 + $0x118] sm:$0xff]
          %v3038 = vld [vmem:[#allocation3 + $0x120] sm:$0xff]
          %v3039 = vld [vmem:[#allocation3 + $0x128] sm:$0xff]
          %v3040 = vld [vmem:[#allocation3 + $0x130] sm:$0xff]
          %v3041 = vld [vmem:[#allocation3 + $0x138] sm:$0xff]
          %v3042 = vld [vmem:[#allocation3 + $0x140] sm:$0xff]
          %v3043 = vld [vmem:[#allocation3 + $0x148] sm:$0xff]
          %v3044 = vld [vmem:[#allocation3 + $0x150] sm:$0xff]
          %v3045 = vld [vmem:[#allocation3 + $0x158] sm:$0xff]
          %v3046 = vld [vmem:[#allocation3 + $0x160] sm:$0xff]
          %v3047 = vld [vmem:[#allocation3 + $0x168] sm:$0xff]
          %v3048 = vld [vmem:[#allocation3 + $0x170] sm:$0xff]
          %v3049 = vld [vmem:[#allocation3 + $0x178] sm:$0xff]
          %v3050 = vld [vmem:[#allocation3 + $0x180] sm:$0xff]
          %v3051 = vld [vmem:[#allocation3 + $0x188] sm:$0xff]
          %v3052 = vld [vmem:[#allocation3 + $0x190] sm:$0xff]
          %v3053 = vld [vmem:[#allocation3 + $0x198] sm:$0xff]
          %v3054 = vld [vmem:[#allocation3 + $0x1a0] sm:$0xff]
          %v3055 = vld [vmem:[#allocation3 + $0x1a8] sm:$0xff]
          %v3056 = vld [vmem:[#allocation3 + $0x1b0] sm:$0xff]
          %v3057 = vld [vmem:[#allocation3 + $0x1b8] sm:$0xff]
          %v3058 = vld [vmem:[#allocation3 + $0x1c0] sm:$0xff]
          %v3059 = vld [vmem:[#allocation3 + $0x1c8] sm:$0xff]
          %v3060 = vld [vmem:[#allocation3 + $0x1d0] sm:$0xff]
          %v3061 = vld [vmem:[#allocation3 + $0x1d8] sm:$0xff]
          %v3062 = vld [vmem:[#allocation3 + $0x1e0] sm:$0xff]
          %v3063 = vld [vmem:[#allocation3 + $0x1e8] sm:$0xff]
          %v3064 = vld [vmem:[#allocation3 + $0x1f0] sm:$0xff]
          %v3065 = vld [vmem:[#allocation3 + $0x1f8] sm:$0xff]
          %v3066 = vsub.f32 %v3002, %v2682
          %v3067 = vsub.f32 %v3003, %v2683
          %v3068 = vsub.f32 %v3004, %v2684
          %v3069 = vsub.f32 %v3005, %v2685
          %v3070 = vsub.f32 %v3006, %v2686
          %v3071 = vsub.f32 %v3007, %v2687
          %v3072 = vsub.f32 %v3008, %v2688
          %v3073 = vsub.f32 %v3009, %v2689
          %v3074 = vsub.f32 %v3010, %v2690
          %v3075 = vsub.f32 %v3011, %v2691
          %v3076 = vsub.f32 %v3012, %v2692
          %v3077 = vsub.f32 %v3013, %v2693
          %v3078 = vsub.f32 %v3014, %v2694
          %v3079 = vsub.f32 %v3015, %v2695
          %v3080 = vsub.f32 %v3016, %v2696
          %v3081 = vsub.f32 %v3017, %v2697
          %v3082 = vsub.f32 %v3018, %v2698
          %v3083 = vsub.f32 %v3019, %v2699
          %v3084 = vsub.f32 %v3020, %v2700
          %v3085 = vsub.f32 %v3021, %v2701
          %v3086 = vsub.f32 %v3022, %v2702
          %v3087 = vsub.f32 %v3023, %v2703
          %v3088 = vsub.f32 %v3024, %v2704
          %v3089 = vsub.f32 %v3025, %v2705
          %v3090 = vsub.f32 %v3026, %v2706
          %v3091 = vsub.f32 %v3027, %v2707
          %v3092 = vsub.f32 %v3028, %v2708
          %v3093 = vsub.f32 %v3029, %v2709
          %v3094 = vsub.f32 %v3030, %v2710
          %v3095 = vsub.f32 %v3031, %v2711
          %v3096 = vsub.f32 %v3032, %v2712
          %v3097 = vsub.f32 %v3033, %v2713
          %v3098 = vsub.f32 %v3034, %v2714
          %v3099 = vsub.f32 %v3035, %v2715
          %v3100 = vsub.f32 %v3036, %v2716
          %v3101 = vsub.f32 %v3037, %v2717
          %v3102 = vsub.f32 %v3038, %v2718
          %v3103 = vsub.f32 %v3039, %v2719
          %v3104 = vsub.f32 %v3040, %v2720
          %v3105 = vsub.f32 %v3041, %v2721
          %v3106 = vsub.f32 %v3042, %v2722
          %v3107 = vsub.f32 %v3043, %v2723
          %v3108 = vsub.f32 %v3044, %v2724
          %v3109 = vsub.f32 %v3045, %v2725
          %v3110 = vsub.f32 %v3046, %v2726
          %v3111 = vsub.f32 %v3047, %v2727
          %v3112 = vsub.f32 %v3048, %v2728
          %v3113 = vsub.f32 %v3049, %v2729
          %v3114 = vsub.f32 %v3050, %v2730
          %v3115 = vsub.f32 %v3051, %v2731
          %v3116 = vsub.f32 %v3052, %v2732
          %v3117 = vsub.f32 %v3053, %v2733
          %v3118 = vsub.f32 %v3054, %v2734
          %v3119 = vsub.f32 %v3055, %v2735
          %v3120 = vsub.f32 %v3056, %v2736
          %v3121 = vsub.f32 %v3057, %v2737
          %v3122 = vsub.f32 %v3058, %v2738
          %v3123 = vsub.f32 %v3059, %v2739
          %v3124 = vsub.f32 %v3060, %v2740
          %v3125 = vsub.f32 %v3061, %v2741
          %v3126 = vsub.f32 %v3062, %v2742
          %v3127 = vsub.f32 %v3063, %v2743
          %v3128 = vsub.f32 %v3064, %v2744
          %v3129 = vsub.f32 %v3065, %v2745
          %v3130 = vmul.f32 %v3066, -2.0
          %v3131 = vmul.f32 %v3067, -2.0
          %v3132 = vmul.f32 %v3068, -2.0
          %v3133 = vmul.f32 %v3069, -2.0
          %v3134 = vmul.f32 %v3070, -2.0
          %v3135 = vmul.f32 %v3071, -2.0
          %v3136 = vmul.f32 %v3072, -2.0
          %v3137 = vmul.f32 %v3073, -2.0
          %v3138 = vmul.f32 %v3074, -2.0
          %v3139 = vmul.f32 %v3075, -2.0
          %v3140 = vmul.f32 %v3076, -2.0
          %v3141 = vmul.f32 %v3077, -2.0
          %v3142 = vmul.f32 %v3078, -2.0
          %v3143 = vmul.f32 %v3079, -2.0
          %v3144 = vmul.f32 %v3080, -2.0
          %v3145 = vmul.f32 %v3081, -2.0
          %v3146 = vmul.f32 %v3082, -2.0
          %v3147 = vmul.f32 %v3083, -2.0
          %v3148 = vmul.f32 %v3084, -2.0
          %v3149 = vmul.f32 %v3085, -2.0
          %v3150 = vmul.f32 %v3086, -2.0
          %v3151 = vmul.f32 %v3087, -2.0
          %v3152 = vmul.f32 %v3088, -2.0
          %v3153 = vmul.f32 %v3089, -2.0
          %v3154 = vmul.f32 %v3090, -2.0
          %v3155 = vmul.f32 %v3091, -2.0
          %v3156 = vmul.f32 %v3092, -2.0
          %v3157 = vmul.f32 %v3093, -2.0
          %v3158 = vmul.f32 %v3094, -2.0
          %v3159 = vmul.f32 %v3095, -2.0
          %v3160 = vmul.f32 %v3096, -2.0
          %v3161 = vmul.f32 %v3097, -2.0
          %v3162 = vmul.f32 %v3098, -2.0
          %v3163 = vmul.f32 %v3099, -2.0
          %v3164 = vmul.f32 %v3100, -2.0
          %v3165 = vmul.f32 %v3101, -2.0
          %v3166 = vmul.f32 %v3102, -2.0
          %v3167 = vmul.f32 %v3103, -2.0
          %v3168 = vmul.f32 %v3104, -2.0
          %v3169 = vmul.f32 %v3105, -2.0
          %v3170 = vmul.f32 %v3106, -2.0
          %v3171 = vmul.f32 %v3107, -2.0
          %v3172 = vmul.f32 %v3108, -2.0
          %v3173 = vmul.f32 %v3109, -2.0
          %v3174 = vmul.f32 %v3110, -2.0
          %v3175 = vmul.f32 %v3111, -2.0
          %v3176 = vmul.f32 %v3112, -2.0
          %v3177 = vmul.f32 %v3113, -2.0
          %v3178 = vmul.f32 %v3114, -2.0
          %v3179 = vmul.f32 %v3115, -2.0
          %v3180 = vmul.f32 %v3116, -2.0
          %v3181 = vmul.f32 %v3117, -2.0
          %v3182 = vmul.f32 %v3118, -2.0
          %v3183 = vmul.f32 %v3119, -2.0
          %v3184 = vmul.f32 %v3120, -2.0
          %v3185 = vmul.f32 %v3121, -2.0
          %v3186 = vmul.f32 %v3122, -2.0
          %v3187 = vmul.f32 %v3123, -2.0
          %v3188 = vmul.f32 %v3124, -2.0
          %v3189 = vmul.f32 %v3125, -2.0
          %v3190 = vmul.f32 %v3126, -2.0
          %v3191 = vmul.f32 %v3127, -2.0
          %v3192 = vmul.f32 %v3128, -2.0
          %v3193 = vmul.f32 %v3129, -2.0
          %v3194 = vmax.f32 %v3130, 0.0
          %v3195 = vmax.f32 %v3131, 0.0
          %v3196 = vmax.f32 %v3132, 0.0
          %v3197 = vmax.f32 %v3133, 0.0
          %v3198 = vmax.f32 %v3134, 0.0
          %v3199 = vmax.f32 %v3135, 0.0
          %v3200 = vmax.f32 %v3136, 0.0
          %v3201 = vmax.f32 %v3137, 0.0
          %v3202 = vmax.f32 %v3138, 0.0
          %v3203 = vmax.f32 %v3139, 0.0
          %v3204 = vmax.f32 %v3140, 0.0
          %v3205 = vmax.f32 %v3141, 0.0
          %v3206 = vmax.f32 %v3142, 0.0
          %v3207 = vmax.f32 %v3143, 0.0
          %v3208 = vmax.f32 %v3144, 0.0
          %v3209 = vmax.f32 %v3145, 0.0
          %v3210 = vmax.f32 %v3146, 0.0
          %v3211 = vmax.f32 %v3147, 0.0
          %v3212 = vmax.f32 %v3148, 0.0
          %v3213 = vmax.f32 %v3149, 0.0
          %v3214 = vmax.f32 %v3150, 0.0
          %v3215 = vmax.f32 %v3151, 0.0
          %v3216 = vmax.f32 %v3152, 0.0
          %v3217 = vmax.f32 %v3153, 0.0
          %v3218 = vmax.f32 %v3154, 0.0
          %v3219 = vmax.f32 %v3155, 0.0
          %v3220 = vmax.f32 %v3156, 0.0
          %v3221 = vmax.f32 %v3157, 0.0
          %v3222 = vmax.f32 %v3158, 0.0
          %v3223 = vmax.f32 %v3159, 0.0
          %v3224 = vmax.f32 %v3160, 0.0
          %v3225 = vmax.f32 %v3161, 0.0
          %v3226 = vmax.f32 %v3162, 0.0
          %v3227 = vmax.f32 %v3163, 0.0
          %v3228 = vmax.f32 %v3164, 0.0
          %v3229 = vmax.f32 %v3165, 0.0
          %v3230 = vmax.f32 %v3166, 0.0
          %v3231 = vmax.f32 %v3167, 0.0
          %v3232 = vmax.f32 %v3168, 0.0
          %v3233 = vmax.f32 %v3169, 0.0
          %v3234 = vmax.f32 %v3170, 0.0
          %v3235 = vmax.f32 %v3171, 0.0
          %v3236 = vmax.f32 %v3172, 0.0
          %v3237 = vmax.f32 %v3173, 0.0
          %v3238 = vmax.f32 %v3174, 0.0
          %v3239 = vmax.f32 %v3175, 0.0
          %v3240 = vmax.f32 %v3176, 0.0
          %v3241 = vmax.f32 %v3177, 0.0
          %v3242 = vmax.f32 %v3178, 0.0
          %v3243 = vmax.f32 %v3179, 0.0
          %v3244 = vmax.f32 %v3180, 0.0
          %v3245 = vmax.f32 %v3181, 0.0
          %v3246 = vmax.f32 %v3182, 0.0
          %v3247 = vmax.f32 %v3183, 0.0
          %v3248 = vmax.f32 %v3184, 0.0
          %v3249 = vmax.f32 %v3185, 0.0
          %v3250 = vmax.f32 %v3186, 0.0
          %v3251 = vmax.f32 %v3187, 0.0
          %v3252 = vmax.f32 %v3188, 0.0
          %v3253 = vmax.f32 %v3189, 0.0
          %v3254 = vmax.f32 %v3190, 0.0
          %v3255 = vmax.f32 %v3191, 0.0
          %v3256 = vmax.f32 %v3192, 0.0
          %v3257 = vmax.f32 %v3193, 0.0
          %v3258 = vrsqrt.pop %v2938
          %v3259 = vmul.f32 %v2938, %v3258
          %vm3260 = vcmp.eq.f32.partialorder %v2938, inf
          %v3261 = vsel %vm3260, %v2938, %v3259
          %vm3262 = vcmp.eq.f32.partialorder %v2938, 0.0
          %v3263 = vand.u32 %v2938, 2147483648
          %v3264 = vsel %vm3262, %v3263, %v3261
          %v3265 = vrsqrt.pop %v2939
          %v3266 = vmul.f32 %v2939, %v3265
          %vm3267 = vcmp.eq.f32.partialorder %v2939, inf
          %v3268 = vsel %vm3267, %v2939, %v3266
          %vm3269 = vcmp.eq.f32.partialorder %v2939, 0.0
          %v3270 = vand.u32 %v2939, 2147483648
          %v3271 = vsel %vm3269, %v3270, %v3268
          %v3272 = vrsqrt.pop %v2940
          %v3273 = vmul.f32 %v2940, %v3272
          %vm3274 = vcmp.eq.f32.partialorder %v2940, inf
          %v3275 = vsel %vm3274, %v2940, %v3273
          %vm3276 = vcmp.eq.f32.partialorder %v2940, 0.0
          %v3277 = vand.u32 %v2940, 2147483648
          %v3278 = vsel %vm3276, %v3277, %v3275
          %v3279 = vrsqrt.pop %v2941
          %v3280 = vmul.f32 %v2941, %v3279
          %vm3281 = vcmp.eq.f32.partialorder %v2941, inf
          %v3282 = vsel %vm3281, %v2941, %v3280
          %vm3283 = vcmp.eq.f32.partialorder %v2941, 0.0
          %v3284 = vand.u32 %v2941, 2147483648
          %v3285 = vsel %vm3283, %v3284, %v3282
          %v3286 = vrsqrt.pop %v2942
          %v3287 = vmul.f32 %v2942, %v3286
          %vm3288 = vcmp.eq.f32.partialorder %v2942, inf
          %v3289 = vsel %vm3288, %v2942, %v3287
          %vm3290 = vcmp.eq.f32.partialorder %v2942, 0.0
          %v3291 = vand.u32 %v2942, 2147483648
          %v3292 = vsel %vm3290, %v3291, %v3289
          %v3293 = vrsqrt.pop %v2943
          %v3294 = vmul.f32 %v2943, %v3293
          %vm3295 = vcmp.eq.f32.partialorder %v2943, inf
          %v3296 = vsel %vm3295, %v2943, %v3294
          %vm3297 = vcmp.eq.f32.partialorder %v2943, 0.0
          %v3298 = vand.u32 %v2943, 2147483648
          %v3299 = vsel %vm3297, %v3298, %v3296
          %v3300 = vrsqrt.pop %v2944
          %v3301 = vmul.f32 %v2944, %v3300
          %vm3302 = vcmp.eq.f32.partialorder %v2944, inf
          %v3303 = vsel %vm3302, %v2944, %v3301
          %vm3304 = vcmp.eq.f32.partialorder %v2944, 0.0
          %v3305 = vand.u32 %v2944, 2147483648
          %v3306 = vsel %vm3304, %v3305, %v3303
          %v3307 = vrsqrt.pop %v2945
          %v3308 = vmul.f32 %v2945, %v3307
          %vm3309 = vcmp.eq.f32.partialorder %v2945, inf
          %v3310 = vsel %vm3309, %v2945, %v3308
          %vm3311 = vcmp.eq.f32.partialorder %v2945, 0.0
          %v3312 = vand.u32 %v2945, 2147483648
          %v3313 = vsel %vm3311, %v3312, %v3310
          %v3314 = vrsqrt.pop %v2946
          %v3315 = vmul.f32 %v2946, %v3314
          %vm3316 = vcmp.eq.f32.partialorder %v2946, inf
          %v3317 = vsel %vm3316, %v2946, %v3315
          %vm3318 = vcmp.eq.f32.partialorder %v2946, 0.0
          %v3319 = vand.u32 %v2946, 2147483648
          %v3320 = vsel %vm3318, %v3319, %v3317
          %v3321 = vrsqrt.pop %v2947
          %v3322 = vmul.f32 %v2947, %v3321
          %vm3323 = vcmp.eq.f32.partialorder %v2947, inf
          %v3324 = vsel %vm3323, %v2947, %v3322
          %vm3325 = vcmp.eq.f32.partialorder %v2947, 0.0
          %v3326 = vand.u32 %v2947, 2147483648
          %v3327 = vsel %vm3325, %v3326, %v3324
          %v3328 = vrsqrt.pop %v2948
          %v3329 = vmul.f32 %v2948, %v3328
          %vm3330 = vcmp.eq.f32.partialorder %v2948, inf
          %v3331 = vsel %vm3330, %v2948, %v3329
          %vm3332 = vcmp.eq.f32.partialorder %v2948, 0.0
          %v3333 = vand.u32 %v2948, 2147483648
          %v3334 = vsel %vm3332, %v3333, %v3331
          %v3335 = vrsqrt.pop %v2949
          %v3336 = vmul.f32 %v2949, %v3335
          %vm3337 = vcmp.eq.f32.partialorder %v2949, inf
          %v3338 = vsel %vm3337, %v2949, %v3336
          %vm3339 = vcmp.eq.f32.partialorder %v2949, 0.0
          %v3340 = vand.u32 %v2949, 2147483648
          %v3341 = vsel %vm3339, %v3340, %v3338
          %v3342 = vrsqrt.pop %v2950
          %v3343 = vmul.f32 %v2950, %v3342
          %vm3344 = vcmp.eq.f32.partialorder %v2950, inf
          %v3345 = vsel %vm3344, %v2950, %v3343
          %vm3346 = vcmp.eq.f32.partialorder %v2950, 0.0
          %v3347 = vand.u32 %v2950, 2147483648
          %v3348 = vsel %vm3346, %v3347, %v3345
          %v3349 = vrsqrt.pop %v2951
          %v3350 = vmul.f32 %v2951, %v3349
          %vm3351 = vcmp.eq.f32.partialorder %v2951, inf
          %v3352 = vsel %vm3351, %v2951, %v3350
          %vm3353 = vcmp.eq.f32.partialorder %v2951, 0.0
          %v3354 = vand.u32 %v2951, 2147483648
          %v3355 = vsel %vm3353, %v3354, %v3352
          %v3356 = vrsqrt.pop %v2952
          %v3357 = vmul.f32 %v2952, %v3356
          %vm3358 = vcmp.eq.f32.partialorder %v2952, inf
          %v3359 = vsel %vm3358, %v2952, %v3357
          %vm3360 = vcmp.eq.f32.partialorder %v2952, 0.0
          %v3361 = vand.u32 %v2952, 2147483648
          %v3362 = vsel %vm3360, %v3361, %v3359
          %v3363 = vrsqrt.pop %v2953
          %v3364 = vmul.f32 %v2953, %v3363
          %vm3365 = vcmp.eq.f32.partialorder %v2953, inf
          %v3366 = vsel %vm3365, %v2953, %v3364
          %vm3367 = vcmp.eq.f32.partialorder %v2953, 0.0
          %v3368 = vand.u32 %v2953, 2147483648
          %v3369 = vsel %vm3367, %v3368, %v3366
          %v3370 = vrsqrt.pop %v2954
          %v3371 = vmul.f32 %v2954, %v3370
          %vm3372 = vcmp.eq.f32.partialorder %v2954, inf
          %v3373 = vsel %vm3372, %v2954, %v3371
          %vm3374 = vcmp.eq.f32.partialorder %v2954, 0.0
          %v3375 = vand.u32 %v2954, 2147483648
          %v3376 = vsel %vm3374, %v3375, %v3373
          %v3377 = vrsqrt.pop %v2955
          %v3378 = vmul.f32 %v2955, %v3377
          %vm3379 = vcmp.eq.f32.partialorder %v2955, inf
          %v3380 = vsel %vm3379, %v2955, %v3378
          %vm3381 = vcmp.eq.f32.partialorder %v2955, 0.0
          %v3382 = vand.u32 %v2955, 2147483648
          %v3383 = vsel %vm3381, %v3382, %v3380
          %v3384 = vrsqrt.pop %v2956
          %v3385 = vmul.f32 %v2956, %v3384
          %vm3386 = vcmp.eq.f32.partialorder %v2956, inf
          %v3387 = vsel %vm3386, %v2956, %v3385
          %vm3388 = vcmp.eq.f32.partialorder %v2956, 0.0
          %v3389 = vand.u32 %v2956, 2147483648
          %v3390 = vsel %vm3388, %v3389, %v3387
          %v3391 = vrsqrt.pop %v2957
          %v3392 = vmul.f32 %v2957, %v3391
          %vm3393 = vcmp.eq.f32.partialorder %v2957, inf
          %v3394 = vsel %vm3393, %v2957, %v3392
          %vm3395 = vcmp.eq.f32.partialorder %v2957, 0.0
          %v3396 = vand.u32 %v2957, 2147483648
          %v3397 = vsel %vm3395, %v3396, %v3394
          %v3398 = vrsqrt.pop %v2958
          %v3399 = vmul.f32 %v2958, %v3398
          %vm3400 = vcmp.eq.f32.partialorder %v2958, inf
          %v3401 = vsel %vm3400, %v2958, %v3399
          %vm3402 = vcmp.eq.f32.partialorder %v2958, 0.0
          %v3403 = vand.u32 %v2958, 2147483648
          %v3404 = vsel %vm3402, %v3403, %v3401
          %v3405 = vrsqrt.pop %v2959
          %v3406 = vmul.f32 %v2959, %v3405
          %vm3407 = vcmp.eq.f32.partialorder %v2959, inf
          %v3408 = vsel %vm3407, %v2959, %v3406
          %vm3409 = vcmp.eq.f32.partialorder %v2959, 0.0
          %v3410 = vand.u32 %v2959, 2147483648
          %v3411 = vsel %vm3409, %v3410, %v3408
          %v3412 = vrsqrt.pop %v2960
          %v3413 = vmul.f32 %v2960, %v3412
          %vm3414 = vcmp.eq.f32.partialorder %v2960, inf
          %v3415 = vsel %vm3414, %v2960, %v3413
          %vm3416 = vcmp.eq.f32.partialorder %v2960, 0.0
          %v3417 = vand.u32 %v2960, 2147483648
          %v3418 = vsel %vm3416, %v3417, %v3415
          %v3419 = vrsqrt.pop %v2961
          %v3420 = vmul.f32 %v2961, %v3419
          %vm3421 = vcmp.eq.f32.partialorder %v2961, inf
          %v3422 = vsel %vm3421, %v2961, %v3420
          %vm3423 = vcmp.eq.f32.partialorder %v2961, 0.0
          %v3424 = vand.u32 %v2961, 2147483648
          %v3425 = vsel %vm3423, %v3424, %v3422
          %v3426 = vrsqrt.pop %v2962
          %v3427 = vmul.f32 %v2962, %v3426
          %vm3428 = vcmp.eq.f32.partialorder %v2962, inf
          %v3429 = vsel %vm3428, %v2962, %v3427
          %vm3430 = vcmp.eq.f32.partialorder %v2962, 0.0
          %v3431 = vand.u32 %v2962, 2147483648
          %v3432 = vsel %vm3430, %v3431, %v3429
          %v3433 = vrsqrt.pop %v2963
          %v3434 = vmul.f32 %v2963, %v3433
          %vm3435 = vcmp.eq.f32.partialorder %v2963, inf
          %v3436 = vsel %vm3435, %v2963, %v3434
          %vm3437 = vcmp.eq.f32.partialorder %v2963, 0.0
          %v3438 = vand.u32 %v2963, 2147483648
          %v3439 = vsel %vm3437, %v3438, %v3436
          %v3440 = vrsqrt.pop %v2964
          %v3441 = vmul.f32 %v2964, %v3440
          %vm3442 = vcmp.eq.f32.partialorder %v2964, inf
          %v3443 = vsel %vm3442, %v2964, %v3441
          %vm3444 = vcmp.eq.f32.partialorder %v2964, 0.0
          %v3445 = vand.u32 %v2964, 2147483648
          %v3446 = vsel %vm3444, %v3445, %v3443
          %v3447 = vrsqrt.pop %v2965
          %v3448 = vmul.f32 %v2965, %v3447
          %vm3449 = vcmp.eq.f32.partialorder %v2965, inf
          %v3450 = vsel %vm3449, %v2965, %v3448
          %vm3451 = vcmp.eq.f32.partialorder %v2965, 0.0
          %v3452 = vand.u32 %v2965, 2147483648
          %v3453 = vsel %vm3451, %v3452, %v3450
          %v3454 = vrsqrt.pop %v2966
          %v3455 = vmul.f32 %v2966, %v3454
          %vm3456 = vcmp.eq.f32.partialorder %v2966, inf
          %v3457 = vsel %vm3456, %v2966, %v3455
          %vm3458 = vcmp.eq.f32.partialorder %v2966, 0.0
          %v3459 = vand.u32 %v2966, 2147483648
          %v3460 = vsel %vm3458, %v3459, %v3457
          %v3461 = vrsqrt.pop %v2967
          %v3462 = vmul.f32 %v2967, %v3461
          %vm3463 = vcmp.eq.f32.partialorder %v2967, inf
          %v3464 = vsel %vm3463, %v2967, %v3462
          %vm3465 = vcmp.eq.f32.partialorder %v2967, 0.0
          %v3466 = vand.u32 %v2967, 2147483648
          %v3467 = vsel %vm3465, %v3466, %v3464
          %v3468 = vrsqrt.pop %v2968
          %v3469 = vmul.f32 %v2968, %v3468
          %vm3470 = vcmp.eq.f32.partialorder %v2968, inf
          %v3471 = vsel %vm3470, %v2968, %v3469
          %vm3472 = vcmp.eq.f32.partialorder %v2968, 0.0
          %v3473 = vand.u32 %v2968, 2147483648
          %v3474 = vsel %vm3472, %v3473, %v3471
          %v3475 = vrsqrt.pop %v2969
          %v3476 = vmul.f32 %v2969, %v3475
          %vm3477 = vcmp.eq.f32.partialorder %v2969, inf
          %v3478 = vsel %vm3477, %v2969, %v3476
          %vm3479 = vcmp.eq.f32.partialorder %v2969, 0.0
          %v3480 = vand.u32 %v2969, 2147483648
          %v3481 = vsel %vm3479, %v3480, %v3478
          %v3482 = vrsqrt.pop %v2970
          %v3483 = vmul.f32 %v2970, %v3482
          %vm3484 = vcmp.eq.f32.partialorder %v2970, inf
          %v3485 = vsel %vm3484, %v2970, %v3483
          %vm3486 = vcmp.eq.f32.partialorder %v2970, 0.0
          %v3487 = vand.u32 %v2970, 2147483648
          %v3488 = vsel %vm3486, %v3487, %v3485
          %v3489 = vrsqrt.pop %v2971
          %v3490 = vmul.f32 %v2971, %v3489
          %vm3491 = vcmp.eq.f32.partialorder %v2971, inf
          %v3492 = vsel %vm3491, %v2971, %v3490
          %vm3493 = vcmp.eq.f32.partialorder %v2971, 0.0
          %v3494 = vand.u32 %v2971, 2147483648
          %v3495 = vsel %vm3493, %v3494, %v3492
          %v3496 = vrsqrt.pop %v2972
          %v3497 = vmul.f32 %v2972, %v3496
          %vm3498 = vcmp.eq.f32.partialorder %v2972, inf
          %v3499 = vsel %vm3498, %v2972, %v3497
          %vm3500 = vcmp.eq.f32.partialorder %v2972, 0.0
          %v3501 = vand.u32 %v2972, 2147483648
          %v3502 = vsel %vm3500, %v3501, %v3499
          %v3503 = vrsqrt.pop %v2973
          %v3504 = vmul.f32 %v2973, %v3503
          %vm3505 = vcmp.eq.f32.partialorder %v2973, inf
          %v3506 = vsel %vm3505, %v2973, %v3504
          %vm3507 = vcmp.eq.f32.partialorder %v2973, 0.0
          %v3508 = vand.u32 %v2973, 2147483648
          %v3509 = vsel %vm3507, %v3508, %v3506
          %v3510 = vrsqrt.pop %v2974
          %v3511 = vmul.f32 %v2974, %v3510
          %vm3512 = vcmp.eq.f32.partialorder %v2974, inf
          %v3513 = vsel %vm3512, %v2974, %v3511
          %vm3514 = vcmp.eq.f32.partialorder %v2974, 0.0
          %v3515 = vand.u32 %v2974, 2147483648
          %v3516 = vsel %vm3514, %v3515, %v3513
          %v3517 = vrsqrt.pop %v2975
          %v3518 = vmul.f32 %v2975, %v3517
          %vm3519 = vcmp.eq.f32.partialorder %v2975, inf
          %v3520 = vsel %vm3519, %v2975, %v3518
          %vm3521 = vcmp.eq.f32.partialorder %v2975, 0.0
          %v3522 = vand.u32 %v2975, 2147483648
          %v3523 = vsel %vm3521, %v3522, %v3520
          %v3524 = vrsqrt.pop %v2976
          %v3525 = vmul.f32 %v2976, %v3524
          %vm3526 = vcmp.eq.f32.partialorder %v2976, inf
          %v3527 = vsel %vm3526, %v2976, %v3525
          %vm3528 = vcmp.eq.f32.partialorder %v2976, 0.0
          %v3529 = vand.u32 %v2976, 2147483648
          %v3530 = vsel %vm3528, %v3529, %v3527
          %v3531 = vrsqrt.pop %v2977
          %v3532 = vmul.f32 %v2977, %v3531
          %vm3533 = vcmp.eq.f32.partialorder %v2977, inf
          %v3534 = vsel %vm3533, %v2977, %v3532
          %vm3535 = vcmp.eq.f32.partialorder %v2977, 0.0
          %v3536 = vand.u32 %v2977, 2147483648
          %v3537 = vsel %vm3535, %v3536, %v3534
          %v3538 = vrsqrt.pop %v2978
          %v3539 = vmul.f32 %v2978, %v3538
          %vm3540 = vcmp.eq.f32.partialorder %v2978, inf
          %v3541 = vsel %vm3540, %v2978, %v3539
          %vm3542 = vcmp.eq.f32.partialorder %v2978, 0.0
          %v3543 = vand.u32 %v2978, 2147483648
          %v3544 = vsel %vm3542, %v3543, %v3541
          %v3545 = vrsqrt.pop %v2979
          %v3546 = vmul.f32 %v2979, %v3545
          %vm3547 = vcmp.eq.f32.partialorder %v2979, inf
          %v3548 = vsel %vm3547, %v2979, %v3546
          %vm3549 = vcmp.eq.f32.partialorder %v2979, 0.0
          %v3550 = vand.u32 %v2979, 2147483648
          %v3551 = vsel %vm3549, %v3550, %v3548
          %v3552 = vrsqrt.pop %v2980
          %v3553 = vmul.f32 %v2980, %v3552
          %vm3554 = vcmp.eq.f32.partialorder %v2980, inf
          %v3555 = vsel %vm3554, %v2980, %v3553
          %vm3556 = vcmp.eq.f32.partialorder %v2980, 0.0
          %v3557 = vand.u32 %v2980, 2147483648
          %v3558 = vsel %vm3556, %v3557, %v3555
          %v3559 = vrsqrt.pop %v2981
          %v3560 = vmul.f32 %v2981, %v3559
          %vm3561 = vcmp.eq.f32.partialorder %v2981, inf
          %v3562 = vsel %vm3561, %v2981, %v3560
          %vm3563 = vcmp.eq.f32.partialorder %v2981, 0.0
          %v3564 = vand.u32 %v2981, 2147483648
          %v3565 = vsel %vm3563, %v3564, %v3562
          %v3566 = vrsqrt.pop %v2982
          %v3567 = vmul.f32 %v2982, %v3566
          %vm3568 = vcmp.eq.f32.partialorder %v2982, inf
          %v3569 = vsel %vm3568, %v2982, %v3567
          %vm3570 = vcmp.eq.f32.partialorder %v2982, 0.0
          %v3571 = vand.u32 %v2982, 2147483648
          %v3572 = vsel %vm3570, %v3571, %v3569
          %v3573 = vrsqrt.pop %v2983
          %v3574 = vmul.f32 %v2983, %v3573
          %vm3575 = vcmp.eq.f32.partialorder %v2983, inf
          %v3576 = vsel %vm3575, %v2983, %v3574
          %vm3577 = vcmp.eq.f32.partialorder %v2983, 0.0
          %v3578 = vand.u32 %v2983, 2147483648
          %v3579 = vsel %vm3577, %v3578, %v3576
          %v3580 = vrsqrt.pop %v2984
          %v3581 = vmul.f32 %v2984, %v3580
          %vm3582 = vcmp.eq.f32.partialorder %v2984, inf
          %v3583 = vsel %vm3582, %v2984, %v3581
          %vm3584 = vcmp.eq.f32.partialorder %v2984, 0.0
          %v3585 = vand.u32 %v2984, 2147483648
          %v3586 = vsel %vm3584, %v3585, %v3583
          %v3587 = vrsqrt.pop %v2985
          %v3588 = vmul.f32 %v2985, %v3587
          %vm3589 = vcmp.eq.f32.partialorder %v2985, inf
          %v3590 = vsel %vm3589, %v2985, %v3588
          %vm3591 = vcmp.eq.f32.partialorder %v2985, 0.0
          %v3592 = vand.u32 %v2985, 2147483648
          %v3593 = vsel %vm3591, %v3592, %v3590
          %v3594 = vrsqrt.pop %v2986
          %v3595 = vmul.f32 %v2986, %v3594
          %vm3596 = vcmp.eq.f32.partialorder %v2986, inf
          %v3597 = vsel %vm3596, %v2986, %v3595
          %vm3598 = vcmp.eq.f32.partialorder %v2986, 0.0
          %v3599 = vand.u32 %v2986, 2147483648
          %v3600 = vsel %vm3598, %v3599, %v3597
          %v3601 = vrsqrt.pop %v2987
          %v3602 = vmul.f32 %v2987, %v3601
          %vm3603 = vcmp.eq.f32.partialorder %v2987, inf
          %v3604 = vsel %vm3603, %v2987, %v3602
          %vm3605 = vcmp.eq.f32.partialorder %v2987, 0.0
          %v3606 = vand.u32 %v2987, 2147483648
          %v3607 = vsel %vm3605, %v3606, %v3604
          %v3608 = vrsqrt.pop %v2988
          %v3609 = vmul.f32 %v2988, %v3608
          %vm3610 = vcmp.eq.f32.partialorder %v2988, inf
          %v3611 = vsel %vm3610, %v2988, %v3609
          %vm3612 = vcmp.eq.f32.partialorder %v2988, 0.0
          %v3613 = vand.u32 %v2988, 2147483648
          %v3614 = vsel %vm3612, %v3613, %v3611
          %v3615 = vrsqrt.pop %v2989
          %v3616 = vmul.f32 %v2989, %v3615
          %vm3617 = vcmp.eq.f32.partialorder %v2989, inf
          %v3618 = vsel %vm3617, %v2989, %v3616
          %vm3619 = vcmp.eq.f32.partialorder %v2989, 0.0
          %v3620 = vand.u32 %v2989, 2147483648
          %v3621 = vsel %vm3619, %v3620, %v3618
          %v3622 = vrsqrt.pop %v2990
          %v3623 = vmul.f32 %v2990, %v3622
          %vm3624 = vcmp.eq.f32.partialorder %v2990, inf
          %v3625 = vsel %vm3624, %v2990, %v3623
          %vm3626 = vcmp.eq.f32.partialorder %v2990, 0.0
          %v3627 = vand.u32 %v2990, 2147483648
          %v3628 = vsel %vm3626, %v3627, %v3625
          %v3629 = vrsqrt.pop %v2991
          %v3630 = vmul.f32 %v2991, %v3629
          %vm3631 = vcmp.eq.f32.partialorder %v2991, inf
          %v3632 = vsel %vm3631, %v2991, %v3630
          %vm3633 = vcmp.eq.f32.partialorder %v2991, 0.0
          %v3634 = vand.u32 %v2991, 2147483648
          %v3635 = vsel %vm3633, %v3634, %v3632
          %v3636 = vrsqrt.pop %v2992
          %v3637 = vmul.f32 %v2992, %v3636
          %vm3638 = vcmp.eq.f32.partialorder %v2992, inf
          %v3639 = vsel %vm3638, %v2992, %v3637
          %vm3640 = vcmp.eq.f32.partialorder %v2992, 0.0
          %v3641 = vand.u32 %v2992, 2147483648
          %v3642 = vsel %vm3640, %v3641, %v3639
          %v3643 = vrsqrt.pop %v2993
          %v3644 = vmul.f32 %v2993, %v3643
          %vm3645 = vcmp.eq.f32.partialorder %v2993, inf
          %v3646 = vsel %vm3645, %v2993, %v3644
          %vm3647 = vcmp.eq.f32.partialorder %v2993, 0.0
          %v3648 = vand.u32 %v2993, 2147483648
          %v3649 = vsel %vm3647, %v3648, %v3646
          %v3650 = vrsqrt.pop %v2994
          %v3651 = vmul.f32 %v2994, %v3650
          %vm3652 = vcmp.eq.f32.partialorder %v2994, inf
          %v3653 = vsel %vm3652, %v2994, %v3651
          %vm3654 = vcmp.eq.f32.partialorder %v2994, 0.0
          %v3655 = vand.u32 %v2994, 2147483648
          %v3656 = vsel %vm3654, %v3655, %v3653
          %v3657 = vrsqrt.pop %v2995
          %v3658 = vmul.f32 %v2995, %v3657
          %vm3659 = vcmp.eq.f32.partialorder %v2995, inf
          %v3660 = vsel %vm3659, %v2995, %v3658
          %vm3661 = vcmp.eq.f32.partialorder %v2995, 0.0
          %v3662 = vand.u32 %v2995, 2147483648
          %v3663 = vsel %vm3661, %v3662, %v3660
          %v3664 = vrsqrt.pop %v2996
          %v3665 = vmul.f32 %v2996, %v3664
          %vm3666 = vcmp.eq.f32.partialorder %v2996, inf
          %v3667 = vsel %vm3666, %v2996, %v3665
          %vm3668 = vcmp.eq.f32.partialorder %v2996, 0.0
          %v3669 = vand.u32 %v2996, 2147483648
          %v3670 = vsel %vm3668, %v3669, %v3667
          %v3671 = vrsqrt.pop %v2997
          %v3672 = vmul.f32 %v2997, %v3671
          %vm3673 = vcmp.eq.f32.partialorder %v2997, inf
          %v3674 = vsel %vm3673, %v2997, %v3672
          %vm3675 = vcmp.eq.f32.partialorder %v2997, 0.0
          %v3676 = vand.u32 %v2997, 2147483648
          %v3677 = vsel %vm3675, %v3676, %v3674
          %v3678 = vrsqrt.pop %v2998
          %v3679 = vmul.f32 %v2998, %v3678
          %vm3680 = vcmp.eq.f32.partialorder %v2998, inf
          %v3681 = vsel %vm3680, %v2998, %v3679
          %vm3682 = vcmp.eq.f32.partialorder %v2998, 0.0
          %v3683 = vand.u32 %v2998, 2147483648
          %v3684 = vsel %vm3682, %v3683, %v3681
          %v3685 = vrsqrt.pop %v2999
          %v3686 = vmul.f32 %v2999, %v3685
          %vm3687 = vcmp.eq.f32.partialorder %v2999, inf
          %v3688 = vsel %vm3687, %v2999, %v3686
          %vm3689 = vcmp.eq.f32.partialorder %v2999, 0.0
          %v3690 = vand.u32 %v2999, 2147483648
          %v3691 = vsel %vm3689, %v3690, %v3688
          %v3692 = vrsqrt.pop %v3000
          %v3693 = vmul.f32 %v3000, %v3692
          %vm3694 = vcmp.eq.f32.partialorder %v3000, inf
          %v3695 = vsel %vm3694, %v3000, %v3693
          %vm3696 = vcmp.eq.f32.partialorder %v3000, 0.0
          %v3697 = vand.u32 %v3000, 2147483648
          %v3698 = vsel %vm3696, %v3697, %v3695
          %v3699 = vrsqrt.pop %v3001
          %v3700 = vmul.f32 %v3001, %v3699
          %vm3701 = vcmp.eq.f32.partialorder %v3001, inf
          %v3702 = vsel %vm3701, %v3001, %v3700
          %vm3703 = vcmp.eq.f32.partialorder %v3001, 0.0
          %v3704 = vand.u32 %v3001, 2147483648
          %v3705 = vsel %vm3703, %v3704, %v3702
          %v3706 = vrsqrt.pop %v3194
          %v3707 = vmul.f32 %v3194, %v3706
          %vm3708 = vcmp.eq.f32.partialorder %v3194, inf
          %v3709 = vsel %vm3708, %v3194, %v3707
          %vm3710 = vcmp.eq.f32.partialorder %v3194, 0.0
          %v3711 = vand.u32 %v3194, 2147483648
          %v3712 = vsel %vm3710, %v3711, %v3709
          %v3713 = vrsqrt.pop %v3195
          %v3714 = vmul.f32 %v3195, %v3713
          %vm3715 = vcmp.eq.f32.partialorder %v3195, inf
          %v3716 = vsel %vm3715, %v3195, %v3714
          %vm3717 = vcmp.eq.f32.partialorder %v3195, 0.0
          %v3718 = vand.u32 %v3195, 2147483648
          %v3719 = vsel %vm3717, %v3718, %v3716
          %v3720 = vrsqrt.pop %v3196
          %v3721 = vmul.f32 %v3196, %v3720
          %vm3722 = vcmp.eq.f32.partialorder %v3196, inf
          %v3723 = vsel %vm3722, %v3196, %v3721
          %vm3724 = vcmp.eq.f32.partialorder %v3196, 0.0
          %v3725 = vand.u32 %v3196, 2147483648
          %v3726 = vsel %vm3724, %v3725, %v3723
          %v3727 = vrsqrt.pop %v3197
          %v3728 = vmul.f32 %v3197, %v3727
          %vm3729 = vcmp.eq.f32.partialorder %v3197, inf
          %v3730 = vsel %vm3729, %v3197, %v3728
          %vm3731 = vcmp.eq.f32.partialorder %v3197, 0.0
          %v3732 = vand.u32 %v3197, 2147483648
          %v3733 = vsel %vm3731, %v3732, %v3730
          %v3734 = vrsqrt.pop %v3198
          %v3735 = vmul.f32 %v3198, %v3734
          %vm3736 = vcmp.eq.f32.partialorder %v3198, inf
          %v3737 = vsel %vm3736, %v3198, %v3735
          %vm3738 = vcmp.eq.f32.partialorder %v3198, 0.0
          %v3739 = vand.u32 %v3198, 2147483648
          %v3740 = vsel %vm3738, %v3739, %v3737
          %v3741 = vrsqrt.pop %v3199
          %v3742 = vmul.f32 %v3199, %v3741
          %vm3743 = vcmp.eq.f32.partialorder %v3199, inf
          %v3744 = vsel %vm3743, %v3199, %v3742
          %vm3745 = vcmp.eq.f32.partialorder %v3199, 0.0
          %v3746 = vand.u32 %v3199, 2147483648
          %v3747 = vsel %vm3745, %v3746, %v3744
          %v3748 = vrsqrt.pop %v3200
          %v3749 = vmul.f32 %v3200, %v3748
          %vm3750 = vcmp.eq.f32.partialorder %v3200, inf
          %v3751 = vsel %vm3750, %v3200, %v3749
          %vm3752 = vcmp.eq.f32.partialorder %v3200, 0.0
          %v3753 = vand.u32 %v3200, 2147483648
          %v3754 = vsel %vm3752, %v3753, %v3751
          %v3755 = vrsqrt.pop %v3201
          %v3756 = vmul.f32 %v3201, %v3755
          %vm3757 = vcmp.eq.f32.partialorder %v3201, inf
          %v3758 = vsel %vm3757, %v3201, %v3756
          %vm3759 = vcmp.eq.f32.partialorder %v3201, 0.0
          %v3760 = vand.u32 %v3201, 2147483648
          %v3761 = vsel %vm3759, %v3760, %v3758
          %v3762 = vrsqrt.pop %v3202
          %v3763 = vmul.f32 %v3202, %v3762
          %vm3764 = vcmp.eq.f32.partialorder %v3202, inf
          %v3765 = vsel %vm3764, %v3202, %v3763
          %vm3766 = vcmp.eq.f32.partialorder %v3202, 0.0
          %v3767 = vand.u32 %v3202, 2147483648
          %v3768 = vsel %vm3766, %v3767, %v3765
          %v3769 = vrsqrt.pop %v3203
          %v3770 = vmul.f32 %v3203, %v3769
          %vm3771 = vcmp.eq.f32.partialorder %v3203, inf
          %v3772 = vsel %vm3771, %v3203, %v3770
          %vm3773 = vcmp.eq.f32.partialorder %v3203, 0.0
          %v3774 = vand.u32 %v3203, 2147483648
          %v3775 = vsel %vm3773, %v3774, %v3772
          %v3776 = vrsqrt.pop %v3204
          %v3777 = vmul.f32 %v3204, %v3776
          %vm3778 = vcmp.eq.f32.partialorder %v3204, inf
          %v3779 = vsel %vm3778, %v3204, %v3777
          %vm3780 = vcmp.eq.f32.partialorder %v3204, 0.0
          %v3781 = vand.u32 %v3204, 2147483648
          %v3782 = vsel %vm3780, %v3781, %v3779
          %v3783 = vrsqrt.pop %v3205
          %v3784 = vmul.f32 %v3205, %v3783
          %vm3785 = vcmp.eq.f32.partialorder %v3205, inf
          %v3786 = vsel %vm3785, %v3205, %v3784
          %vm3787 = vcmp.eq.f32.partialorder %v3205, 0.0
          %v3788 = vand.u32 %v3205, 2147483648
          %v3789 = vsel %vm3787, %v3788, %v3786
          %v3790 = vrsqrt.pop %v3206
          %v3791 = vmul.f32 %v3206, %v3790
          %vm3792 = vcmp.eq.f32.partialorder %v3206, inf
          %v3793 = vsel %vm3792, %v3206, %v3791
          %vm3794 = vcmp.eq.f32.partialorder %v3206, 0.0
          %v3795 = vand.u32 %v3206, 2147483648
          %v3796 = vsel %vm3794, %v3795, %v3793
          %v3797 = vrsqrt.pop %v3207
          %v3798 = vmul.f32 %v3207, %v3797
          %vm3799 = vcmp.eq.f32.partialorder %v3207, inf
          %v3800 = vsel %vm3799, %v3207, %v3798
          %vm3801 = vcmp.eq.f32.partialorder %v3207, 0.0
          %v3802 = vand.u32 %v3207, 2147483648
          %v3803 = vsel %vm3801, %v3802, %v3800
          %v3804 = vrsqrt.pop %v3208
          %v3805 = vmul.f32 %v3208, %v3804
          %vm3806 = vcmp.eq.f32.partialorder %v3208, inf
          %v3807 = vsel %vm3806, %v3208, %v3805
          %vm3808 = vcmp.eq.f32.partialorder %v3208, 0.0
          %v3809 = vand.u32 %v3208, 2147483648
          %v3810 = vsel %vm3808, %v3809, %v3807
          %v3811 = vrsqrt.pop %v3209
          %v3812 = vmul.f32 %v3209, %v3811
          %vm3813 = vcmp.eq.f32.partialorder %v3209, inf
          %v3814 = vsel %vm3813, %v3209, %v3812
          %vm3815 = vcmp.eq.f32.partialorder %v3209, 0.0
          %v3816 = vand.u32 %v3209, 2147483648
          %v3817 = vsel %vm3815, %v3816, %v3814
          %v3818 = vrsqrt.pop %v3210
          %v3819 = vmul.f32 %v3210, %v3818
          %vm3820 = vcmp.eq.f32.partialorder %v3210, inf
          %v3821 = vsel %vm3820, %v3210, %v3819
          %vm3822 = vcmp.eq.f32.partialorder %v3210, 0.0
          %v3823 = vand.u32 %v3210, 2147483648
          %v3824 = vsel %vm3822, %v3823, %v3821
          %v3825 = vrsqrt.pop %v3211
          %v3826 = vmul.f32 %v3211, %v3825
          %vm3827 = vcmp.eq.f32.partialorder %v3211, inf
          %v3828 = vsel %vm3827, %v3211, %v3826
          %vm3829 = vcmp.eq.f32.partialorder %v3211, 0.0
          %v3830 = vand.u32 %v3211, 2147483648
          %v3831 = vsel %vm3829, %v3830, %v3828
          %v3832 = vrsqrt.pop %v3212
          %v3833 = vmul.f32 %v3212, %v3832
          %vm3834 = vcmp.eq.f32.partialorder %v3212, inf
          %v3835 = vsel %vm3834, %v3212, %v3833
          %vm3836 = vcmp.eq.f32.partialorder %v3212, 0.0
          %v3837 = vand.u32 %v3212, 2147483648
          %v3838 = vsel %vm3836, %v3837, %v3835
          %v3839 = vrsqrt.pop %v3213
          %v3840 = vmul.f32 %v3213, %v3839
          %vm3841 = vcmp.eq.f32.partialorder %v3213, inf
          %v3842 = vsel %vm3841, %v3213, %v3840
          %vm3843 = vcmp.eq.f32.partialorder %v3213, 0.0
          %v3844 = vand.u32 %v3213, 2147483648
          %v3845 = vsel %vm3843, %v3844, %v3842
          %v3846 = vrsqrt.pop %v3214
          %v3847 = vmul.f32 %v3214, %v3846
          %vm3848 = vcmp.eq.f32.partialorder %v3214, inf
          %v3849 = vsel %vm3848, %v3214, %v3847
          %vm3850 = vcmp.eq.f32.partialorder %v3214, 0.0
          %v3851 = vand.u32 %v3214, 2147483648
          %v3852 = vsel %vm3850, %v3851, %v3849
          %v3853 = vrsqrt.pop %v3215
          %v3854 = vmul.f32 %v3215, %v3853
          %vm3855 = vcmp.eq.f32.partialorder %v3215, inf
          %v3856 = vsel %vm3855, %v3215, %v3854
          %vm3857 = vcmp.eq.f32.partialorder %v3215, 0.0
          %v3858 = vand.u32 %v3215, 2147483648
          %v3859 = vsel %vm3857, %v3858, %v3856
          %v3860 = vrsqrt.pop %v3216
          %v3861 = vmul.f32 %v3216, %v3860
          %vm3862 = vcmp.eq.f32.partialorder %v3216, inf
          %v3863 = vsel %vm3862, %v3216, %v3861
          %vm3864 = vcmp.eq.f32.partialorder %v3216, 0.0
          %v3865 = vand.u32 %v3216, 2147483648
          %v3866 = vsel %vm3864, %v3865, %v3863
          %v3867 = vrsqrt.pop %v3217
          %v3868 = vmul.f32 %v3217, %v3867
          %vm3869 = vcmp.eq.f32.partialorder %v3217, inf
          %v3870 = vsel %vm3869, %v3217, %v3868
          %vm3871 = vcmp.eq.f32.partialorder %v3217, 0.0
          %v3872 = vand.u32 %v3217, 2147483648
          %v3873 = vsel %vm3871, %v3872, %v3870
          %v3874 = vrsqrt.pop %v3218
          %v3875 = vmul.f32 %v3218, %v3874
          %vm3876 = vcmp.eq.f32.partialorder %v3218, inf
          %v3877 = vsel %vm3876, %v3218, %v3875
          %vm3878 = vcmp.eq.f32.partialorder %v3218, 0.0
          %v3879 = vand.u32 %v3218, 2147483648
          %v3880 = vsel %vm3878, %v3879, %v3877
          %v3881 = vrsqrt.pop %v3219
          %v3882 = vmul.f32 %v3219, %v3881
          %vm3883 = vcmp.eq.f32.partialorder %v3219, inf
          %v3884 = vsel %vm3883, %v3219, %v3882
          %vm3885 = vcmp.eq.f32.partialorder %v3219, 0.0
          %v3886 = vand.u32 %v3219, 2147483648
          %v3887 = vsel %vm3885, %v3886, %v3884
          %v3888 = vrsqrt.pop %v3220
          %v3889 = vmul.f32 %v3220, %v3888
          %vm3890 = vcmp.eq.f32.partialorder %v3220, inf
          %v3891 = vsel %vm3890, %v3220, %v3889
          %vm3892 = vcmp.eq.f32.partialorder %v3220, 0.0
          %v3893 = vand.u32 %v3220, 2147483648
          %v3894 = vsel %vm3892, %v3893, %v3891
          %v3895 = vrsqrt.pop %v3221
          %v3896 = vmul.f32 %v3221, %v3895
          %vm3897 = vcmp.eq.f32.partialorder %v3221, inf
          %v3898 = vsel %vm3897, %v3221, %v3896
          %vm3899 = vcmp.eq.f32.partialorder %v3221, 0.0
          %v3900 = vand.u32 %v3221, 2147483648
          %v3901 = vsel %vm3899, %v3900, %v3898
          %v3902 = vrsqrt.pop %v3222
          %v3903 = vmul.f32 %v3222, %v3902
          %vm3904 = vcmp.eq.f32.partialorder %v3222, inf
          %v3905 = vsel %vm3904, %v3222, %v3903
          %vm3906 = vcmp.eq.f32.partialorder %v3222, 0.0
          %v3907 = vand.u32 %v3222, 2147483648
          %v3908 = vsel %vm3906, %v3907, %v3905
          %v3909 = vrsqrt.pop %v3223
          %v3910 = vmul.f32 %v3223, %v3909
          %vm3911 = vcmp.eq.f32.partialorder %v3223, inf
          %v3912 = vsel %vm3911, %v3223, %v3910
          %vm3913 = vcmp.eq.f32.partialorder %v3223, 0.0
          %v3914 = vand.u32 %v3223, 2147483648
          %v3915 = vsel %vm3913, %v3914, %v3912
          %v3916 = vrsqrt.pop %v3224
          %v3917 = vmul.f32 %v3224, %v3916
          %vm3918 = vcmp.eq.f32.partialorder %v3224, inf
          %v3919 = vsel %vm3918, %v3224, %v3917
          %vm3920 = vcmp.eq.f32.partialorder %v3224, 0.0
          %v3921 = vand.u32 %v3224, 2147483648
          %v3922 = vsel %vm3920, %v3921, %v3919
          %v3923 = vrsqrt.pop %v3225
          %v3924 = vmul.f32 %v3225, %v3923
          %vm3925 = vcmp.eq.f32.partialorder %v3225, inf
          %v3926 = vsel %vm3925, %v3225, %v3924
          %vm3927 = vcmp.eq.f32.partialorder %v3225, 0.0
          %v3928 = vand.u32 %v3225, 2147483648
          %v3929 = vsel %vm3927, %v3928, %v3926
          %v3930 = vrsqrt.pop %v3226
          %v3931 = vmul.f32 %v3226, %v3930
          %vm3932 = vcmp.eq.f32.partialorder %v3226, inf
          %v3933 = vsel %vm3932, %v3226, %v3931
          %vm3934 = vcmp.eq.f32.partialorder %v3226, 0.0
          %v3935 = vand.u32 %v3226, 2147483648
          %v3936 = vsel %vm3934, %v3935, %v3933
          %v3937 = vrsqrt.pop %v3227
          %v3938 = vmul.f32 %v3227, %v3937
          %vm3939 = vcmp.eq.f32.partialorder %v3227, inf
          %v3940 = vsel %vm3939, %v3227, %v3938
          %vm3941 = vcmp.eq.f32.partialorder %v3227, 0.0
          %v3942 = vand.u32 %v3227, 2147483648
          %v3943 = vsel %vm3941, %v3942, %v3940
          %v3944 = vrsqrt.pop %v3228
          %v3945 = vmul.f32 %v3228, %v3944
          %vm3946 = vcmp.eq.f32.partialorder %v3228, inf
          %v3947 = vsel %vm3946, %v3228, %v3945
          %vm3948 = vcmp.eq.f32.partialorder %v3228, 0.0
          %v3949 = vand.u32 %v3228, 2147483648
          %v3950 = vsel %vm3948, %v3949, %v3947
          %v3951 = vrsqrt.pop %v3229
          %v3952 = vmul.f32 %v3229, %v3951
          %vm3953 = vcmp.eq.f32.partialorder %v3229, inf
          %v3954 = vsel %vm3953, %v3229, %v3952
          %vm3955 = vcmp.eq.f32.partialorder %v3229, 0.0
          %v3956 = vand.u32 %v3229, 2147483648
          %v3957 = vsel %vm3955, %v3956, %v3954
          %v3958 = vrsqrt.pop %v3230
          %v3959 = vmul.f32 %v3230, %v3958
          %vm3960 = vcmp.eq.f32.partialorder %v3230, inf
          %v3961 = vsel %vm3960, %v3230, %v3959
          %vm3962 = vcmp.eq.f32.partialorder %v3230, 0.0
          %v3963 = vand.u32 %v3230, 2147483648
          %v3964 = vsel %vm3962, %v3963, %v3961
          %v3965 = vrsqrt.pop %v3231
          %v3966 = vmul.f32 %v3231, %v3965
          %vm3967 = vcmp.eq.f32.partialorder %v3231, inf
          %v3968 = vsel %vm3967, %v3231, %v3966
          %vm3969 = vcmp.eq.f32.partialorder %v3231, 0.0
          %v3970 = vand.u32 %v3231, 2147483648
          %v3971 = vsel %vm3969, %v3970, %v3968
          %v3972 = vrsqrt.pop %v3232
          %v3973 = vmul.f32 %v3232, %v3972
          %vm3974 = vcmp.eq.f32.partialorder %v3232, inf
          %v3975 = vsel %vm3974, %v3232, %v3973
          %vm3976 = vcmp.eq.f32.partialorder %v3232, 0.0
          %v3977 = vand.u32 %v3232, 2147483648
          %v3978 = vsel %vm3976, %v3977, %v3975
          %v3979 = vrsqrt.pop %v3233
          %v3980 = vmul.f32 %v3233, %v3979
          %vm3981 = vcmp.eq.f32.partialorder %v3233, inf
          %v3982 = vsel %vm3981, %v3233, %v3980
          %vm3983 = vcmp.eq.f32.partialorder %v3233, 0.0
          %v3984 = vand.u32 %v3233, 2147483648
          %v3985 = vsel %vm3983, %v3984, %v3982
          %v3986 = vrsqrt.pop %v3234
          %v3987 = vmul.f32 %v3234, %v3986
          %vm3988 = vcmp.eq.f32.partialorder %v3234, inf
          %v3989 = vsel %vm3988, %v3234, %v3987
          %vm3990 = vcmp.eq.f32.partialorder %v3234, 0.0
          %v3991 = vand.u32 %v3234, 2147483648
          %v3992 = vsel %vm3990, %v3991, %v3989
          %v3993 = vrsqrt.pop %v3235
          %v3994 = vmul.f32 %v3235, %v3993
          %vm3995 = vcmp.eq.f32.partialorder %v3235, inf
          %v3996 = vsel %vm3995, %v3235, %v3994
          %vm3997 = vcmp.eq.f32.partialorder %v3235, 0.0
          %v3998 = vand.u32 %v3235, 2147483648
          %v3999 = vsel %vm3997, %v3998, %v3996
          %v4000 = vrsqrt.pop %v3236
          %v4001 = vmul.f32 %v3236, %v4000
          %vm4002 = vcmp.eq.f32.partialorder %v3236, inf
          %v4003 = vsel %vm4002, %v3236, %v4001
          %vm4004 = vcmp.eq.f32.partialorder %v3236, 0.0
          %v4005 = vand.u32 %v3236, 2147483648
          %v4006 = vsel %vm4004, %v4005, %v4003
          %v4007 = vrsqrt.pop %v3237
          %v4008 = vmul.f32 %v3237, %v4007
          %vm4009 = vcmp.eq.f32.partialorder %v3237, inf
          %v4010 = vsel %vm4009, %v3237, %v4008
          %vm4011 = vcmp.eq.f32.partialorder %v3237, 0.0
          %v4012 = vand.u32 %v3237, 2147483648
          %v4013 = vsel %vm4011, %v4012, %v4010
          %v4014 = vrsqrt.pop %v3238
          %v4015 = vmul.f32 %v3238, %v4014
          %vm4016 = vcmp.eq.f32.partialorder %v3238, inf
          %v4017 = vsel %vm4016, %v3238, %v4015
          %vm4018 = vcmp.eq.f32.partialorder %v3238, 0.0
          %v4019 = vand.u32 %v3238, 2147483648
          %v4020 = vsel %vm4018, %v4019, %v4017
          %v4021 = vrsqrt.pop %v3239
          %v4022 = vmul.f32 %v3239, %v4021
          %vm4023 = vcmp.eq.f32.partialorder %v3239, inf
          %v4024 = vsel %vm4023, %v3239, %v4022
          %vm4025 = vcmp.eq.f32.partialorder %v3239, 0.0
          %v4026 = vand.u32 %v3239, 2147483648
          %v4027 = vsel %vm4025, %v4026, %v4024
          %v4028 = vrsqrt.pop %v3240
          %v4029 = vmul.f32 %v3240, %v4028
          %vm4030 = vcmp.eq.f32.partialorder %v3240, inf
          %v4031 = vsel %vm4030, %v3240, %v4029
          %vm4032 = vcmp.eq.f32.partialorder %v3240, 0.0
          %v4033 = vand.u32 %v3240, 2147483648
          %v4034 = vsel %vm4032, %v4033, %v4031
          %v4035 = vrsqrt.pop %v3241
          %v4036 = vmul.f32 %v3241, %v4035
          %vm4037 = vcmp.eq.f32.partialorder %v3241, inf
          %v4038 = vsel %vm4037, %v3241, %v4036
          %vm4039 = vcmp.eq.f32.partialorder %v3241, 0.0
          %v4040 = vand.u32 %v3241, 2147483648
          %v4041 = vsel %vm4039, %v4040, %v4038
          %v4042 = vrsqrt.pop %v3242
          %v4043 = vmul.f32 %v3242, %v4042
          %vm4044 = vcmp.eq.f32.partialorder %v3242, inf
          %v4045 = vsel %vm4044, %v3242, %v4043
          %vm4046 = vcmp.eq.f32.partialorder %v3242, 0.0
          %v4047 = vand.u32 %v3242, 2147483648
          %v4048 = vsel %vm4046, %v4047, %v4045
          %v4049 = vrsqrt.pop %v3243
          %v4050 = vmul.f32 %v3243, %v4049
          %vm4051 = vcmp.eq.f32.partialorder %v3243, inf
          %v4052 = vsel %vm4051, %v3243, %v4050
          %vm4053 = vcmp.eq.f32.partialorder %v3243, 0.0
          %v4054 = vand.u32 %v3243, 2147483648
          %v4055 = vsel %vm4053, %v4054, %v4052
          %v4056 = vrsqrt.pop %v3244
          %v4057 = vmul.f32 %v3244, %v4056
          %vm4058 = vcmp.eq.f32.partialorder %v3244, inf
          %v4059 = vsel %vm4058, %v3244, %v4057
          %vm4060 = vcmp.eq.f32.partialorder %v3244, 0.0
          %v4061 = vand.u32 %v3244, 2147483648
          %v4062 = vsel %vm4060, %v4061, %v4059
          %v4063 = vrsqrt.pop %v3245
          %v4064 = vmul.f32 %v3245, %v4063
          %vm4065 = vcmp.eq.f32.partialorder %v3245, inf
          %v4066 = vsel %vm4065, %v3245, %v4064
          %vm4067 = vcmp.eq.f32.partialorder %v3245, 0.0
          %v4068 = vand.u32 %v3245, 2147483648
          %v4069 = vsel %vm4067, %v4068, %v4066
          %v4070 = vrsqrt.pop %v3246
          %v4071 = vmul.f32 %v3246, %v4070
          %vm4072 = vcmp.eq.f32.partialorder %v3246, inf
          %v4073 = vsel %vm4072, %v3246, %v4071
          %vm4074 = vcmp.eq.f32.partialorder %v3246, 0.0
          %v4075 = vand.u32 %v3246, 2147483648
          %v4076 = vsel %vm4074, %v4075, %v4073
          %v4077 = vrsqrt.pop %v3247
          %v4078 = vmul.f32 %v3247, %v4077
          %vm4079 = vcmp.eq.f32.partialorder %v3247, inf
          %v4080 = vsel %vm4079, %v3247, %v4078
          %vm4081 = vcmp.eq.f32.partialorder %v3247, 0.0
          %v4082 = vand.u32 %v3247, 2147483648
          %v4083 = vsel %vm4081, %v4082, %v4080
          %v4084 = vrsqrt.pop %v3248
          %v4085 = vmul.f32 %v3248, %v4084
          %vm4086 = vcmp.eq.f32.partialorder %v3248, inf
          %v4087 = vsel %vm4086, %v3248, %v4085
          %vm4088 = vcmp.eq.f32.partialorder %v3248, 0.0
          %v4089 = vand.u32 %v3248, 2147483648
          %v4090 = vsel %vm4088, %v4089, %v4087
          %v4091 = vrsqrt.pop %v3249
          %v4092 = vmul.f32 %v3249, %v4091
          %vm4093 = vcmp.eq.f32.partialorder %v3249, inf
          %v4094 = vsel %vm4093, %v3249, %v4092
          %vm4095 = vcmp.eq.f32.partialorder %v3249, 0.0
          %v4096 = vand.u32 %v3249, 2147483648
          %v4097 = vsel %vm4095, %v4096, %v4094
          %v4098 = vrsqrt.pop %v3250
          %v4099 = vmul.f32 %v3250, %v4098
          %vm4100 = vcmp.eq.f32.partialorder %v3250, inf
          %v4101 = vsel %vm4100, %v3250, %v4099
          %vm4102 = vcmp.eq.f32.partialorder %v3250, 0.0
          %v4103 = vand.u32 %v3250, 2147483648
          %v4104 = vsel %vm4102, %v4103, %v4101
          %v4105 = vrsqrt.pop %v3251
          %v4106 = vmul.f32 %v3251, %v4105
          %vm4107 = vcmp.eq.f32.partialorder %v3251, inf
          %v4108 = vsel %vm4107, %v3251, %v4106
          %vm4109 = vcmp.eq.f32.partialorder %v3251, 0.0
          %v4110 = vand.u32 %v3251, 2147483648
          %v4111 = vsel %vm4109, %v4110, %v4108
          %v4112 = vrsqrt.pop %v3252
          %v4113 = vmul.f32 %v3252, %v4112
          %vm4114 = vcmp.eq.f32.partialorder %v3252, inf
          %v4115 = vsel %vm4114, %v3252, %v4113
          %vm4116 = vcmp.eq.f32.partialorder %v3252, 0.0
          %v4117 = vand.u32 %v3252, 2147483648
          %v4118 = vsel %vm4116, %v4117, %v4115
          %v4119 = vrsqrt.pop %v3253
          %v4120 = vmul.f32 %v3253, %v4119
          %vm4121 = vcmp.eq.f32.partialorder %v3253, inf
          %v4122 = vsel %vm4121, %v3253, %v4120
          %vm4123 = vcmp.eq.f32.partialorder %v3253, 0.0
          %v4124 = vand.u32 %v3253, 2147483648
          %v4125 = vsel %vm4123, %v4124, %v4122
          %v4126 = vrsqrt.pop %v3254
          %v4127 = vmul.f32 %v3254, %v4126
          %vm4128 = vcmp.eq.f32.partialorder %v3254, inf
          %v4129 = vsel %vm4128, %v3254, %v4127
          %vm4130 = vcmp.eq.f32.partialorder %v3254, 0.0
          %v4131 = vand.u32 %v3254, 2147483648
          %v4132 = vsel %vm4130, %v4131, %v4129
          %v4133 = vrsqrt.pop %v3255
          %v4134 = vmul.f32 %v3255, %v4133
          %vm4135 = vcmp.eq.f32.partialorder %v3255, inf
          %v4136 = vsel %vm4135, %v3255, %v4134
          %vm4137 = vcmp.eq.f32.partialorder %v3255, 0.0
          %v4138 = vand.u32 %v3255, 2147483648
          %v4139 = vsel %vm4137, %v4138, %v4136
          %v4140 = vrsqrt.pop %v3256
          %v4141 = vmul.f32 %v3256, %v4140
          %vm4142 = vcmp.eq.f32.partialorder %v3256, inf
          %v4143 = vsel %vm4142, %v3256, %v4141
          %vm4144 = vcmp.eq.f32.partialorder %v3256, 0.0
          %v4145 = vand.u32 %v3256, 2147483648
          %v4146 = vsel %vm4144, %v4145, %v4143
          %v4147 = vrsqrt.pop %v3257
          %v4148 = vmul.f32 %v3257, %v4147
          %vm4149 = vcmp.eq.f32.partialorder %v3257, inf
          %v4150 = vsel %vm4149, %v3257, %v4148
          %vm4151 = vcmp.eq.f32.partialorder %v3257, 0.0
          %v4152 = vand.u32 %v3257, 2147483648
          %v4153 = vsel %vm4151, %v4152, %v4150
          %v4154 = vsub.f32 %v3264, %v3712
          %v4155 = vsub.f32 %v3271, %v3719
          %v4156 = vsub.f32 %v3278, %v3726
          %v4157 = vsub.f32 %v3285, %v3733
          %v4158 = vsub.f32 %v3292, %v3740
          %v4159 = vsub.f32 %v3299, %v3747
          %v4160 = vsub.f32 %v3306, %v3754
          %v4161 = vsub.f32 %v3313, %v3761
          %v4162 = vsub.f32 %v3320, %v3768
          %v4163 = vsub.f32 %v3327, %v3775
          %v4164 = vsub.f32 %v3334, %v3782
          %v4165 = vsub.f32 %v3341, %v3789
          %v4166 = vsub.f32 %v3348, %v3796
          %v4167 = vsub.f32 %v3355, %v3803
          %v4168 = vsub.f32 %v3362, %v3810
          %v4169 = vsub.f32 %v3369, %v3817
          %v4170 = vsub.f32 %v3376, %v3824
          %v4171 = vsub.f32 %v3383, %v3831
          %v4172 = vsub.f32 %v3390, %v3838
          %v4173 = vsub.f32 %v3397, %v3845
          %v4174 = vsub.f32 %v3404, %v3852
          %v4175 = vsub.f32 %v3411, %v3859
          %v4176 = vsub.f32 %v3418, %v3866
          %v4177 = vsub.f32 %v3425, %v3873
          %v4178 = vsub.f32 %v3432, %v3880
          %v4179 = vsub.f32 %v3439, %v3887
          %v4180 = vsub.f32 %v3446, %v3894
          %v4181 = vsub.f32 %v3453, %v3901
          %v4182 = vsub.f32 %v3460, %v3908
          %v4183 = vsub.f32 %v3467, %v3915
          %v4184 = vsub.f32 %v3474, %v3922
          %v4185 = vsub.f32 %v3481, %v3929
          %v4186 = vsub.f32 %v3488, %v3936
          %v4187 = vsub.f32 %v3495, %v3943
          %v4188 = vsub.f32 %v3502, %v3950
          %v4189 = vsub.f32 %v3509, %v3957
          %v4190 = vsub.f32 %v3516, %v3964
          %v4191 = vsub.f32 %v3523, %v3971
          %v4192 = vsub.f32 %v3530, %v3978
          %v4193 = vsub.f32 %v3537, %v3985
          %v4194 = vsub.f32 %v3544, %v3992
          %v4195 = vsub.f32 %v3551, %v3999
          %v4196 = vsub.f32 %v3558, %v4006
          %v4197 = vsub.f32 %v3565, %v4013
          %v4198 = vsub.f32 %v3572, %v4020
          %v4199 = vsub.f32 %v3579, %v4027
          %v4200 = vsub.f32 %v3586, %v4034
          %v4201 = vsub.f32 %v3593, %v4041
          %v4202 = vsub.f32 %v3600, %v4048
          %v4203 = vsub.f32 %v3607, %v4055
          %v4204 = vsub.f32 %v3614, %v4062
          %v4205 = vsub.f32 %v3621, %v4069
          %v4206 = vsub.f32 %v3628, %v4076
          %v4207 = vsub.f32 %v3635, %v4083
          %v4208 = vsub.f32 %v3642, %v4090
          %v4209 = vsub.f32 %v3649, %v4097
          %v4210 = vsub.f32 %v3656, %v4104
          %v4211 = vsub.f32 %v3663, %v4111
          %v4212 = vsub.f32 %v3670, %v4118
          %v4213 = vsub.f32 %v3677, %v4125
          %v4214 = vsub.f32 %v3684, %v4132
          %v4215 = vsub.f32 %v3691, %v4139
          %v4216 = vsub.f32 %v3698, %v4146
          %v4217 = vsub.f32 %v3705, %v4153
          %v4218 = vadd.f32 %v4154, 0.5
          %v4219 = vadd.f32 %v4155, 0.5
          %v4220 = vadd.f32 %v4156, 0.5
          %v4221 = vadd.f32 %v4157, 0.5
          %v4222 = vadd.f32 %v4158, 0.5
          %v4223 = vadd.f32 %v4159, 0.5
          %v4224 = vadd.f32 %v4160, 0.5
          %v4225 = vadd.f32 %v4161, 0.5
          %v4226 = vadd.f32 %v4162, 0.5
          %v4227 = vadd.f32 %v4163, 0.5
          %v4228 = vadd.f32 %v4164, 0.5
          %v4229 = vadd.f32 %v4165, 0.5
          %v4230 = vadd.f32 %v4166, 0.5
          %v4231 = vadd.f32 %v4167, 0.5
          %v4232 = vadd.f32 %v4168, 0.5
          %v4233 = vadd.f32 %v4169, 0.5
          %v4234 = vadd.f32 %v4170, 0.5
          %v4235 = vadd.f32 %v4171, 0.5
          %v4236 = vadd.f32 %v4172, 0.5
          %v4237 = vadd.f32 %v4173, 0.5
          %v4238 = vadd.f32 %v4174, 0.5
          %v4239 = vadd.f32 %v4175, 0.5
          %v4240 = vadd.f32 %v4176, 0.5
          %v4241 = vadd.f32 %v4177, 0.5
          %v4242 = vadd.f32 %v4178, 0.5
          %v4243 = vadd.f32 %v4179, 0.5
          %v4244 = vadd.f32 %v4180, 0.5
          %v4245 = vadd.f32 %v4181, 0.5
          %v4246 = vadd.f32 %v4182, 0.5
          %v4247 = vadd.f32 %v4183, 0.5
          %v4248 = vadd.f32 %v4184, 0.5
          %v4249 = vadd.f32 %v4185, 0.5
          %v4250 = vadd.f32 %v4186, 0.5
          %v4251 = vadd.f32 %v4187, 0.5
          %v4252 = vadd.f32 %v4188, 0.5
          %v4253 = vadd.f32 %v4189, 0.5
          %v4254 = vadd.f32 %v4190, 0.5
          %v4255 = vadd.f32 %v4191, 0.5
          %v4256 = vadd.f32 %v4192, 0.5
          %v4257 = vadd.f32 %v4193, 0.5
          %v4258 = vadd.f32 %v4194, 0.5
          %v4259 = vadd.f32 %v4195, 0.5
          %v4260 = vadd.f32 %v4196, 0.5
          %v4261 = vadd.f32 %v4197, 0.5
          %v4262 = vadd.f32 %v4198, 0.5
          %v4263 = vadd.f32 %v4199, 0.5
          %v4264 = vadd.f32 %v4200, 0.5
          %v4265 = vadd.f32 %v4201, 0.5
          %v4266 = vadd.f32 %v4202, 0.5
          %v4267 = vadd.f32 %v4203, 0.5
          %v4268 = vadd.f32 %v4204, 0.5
          %v4269 = vadd.f32 %v4205, 0.5
          %v4270 = vadd.f32 %v4206, 0.5
          %v4271 = vadd.f32 %v4207, 0.5
          %v4272 = vadd.f32 %v4208, 0.5
          %v4273 = vadd.f32 %v4209, 0.5
          %v4274 = vadd.f32 %v4210, 0.5
          %v4275 = vadd.f32 %v4211, 0.5
          %v4276 = vadd.f32 %v4212, 0.5
          %v4277 = vadd.f32 %v4213, 0.5
          %v4278 = vadd.f32 %v4214, 0.5
          %v4279 = vadd.f32 %v4215, 0.5
          %v4280 = vadd.f32 %v4216, 0.5
          %v4281 = vadd.f32 %v4217, 0.5
          %v4282 = vmax.f32 %v4218, 0.0
          %v4283 = vmax.f32 %v4219, 0.0
          %v4284 = vmax.f32 %v4220, 0.0
          %v4285 = vmax.f32 %v4221, 0.0
          %v4286 = vmax.f32 %v4222, 0.0
          %v4287 = vmax.f32 %v4223, 0.0
          %v4288 = vmax.f32 %v4224, 0.0
          %v4289 = vmax.f32 %v4225, 0.0
          %v4290 = vmax.f32 %v4226, 0.0
          %v4291 = vmax.f32 %v4227, 0.0
          %v4292 = vmax.f32 %v4228, 0.0
          %v4293 = vmax.f32 %v4229, 0.0
          %v4294 = vmax.f32 %v4230, 0.0
          %v4295 = vmax.f32 %v4231, 0.0
          %v4296 = vmax.f32 %v4232, 0.0
          %v4297 = vmax.f32 %v4233, 0.0
          %v4298 = vmax.f32 %v4234, 0.0
          %v4299 = vmax.f32 %v4235, 0.0
          %v4300 = vmax.f32 %v4236, 0.0
          %v4301 = vmax.f32 %v4237, 0.0
          %v4302 = vmax.f32 %v4238, 0.0
          %v4303 = vmax.f32 %v4239, 0.0
          %v4304 = vmax.f32 %v4240, 0.0
          %v4305 = vmax.f32 %v4241, 0.0
          %v4306 = vmax.f32 %v4242, 0.0
          %v4307 = vmax.f32 %v4243, 0.0
          %v4308 = vmax.f32 %v4244, 0.0
          %v4309 = vmax.f32 %v4245, 0.0
          %v4310 = vmax.f32 %v4246, 0.0
          %v4311 = vmax.f32 %v4247, 0.0
          %v4312 = vmax.f32 %v4248, 0.0
          %v4313 = vmax.f32 %v4249, 0.0
          %v4314 = vmax.f32 %v4250, 0.0
          %v4315 = vmax.f32 %v4251, 0.0
          %v4316 = vmax.f32 %v4252, 0.0
          %v4317 = vmax.f32 %v4253, 0.0
          %v4318 = vmax.f32 %v4254, 0.0
          %v4319 = vmax.f32 %v4255, 0.0
          %v4320 = vmax.f32 %v4256, 0.0
          %v4321 = vmax.f32 %v4257, 0.0
          %v4322 = vmax.f32 %v4258, 0.0
          %v4323 = vmax.f32 %v4259, 0.0
          %v4324 = vmax.f32 %v4260, 0.0
          %v4325 = vmax.f32 %v4261, 0.0
          %v4326 = vmax.f32 %v4262, 0.0
          %v4327 = vmax.f32 %v4263, 0.0
          %v4328 = vmax.f32 %v4264, 0.0
          %v4329 = vmax.f32 %v4265, 0.0
          %v4330 = vmax.f32 %v4266, 0.0
          %v4331 = vmax.f32 %v4267, 0.0
          %v4332 = vmax.f32 %v4268, 0.0
          %v4333 = vmax.f32 %v4269, 0.0
          %v4334 = vmax.f32 %v4270, 0.0
          %v4335 = vmax.f32 %v4271, 0.0
          %v4336 = vmax.f32 %v4272, 0.0
          %v4337 = vmax.f32 %v4273, 0.0
          %v4338 = vmax.f32 %v4274, 0.0
          %v4339 = vmax.f32 %v4275, 0.0
          %v4340 = vmax.f32 %v4276, 0.0
          %v4341 = vmax.f32 %v4277, 0.0
          %v4342 = vmax.f32 %v4278, 0.0
          %v4343 = vmax.f32 %v4279, 0.0
          %v4344 = vmax.f32 %v4280, 0.0
          %v4345 = vmax.f32 %v4281, 0.0
          %s4346 = smul.u32 %s22, 512
          %v4347 = vlaneseq
          %v4348 = vshrl.u32 %v4347, 7
          %v4349 = vadd.s32 %v4348, 8
          %v4350 = vadd.s32 %v4348, 16
          %v4351 = vadd.s32 %v4348, 24
          %v4352 = vadd.s32 %v4348, 32
          %v4353 = vadd.s32 %v4348, 40
          %v4354 = vadd.s32 %v4348, 48
          %v4355 = vadd.s32 %v4348, 56
          %v4356 = vadd.s32 %v4348, 64
          %v4357 = vadd.s32 %v4348, 72
          %v4358 = vadd.s32 %v4348, 80
          %v4359 = vadd.s32 %v4348, 88
          %v4360 = vadd.s32 %v4348, 96
          %v4361 = vadd.s32 %v4348, 104
          %v4362 = vadd.s32 %v4348, 112
          %v4363 = vadd.s32 %v4348, 120
          %v4364 = vadd.s32 %v4348, 128
          %v4365 = vadd.s32 %v4348, 136
          %v4366 = vadd.s32 %v4348, 144
          %v4367 = vadd.s32 %v4348, 152
          %v4368 = vadd.s32 %v4348, 160
          %v4369 = vadd.s32 %v4348, 168
          %v4370 = vadd.s32 %v4348, 176
          %v4371 = vadd.s32 %v4348, 184
          %v4372 = vadd.s32 %v4348, 192
          %v4373 = vadd.s32 %v4348, 200
          %v4374 = vadd.s32 %v4348, 208
          %v4375 = vadd.s32 %v4348, 216
          %v4376 = vadd.s32 %v4348, 224
          %v4377 = vadd.s32 %v4348, 232
          %v4378 = vadd.s32 %v4348, 240
          %v4379 = vadd.s32 %v4348, 248
          %v4380 = vadd.s32 %v4348, 256
          %v4381 = vadd.s32 %v4348, 264
          %v4382 = vadd.s32 %v4348, 272
          %v4383 = vadd.s32 %v4348, 280
          %v4384 = vadd.s32 %v4348, 288
          %v4385 = vadd.s32 %v4348, 296
          %v4386 = vadd.s32 %v4348, 304
          %v4387 = vadd.s32 %v4348, 312
          %v4388 = vadd.s32 %v4348, 320
          %v4389 = vadd.s32 %v4348, 328
          %v4390 = vadd.s32 %v4348, 336
          %v4391 = vadd.s32 %v4348, 344
          %v4392 = vadd.s32 %v4348, 352
          %v4393 = vadd.s32 %v4348, 360
          %v4394 = vadd.s32 %v4348, 368
          %v4395 = vadd.s32 %v4348, 376
          %v4396 = vadd.s32 %v4348, 384
          %v4397 = vadd.s32 %v4348, 392
          %v4398 = vadd.s32 %v4348, 400
          %v4399 = vadd.s32 %v4348, 408
          %v4400 = vadd.s32 %v4348, 416
          %v4401 = vadd.s32 %v4348, 424
          %v4402 = vadd.s32 %v4348, 432
          %v4403 = vadd.s32 %v4348, 440
          %v4404 = vadd.s32 %v4348, 448
          %v4405 = vadd.s32 %v4348, 456
          %v4406 = vadd.s32 %v4348, 464
          %v4407 = vadd.s32 %v4348, 472
          %v4408 = vadd.s32 %v4348, 480
          %v4409 = vadd.s32 %v4348, 488
          %v4410 = vadd.s32 %v4348, 496
          %v4411 = vadd.s32 %v4348, 504
          %v4412 = vstv %s4346
          %v4413 = vadd.s32 %v4412, %v4348
          %v4414 = vadd.s32 %v4412, %v4349
          %v4415 = vadd.s32 %v4412, %v4350
          %v4416 = vadd.s32 %v4412, %v4351
          %v4417 = vadd.s32 %v4412, %v4352
          %v4418 = vadd.s32 %v4412, %v4353
          %v4419 = vadd.s32 %v4412, %v4354
          %v4420 = vadd.s32 %v4412, %v4355
          %v4421 = vadd.s32 %v4412, %v4356
          %v4422 = vadd.s32 %v4412, %v4357
          %v4423 = vadd.s32 %v4412, %v4358
          %v4424 = vadd.s32 %v4412, %v4359
          %v4425 = vadd.s32 %v4412, %v4360
          %v4426 = vadd.s32 %v4412, %v4361
          %v4427 = vadd.s32 %v4412, %v4362
          %v4428 = vadd.s32 %v4412, %v4363
          %v4429 = vadd.s32 %v4412, %v4364
          %v4430 = vadd.s32 %v4412, %v4365
          %v4431 = vadd.s32 %v4412, %v4366
          %v4432 = vadd.s32 %v4412, %v4367
          %v4433 = vadd.s32 %v4412, %v4368
          %v4434 = vadd.s32 %v4412, %v4369
          %v4435 = vadd.s32 %v4412, %v4370
          %v4436 = vadd.s32 %v4412, %v4371
          %v4437 = vadd.s32 %v4412, %v4372
          %v4438 = vadd.s32 %v4412, %v4373
          %v4439 = vadd.s32 %v4412, %v4374
          %v4440 = vadd.s32 %v4412, %v4375
          %v4441 = vadd.s32 %v4412, %v4376
          %v4442 = vadd.s32 %v4412, %v4377
          %v4443 = vadd.s32 %v4412, %v4378
          %v4444 = vadd.s32 %v4412, %v4379
          %v4445 = vadd.s32 %v4412, %v4380
          %v4446 = vadd.s32 %v4412, %v4381
          %v4447 = vadd.s32 %v4412, %v4382
          %v4448 = vadd.s32 %v4412, %v4383
          %v4449 = vadd.s32 %v4412, %v4384
          %v4450 = vadd.s32 %v4412, %v4385
          %v4451 = vadd.s32 %v4412, %v4386
          %v4452 = vadd.s32 %v4412, %v4387
          %v4453 = vadd.s32 %v4412, %v4388
          %v4454 = vadd.s32 %v4412, %v4389
          %v4455 = vadd.s32 %v4412, %v4390
          %v4456 = vadd.s32 %v4412, %v4391
          %v4457 = vadd.s32 %v4412, %v4392
          %v4458 = vadd.s32 %v4412, %v4393
          %v4459 = vadd.s32 %v4412, %v4394
          %v4460 = vadd.s32 %v4412, %v4395
          %v4461 = vadd.s32 %v4412, %v4396
          %v4462 = vadd.s32 %v4412, %v4397
          %v4463 = vadd.s32 %v4412, %v4398
          %v4464 = vadd.s32 %v4412, %v4399
          %v4465 = vadd.s32 %v4412, %v4400
          %v4466 = vadd.s32 %v4412, %v4401
          %v4467 = vadd.s32 %v4412, %v4402
          %v4468 = vadd.s32 %v4412, %v4403
          %v4469 = vadd.s32 %v4412, %v4404
          %v4470 = vadd.s32 %v4412, %v4405
          %v4471 = vadd.s32 %v4412, %v4406
          %v4472 = vadd.s32 %v4412, %v4407
          %v4473 = vadd.s32 %v4412, %v4408
          %v4474 = vadd.s32 %v4412, %v4409
          %v4475 = vadd.s32 %v4412, %v4410
          %v4476 = vadd.s32 %v4412, %v4411
          %vm4477 = vcmp.lt.s32.totalorder %v4413, 8
          %vm4478 = vcmp.lt.s32.totalorder %v4414, 8
          %vm4479 = vcmp.lt.s32.totalorder %v4415, 8
          %vm4480 = vcmp.lt.s32.totalorder %v4416, 8
          %vm4481 = vcmp.lt.s32.totalorder %v4417, 8
          %vm4482 = vcmp.lt.s32.totalorder %v4418, 8
          %vm4483 = vcmp.lt.s32.totalorder %v4419, 8
          %vm4484 = vcmp.lt.s32.totalorder %v4420, 8
          %vm4485 = vcmp.lt.s32.totalorder %v4421, 8
          %vm4486 = vcmp.lt.s32.totalorder %v4422, 8
          %vm4487 = vcmp.lt.s32.totalorder %v4423, 8
          %vm4488 = vcmp.lt.s32.totalorder %v4424, 8
          %vm4489 = vcmp.lt.s32.totalorder %v4425, 8
          %vm4490 = vcmp.lt.s32.totalorder %v4426, 8
          %vm4491 = vcmp.lt.s32.totalorder %v4427, 8
          %vm4492 = vcmp.lt.s32.totalorder %v4428, 8
          %vm4493 = vcmp.lt.s32.totalorder %v4429, 8
          %vm4494 = vcmp.lt.s32.totalorder %v4430, 8
          %vm4495 = vcmp.lt.s32.totalorder %v4431, 8
          %vm4496 = vcmp.lt.s32.totalorder %v4432, 8
          %vm4497 = vcmp.lt.s32.totalorder %v4433, 8
          %vm4498 = vcmp.lt.s32.totalorder %v4434, 8
          %vm4499 = vcmp.lt.s32.totalorder %v4435, 8
          %vm4500 = vcmp.lt.s32.totalorder %v4436, 8
          %vm4501 = vcmp.lt.s32.totalorder %v4437, 8
          %vm4502 = vcmp.lt.s32.totalorder %v4438, 8
          %vm4503 = vcmp.lt.s32.totalorder %v4439, 8
          %vm4504 = vcmp.lt.s32.totalorder %v4440, 8
          %vm4505 = vcmp.lt.s32.totalorder %v4441, 8
          %vm4506 = vcmp.lt.s32.totalorder %v4442, 8
          %vm4507 = vcmp.lt.s32.totalorder %v4443, 8
          %vm4508 = vcmp.lt.s32.totalorder %v4444, 8
          %vm4509 = vcmp.lt.s32.totalorder %v4445, 8
          %vm4510 = vcmp.lt.s32.totalorder %v4446, 8
          %vm4511 = vcmp.lt.s32.totalorder %v4447, 8
          %vm4512 = vcmp.lt.s32.totalorder %v4448, 8
          %vm4513 = vcmp.lt.s32.totalorder %v4449, 8
          %vm4514 = vcmp.lt.s32.totalorder %v4450, 8
          %vm4515 = vcmp.lt.s32.totalorder %v4451, 8
          %vm4516 = vcmp.lt.s32.totalorder %v4452, 8
          %vm4517 = vcmp.lt.s32.totalorder %v4453, 8
          %vm4518 = vcmp.lt.s32.totalorder %v4454, 8
          %vm4519 = vcmp.lt.s32.totalorder %v4455, 8
          %vm4520 = vcmp.lt.s32.totalorder %v4456, 8
          %vm4521 = vcmp.lt.s32.totalorder %v4457, 8
          %vm4522 = vcmp.lt.s32.totalorder %v4458, 8
          %vm4523 = vcmp.lt.s32.totalorder %v4459, 8
          %vm4524 = vcmp.lt.s32.totalorder %v4460, 8
          %vm4525 = vcmp.lt.s32.totalorder %v4461, 8
          %vm4526 = vcmp.lt.s32.totalorder %v4462, 8
          %vm4527 = vcmp.lt.s32.totalorder %v4463, 8
          %vm4528 = vcmp.lt.s32.totalorder %v4464, 8
          %vm4529 = vcmp.lt.s32.totalorder %v4465, 8
          %vm4530 = vcmp.lt.s32.totalorder %v4466, 8
          %vm4531 = vcmp.lt.s32.totalorder %v4467, 8
          %vm4532 = vcmp.lt.s32.totalorder %v4468, 8
          %vm4533 = vcmp.lt.s32.totalorder %v4469, 8
          %vm4534 = vcmp.lt.s32.totalorder %v4470, 8
          %vm4535 = vcmp.lt.s32.totalorder %v4471, 8
          %vm4536 = vcmp.lt.s32.totalorder %v4472, 8
          %vm4537 = vcmp.lt.s32.totalorder %v4473, 8
          %vm4538 = vcmp.lt.s32.totalorder %v4474, 8
          %vm4539 = vcmp.lt.s32.totalorder %v4475, 8
          %vm4540 = vcmp.lt.s32.totalorder %v4476, 8
          %v4541 = vsel %vm4477, %v4282, 0.0
          %v4542 = vsel %vm4478, %v4283, 0.0
          %v4543 = vsel %vm4479, %v4284, 0.0
          %v4544 = vsel %vm4480, %v4285, 0.0
          %v4545 = vsel %vm4481, %v4286, 0.0
          %v4546 = vsel %vm4482, %v4287, 0.0
          %v4547 = vsel %vm4483, %v4288, 0.0
          %v4548 = vsel %vm4484, %v4289, 0.0
          %v4549 = vsel %vm4485, %v4290, 0.0
          %v4550 = vsel %vm4486, %v4291, 0.0
          %v4551 = vsel %vm4487, %v4292, 0.0
          %v4552 = vsel %vm4488, %v4293, 0.0
          %v4553 = vsel %vm4489, %v4294, 0.0
          %v4554 = vsel %vm4490, %v4295, 0.0
          %v4555 = vsel %vm4491, %v4296, 0.0
          %v4556 = vsel %vm4492, %v4297, 0.0
          %v4557 = vsel %vm4493, %v4298, 0.0
          %v4558 = vsel %vm4494, %v4299, 0.0
          %v4559 = vsel %vm4495, %v4300, 0.0
          %v4560 = vsel %vm4496, %v4301, 0.0
          %v4561 = vsel %vm4497, %v4302, 0.0
          %v4562 = vsel %vm4498, %v4303, 0.0
          %v4563 = vsel %vm4499, %v4304, 0.0
          %v4564 = vsel %vm4500, %v4305, 0.0
          %v4565 = vsel %vm4501, %v4306, 0.0
          %v4566 = vsel %vm4502, %v4307, 0.0
          %v4567 = vsel %vm4503, %v4308, 0.0
          %v4568 = vsel %vm4504, %v4309, 0.0
          %v4569 = vsel %vm4505, %v4310, 0.0
          %v4570 = vsel %vm4506, %v4311, 0.0
          %v4571 = vsel %vm4507, %v4312, 0.0
          %v4572 = vsel %vm4508, %v4313, 0.0
          %v4573 = vsel %vm4509, %v4314, 0.0
          %v4574 = vsel %vm4510, %v4315, 0.0
          %v4575 = vsel %vm4511, %v4316, 0.0
          %v4576 = vsel %vm4512, %v4317, 0.0
          %v4577 = vsel %vm4513, %v4318, 0.0
          %v4578 = vsel %vm4514, %v4319, 0.0
          %v4579 = vsel %vm4515, %v4320, 0.0
          %v4580 = vsel %vm4516, %v4321, 0.0
          %v4581 = vsel %vm4517, %v4322, 0.0
          %v4582 = vsel %vm4518, %v4323, 0.0
          %v4583 = vsel %vm4519, %v4324, 0.0
          %v4584 = vsel %vm4520, %v4325, 0.0
          %v4585 = vsel %vm4521, %v4326, 0.0
          %v4586 = vsel %vm4522, %v4327, 0.0
          %v4587 = vsel %vm4523, %v4328, 0.0
          %v4588 = vsel %vm4524, %v4329, 0.0
          %v4589 = vsel %vm4525, %v4330, 0.0
          %v4590 = vsel %vm4526, %v4331, 0.0
          %v4591 = vsel %vm4527, %v4332, 0.0
          %v4592 = vsel %vm4528, %v4333, 0.0
          %v4593 = vsel %vm4529, %v4334, 0.0
          %v4594 = vsel %vm4530, %v4335, 0.0
          %v4595 = vsel %vm4531, %v4336, 0.0
          %v4596 = vsel %vm4532, %v4337, 0.0
          %v4597 = vsel %vm4533, %v4338, 0.0
          %v4598 = vsel %vm4534, %v4339, 0.0
          %v4599 = vsel %vm4535, %v4340, 0.0
          %v4600 = vsel %vm4536, %v4341, 0.0
          %v4601 = vsel %vm4537, %v4342, 0.0
          %v4602 = vsel %vm4538, %v4343, 0.0
          %v4603 = vsel %vm4539, %v4344, 0.0
          %v4604 = vsel %vm4540, %v4345, 0.0
          %4605 = vxpose.xlu0.b32.start [1/16] %v4541, 128
          %4606 = vxpose.xlu0.b32.cont [2/16] %v4542, 128
          %4607 = vxpose.xlu0.b32.cont [3/16] %v4543, 128
          %4608 = vxpose.xlu0.b32.cont [4/16] %v4544, 128
          %4609 = vxpose.xlu0.b32.cont [5/16] %v4545, 128
          %4610 = vxpose.xlu0.b32.cont [6/16] %v4546, 128
          %4611 = vxpose.xlu0.b32.cont [7/16] %v4547, 128
          %4612 = vxpose.xlu0.b32.cont [8/16] %v4548, 128
          %4613 = vxpose.xlu0.b32.cont [9/16] %v4549, 128
          %4614 = vxpose.xlu0.b32.cont [10/16] %v4550, 128
          %4615 = vxpose.xlu0.b32.cont [11/16] %v4551, 128
          %4616 = vxpose.xlu0.b32.cont [12/16] %v4552, 128
          %4617 = vxpose.xlu0.b32.cont [13/16] %v4553, 128
          %4618 = vxpose.xlu0.b32.cont [14/16] %v4554, 128
          %4619 = vxpose.xlu0.b32.cont [15/16] %v4555, 128
          %4620 = vxpose.xlu0.b32.end [16/16] %v4556, 128
          %v4621 = vpop.trf.xlu0
          %v4622 = vpop.trf.xlu0
          %v4623 = vpop.trf.xlu0
          %v4624 = vpop.trf.xlu0
          %v4625 = vpop.trf.xlu0
          %v4626 = vpop.trf.xlu0
          %v4627 = vpop.trf.xlu0
          %v4628 = vpop.trf.xlu0
          %v4629 = vpop.trf.xlu0
          %v4630 = vpop.trf.xlu0
          %v4631 = vpop.trf.xlu0
          %v4632 = vpop.trf.xlu0
          %v4633 = vpop.trf.xlu0
          %v4634 = vpop.trf.xlu0
          %v4635 = vpop.trf.xlu0
          %v4636 = vpop.trf.xlu0
          %4637 = vxpose.xlu0.b32.start [1/16] %v4557, 128
          %4638 = vxpose.xlu0.b32.cont [2/16] %v4558, 128
          %4639 = vxpose.xlu0.b32.cont [3/16] %v4559, 128
          %4640 = vxpose.xlu0.b32.cont [4/16] %v4560, 128
          %4641 = vxpose.xlu0.b32.cont [5/16] %v4561, 128
          %4642 = vxpose.xlu0.b32.cont [6/16] %v4562, 128
          %4643 = vxpose.xlu0.b32.cont [7/16] %v4563, 128
          %4644 = vxpose.xlu0.b32.cont [8/16] %v4564, 128
          %4645 = vxpose.xlu0.b32.cont [9/16] %v4565, 128
          %4646 = vxpose.xlu0.b32.cont [10/16] %v4566, 128
          %4647 = vxpose.xlu0.b32.cont [11/16] %v4567, 128
          %4648 = vxpose.xlu0.b32.cont [12/16] %v4568, 128
          %4649 = vxpose.xlu0.b32.cont [13/16] %v4569, 128
          %4650 = vxpose.xlu0.b32.cont [14/16] %v4570, 128
          %4651 = vxpose.xlu0.b32.cont [15/16] %v4571, 128
          %4652 = vxpose.xlu0.b32.end [16/16] %v4572, 128
          %v4653 = vpop.trf.xlu0
          %v4654 = vpop.trf.xlu0
          %v4655 = vpop.trf.xlu0
          %v4656 = vpop.trf.xlu0
          %v4657 = vpop.trf.xlu0
          %v4658 = vpop.trf.xlu0
          %v4659 = vpop.trf.xlu0
          %v4660 = vpop.trf.xlu0
          %v4661 = vpop.trf.xlu0
          %v4662 = vpop.trf.xlu0
          %v4663 = vpop.trf.xlu0
          %v4664 = vpop.trf.xlu0
          %v4665 = vpop.trf.xlu0
          %v4666 = vpop.trf.xlu0
          %v4667 = vpop.trf.xlu0
          %v4668 = vpop.trf.xlu0
          %4669 = vxpose.xlu0.b32.start [1/16] %v4573, 128
          %4670 = vxpose.xlu0.b32.cont [2/16] %v4574, 128
          %4671 = vxpose.xlu0.b32.cont [3/16] %v4575, 128
          %4672 = vxpose.xlu0.b32.cont [4/16] %v4576, 128
          %4673 = vxpose.xlu0.b32.cont [5/16] %v4577, 128
          %4674 = vxpose.xlu0.b32.cont [6/16] %v4578, 128
          %4675 = vxpose.xlu0.b32.cont [7/16] %v4579, 128
          %4676 = vxpose.xlu0.b32.cont [8/16] %v4580, 128
          %4677 = vxpose.xlu0.b32.cont [9/16] %v4581, 128
          %4678 = vxpose.xlu0.b32.cont [10/16] %v4582, 128
          %4679 = vxpose.xlu0.b32.cont [11/16] %v4583, 128
          %4680 = vxpose.xlu0.b32.cont [12/16] %v4584, 128
          %4681 = vxpose.xlu0.b32.cont [13/16] %v4585, 128
          %4682 = vxpose.xlu0.b32.cont [14/16] %v4586, 128
          %4683 = vxpose.xlu0.b32.cont [15/16] %v4587, 128
          %4684 = vxpose.xlu0.b32.end [16/16] %v4588, 128
          %v4685 = vpop.trf.xlu0
          %v4686 = vpop.trf.xlu0
          %v4687 = vpop.trf.xlu0
          %v4688 = vpop.trf.xlu0
          %v4689 = vpop.trf.xlu0
          %v4690 = vpop.trf.xlu0
          %v4691 = vpop.trf.xlu0
          %v4692 = vpop.trf.xlu0
          %v4693 = vpop.trf.xlu0
          %v4694 = vpop.trf.xlu0
          %v4695 = vpop.trf.xlu0
          %v4696 = vpop.trf.xlu0
          %v4697 = vpop.trf.xlu0
          %v4698 = vpop.trf.xlu0
          %v4699 = vpop.trf.xlu0
          %v4700 = vpop.trf.xlu0
          %4701 = vxpose.xlu0.b32.start [1/16] %v4589, 128
          %4702 = vxpose.xlu0.b32.cont [2/16] %v4590, 128
          %4703 = vxpose.xlu0.b32.cont [3/16] %v4591, 128
          %4704 = vxpose.xlu0.b32.cont [4/16] %v4592, 128
          %4705 = vxpose.xlu0.b32.cont [5/16] %v4593, 128
          %4706 = vxpose.xlu0.b32.cont [6/16] %v4594, 128
          %4707 = vxpose.xlu0.b32.cont [7/16] %v4595, 128
          %4708 = vxpose.xlu0.b32.cont [8/16] %v4596, 128
          %4709 = vxpose.xlu0.b32.cont [9/16] %v4597, 128
          %4710 = vxpose.xlu0.b32.cont [10/16] %v4598, 128
          %4711 = vxpose.xlu0.b32.cont [11/16] %v4599, 128
          %4712 = vxpose.xlu0.b32.cont [12/16] %v4600, 128
          %4713 = vxpose.xlu0.b32.cont [13/16] %v4601, 128
          %4714 = vxpose.xlu0.b32.cont [14/16] %v4602, 128
          %4715 = vxpose.xlu0.b32.cont [15/16] %v4603, 128
          %4716 = vxpose.xlu0.b32.end [16/16] %v4604, 128
          %v4717 = vpop.trf.xlu0
          %v4718 = vpop.trf.xlu0
          %v4719 = vpop.trf.xlu0
          %v4720 = vpop.trf.xlu0
          %v4721 = vpop.trf.xlu0
          %v4722 = vpop.trf.xlu0
          %v4723 = vpop.trf.xlu0
          %v4724 = vpop.trf.xlu0
          %v4725 = vpop.trf.xlu0
          %v4726 = vpop.trf.xlu0
          %v4727 = vpop.trf.xlu0
          %v4728 = vpop.trf.xlu0
          %v4729 = vpop.trf.xlu0
          %v4730 = vpop.trf.xlu0
          %v4731 = vpop.trf.xlu0
          %v4732 = vpop.trf.xlu0
          %v4737 = vcombine.low %v4621, %v4653
          %v4738 = vcombine.low %v4685, %v4717
          %v4740 = vunpack.c.l.s4 1966171168
          %v4741 = vunpack.c.0.s8 %v4740
          %v4742 = vlaneseq
          %v4743 = vshrl.u32 %v4742, 7
          %v4744 = vsub.s32 %v4741, %v4743
          %v4745 = vrot.slane %v4737, %v4744
          %v4747 = vunpack.c.l.s4 1966171168
          %v4748 = vunpack.c.0.s8 %v4747
          %v4749 = vlaneseq
          %v4750 = vshrl.u32 %v4749, 7
          %v4751 = vsub.s32 %v4748, %v4750
          %v4752 = vrot.slane %v4738, %v4751
          %v4753 = vcombine.low %v4745, %v4752
          %v4755 = vunpack.c.l.s4 1966171168
          %v4756 = vunpack.c.0.s8 %v4755
          %v4757 = vlaneseq
          %v4758 = vshrl.u32 %v4757, 7
          %v4759 = vsub.s32 %v4756, %v4758
          %v4760 = vrot.slane %v4753, %v4759
          %v4762 = vlaneseq
          %vm4763 = vcmp.ge.s32.totalorder %v4762, 0
          %vm4764 = vcmp.lt.s32.totalorder %v4762, 512
          %vm4765 = vmand %vm4763, %vm4764
          %4766 = vst.msk [vmem:[#allocation5] sm:$0xf] %vm4765, %v4760
        $region75: #{tpu_custom_call.1} parent=62 // pred_fallthru
          _
        // Predicated region
        $region76: #{tpu_custom_call.1} parent=62 // pred_check
          %p4767 = pneg %p204
        $region77: #{tpu_custom_call.1} parent=62 // pred_check_branch
          %4769 = sbr.rel (%p4767) target = $region79
        $region78: #{tpu_custom_call.1} parent=62 // pred_region
          %s4771 = ssub.s32 64, 64
          %4772 = vsyncadd [#allocation6], %s4771
          %s4773 = smul.addr %s22, 4
          %s4774 = smul.addr %s4773, 16
          %s4775 = scalar_lea.hbm %s6, %s4774
          %s4777 = sshll.u32 [#allocation5], 4
          %s4778 = int_to_ptr.vmem [resolvable:$true] %s4777
          %4780 = dma.vmem_to_hbm [thread:$0]  %s4778, 64, %s4775, [#allocation6]
        $region79: #{tpu_custom_call.1} parent=62 // pred_fallthru
          _
        // Predicated region
        $region80: #{tpu_custom_call.1} parent=62 // pred_check
          %p4781 = pneg %p204
        $region81: #{tpu_custom_call.1} parent=62 // pred_check_branch
          %4783 = sbr.rel (%p4781) target = $region83
        $region82: #{tpu_custom_call.1} parent=62 // pred_region
          %4784 = dma.done [#allocation6], 64
        $region83: #{tpu_custom_call.1} parent=62 // pred_fallthru
          _
      $region63: #{tpu_custom_call.1} parent=5 // pred_fallthru
        _
      %p4785 = scmp.le.s32.totalorder 2, %s13
      // Predicated region
      $region84: #{tpu_custom_call.1} parent=5 // pred_check
        %p4786 = pneg %p4785
      $region85: #{tpu_custom_call.1} parent=5 // pred_check_branch
        %4788 = sbr.rel (%p4786) target = $region87
      $region86: #{tpu_custom_call.1} parent=5 // pred_region
        %s4789 = ssub.s32 %s13, 2
      $region87: #{tpu_custom_call.1} parent=5 // pred_fallthru
        _
    $region6: #{tpu_custom_call.1} parent=1 // loop_footer
      %s17 = sadd.s32 1, %s13
    $region7: #{tpu_custom_call.1} parent=1 // loop_footer_branch
      %12 = sbr.rel target = $region3
    $region8: #{tpu_custom_call.1} parent=1 // loop_exit
      _
    %4790 = vsyncpa [#allocation6], 1
    %s4791 = scalar_lea.sflag [#allocation6], 1
    %4792 = vsyncpa %s4791, 1

</llo_original>
